<compile_context>
chip_gen: v6e
topology: v6e:2x2x1
jax: 0.10.0
libtpu: 0.0.40
codegen_flags: <defaults>
</compile_context>

<pallas_src>
import functools

import numpy as np

import jax
import jax.numpy as jnp
from jax import lax
from jax.experimental import pallas as pl
from jax.experimental.pallas import tpu as pltpu

K = 5  # conv kernel size


# ---------------------------------------------------------------------------
# Fused forward kernel: one grid step processes a tile of Bt images end to end.
# ---------------------------------------------------------------------------
def _cifar10_fused_kernel(
    x_ref,      # (Bt, 32, 96)   NHWC input with (W, Cin) folded onto the lane axis
    w1_ref,     # (5, 96, 168)   banded conv1 weights (one matmul per kernel row)
    b1_ref,     # (1, 168)       conv1 bias tiled over Wo
    s1e_ref,    # (168, 84)      conv1 W-pool selector (even columns)
    s1o_ref,    # (168, 84)      conv1 W-pool selector (odd columns)
    w2_ref,     # (5, 84, 160)   banded conv2 weights
    b2_ref,     # (1, 160)
    s2e_ref,    # (160, 80)
    s2o_ref,    # (160, 80)
    wf1_ref,    # (5, 80, 128)   fc1, one (80,128) block per pooled row h (padded 120->128)
    bf1_ref,    # (1, 128)
    wf2_ref,    # (128, 128)     fc2 zero-padded
    bf2_ref,    # (1, 128)
    wf3_ref,    # (128, 10)      fc3 zero-padded rows
    bf3_ref,    # (1, 10)
    o_ref,      # (Bt, 10)
):
    f32 = jnp.float32
    Bt = x_ref.shape[0]
    x = x_ref[...].astype(f32)                           # (Bt, 32, 96)

    def conv_relu_pool(inp, wb_ref, bias_ref, se_ref, so_ref):
        # inp: (Bt, H, W*Cin), lanes = w*Cin + c.
        _, H, WC = inp.shape
        Ho = H - K + 1                                   # valid conv output height
        N = wb_ref.shape[2]                              # Wo * Cout (lane-folded output)
        acc = jnp.zeros((Bt * Ho, N), f32)
        for kh in range(K):                              # one MXU matmul per kernel row
            rows = inp[:, kh:kh + Ho, :].reshape(Bt * Ho, WC)
            acc = acc + jnp.dot(rows, wb_ref[kh], preferred_element_type=f32)
        acc = jnp.maximum(acc + bias_ref[...], 0.0)      # bias + ReLU

        # 2x2 stride-2 max pool.  H direction: pair adjacent output rows.
        y = acc.reshape(Bt, Ho // 2, 2, N)
        y = jnp.maximum(y[:, :, 0, :], y[:, :, 1, :])    # (Bt, Ho//2, N)
        # W direction: gather even/odd pooled columns with 0/1 selection matmuls.
        y2 = y.reshape(Bt * (Ho // 2), N)
        ye = jnp.dot(y2, se_ref[...], preferred_element_type=f32)
        yo = jnp.dot(y2, so_ref[...], preferred_element_type=f32)
        p = jnp.maximum(ye, yo)                          # (Bt*(Ho//2), (Wo//2)*Cout)
        return p.reshape(Bt, Ho // 2, p.shape[-1])

    h = conv_relu_pool(x, w1_ref, b1_ref, s1e_ref, s1o_ref)     # (Bt, 14, 84)
    h = conv_relu_pool(h, w2_ref, b2_ref, s2e_ref, s2o_ref)     # (Bt, 5, 80)

    # fc1 over the flattened (h, w, c) features: one (80 -> 128) matmul per pooled row,
    # which makes the "flatten" free (no in-kernel lane-changing reshape / transpose).
    acc = jnp.zeros((Bt, wf1_ref.shape[2]), f32)
    for hh in range(wf1_ref.shape[0]):
        acc = acc + jnp.dot(h[:, hh, :], wf1_ref[hh], preferred_element_type=f32)
    h1 = jnp.maximum(acc + bf1_ref[...], 0.0)                    # (Bt, 128)

    h2 = jnp.maximum(
        jnp.dot(h1, wf2_ref[...], preferred_element_type=f32) + bf2_ref[...], 0.0)
    z = jnp.dot(h2, wf3_ref[...], preferred_element_type=f32) + bf3_ref[...]  # (Bt, 10)

    # log_softmax over the class (lane) axis.
    m = jnp.max(z, axis=-1, keepdims=True)
    s = z - m
    lse = jnp.log(jnp.sum(jnp.exp(s), axis=-1, keepdims=True))
    o_ref[...] = (s - lse).astype(o_ref.dtype)


# ---------------------------------------------------------------------------
# Parameters (deterministic, PyTorch-style uniform(-1/sqrt(fan_in), 1/sqrt(fan_in)))
# ---------------------------------------------------------------------------
def init_params():
    ks = jax.random.split(jax.random.PRNGKey(0), 10)

    def uinit(k, shape, fan_in):
        bound = 1.0 / float(fan_in) ** 0.5
        return jax.random.uniform(k, shape, jnp.float32, -bound, bound)

    return {
        "conv1_w": uinit(ks[0], (6, 3, 5, 5), 3 * 5 * 5),   # OIHW (torch layout)
        "conv1_b": uinit(ks[1], (6,), 3 * 5 * 5),
        "conv2_w": uinit(ks[2], (16, 6, 5, 5), 6 * 5 * 5),
        "conv2_b": uinit(ks[3], (16,), 6 * 5 * 5),
        "fc1_w": uinit(ks[4], (400, 120), 400),             # (in, out); in-index in (C,H,W) order
        "fc1_b": uinit(ks[5], (120,), 400),
        "fc2_w": uinit(ks[6], (120, 84), 120),
        "fc2_b": uinit(ks[7], (84,), 120),
        "fc3_w": uinit(ks[8], (84, 10), 84),
        "fc3_b": uinit(ks[9], (10,), 84),
    }


# ---------------------------------------------------------------------------
# One-time weight re-layouts (hoisted out of the forward pass entirely)
# ---------------------------------------------------------------------------
def _banded_conv_weights(w_oihw, w_in):
    """Per-kernel-row banded matrices: banded[kh, w*Cin+c, wo*Cout+co] = w[co,c,kh,w-wo]."""
    cout, cin, kk, _ = w_oihw.shape
    wo = w_in - kk + 1
    w_np = np.asarray(w_oihw, np.float32)
    banded = np.zeros((kk, w_in * cin, wo * cout), np.float32)
    for kh in range(kk):
        for o_col in range(wo):
            for kw in range(kk):
                w = o_col + kw
                banded[kh, w * cin:(w + 1) * cin,
                       o_col * cout:(o_col + 1) * cout] = w_np[:, :, kh, kw].T
    return jnp.asarray(banded)


def _pool_selectors(wo, cout):
    """0/1 matrices gathering even/odd pooled columns from the lane-folded conv output."""
    se = np.zeros((wo * cout, (wo // 2) * cout), np.float32)
    so = np.zeros_like(se)
    for t in range(wo // 2):
        for c in range(cout):
            se[(2 * t) * cout + c, t * cout + c] = 1.0
            so[(2 * t + 1) * cout + c, t * cout + c] = 1.0
    return jnp.asarray(se), jnp.asarray(so)


def prepare_params(p):
    # conv1: input lanes W*Cin = 32*3 = 96, output lanes Wo*Cout = 28*6 = 168
    w1 = _banded_conv_weights(p["conv1_w"], 32)                       # (5, 96, 168)
    b1 = jnp.tile(p["conv1_b"], 28).reshape(1, 168)
    s1e, s1o = _pool_selectors(28, 6)                                  # (168, 84) x2
    # conv2: input lanes 14*6 = 84, output lanes 10*16 = 160
    w2 = _banded_conv_weights(p["conv2_w"], 14)                        # (5, 84, 160)
    b2 = jnp.tile(p["conv2_b"], 10).reshape(1, 160)
    s2e, s2o = _pool_selectors(10, 16)                                 # (160, 80) x2
    # fc1: rows re-ordered from torch (C,H,W) flatten order to (h-block, lanes = w*16+c),
    # one (80, 128) block per pooled row h; out dim zero-padded 120 -> 128.
    fc1 = np.asarray(p["fc1_w"], np.float32)                           # (400, 120)
    wf1 = np.zeros((5, 80, 128), np.float32)
    for hh in range(5):
        for w in range(5):
            for c in range(16):
                wf1[hh, w * 16 + c, :120] = fc1[c * 25 + hh * 5 + w, :]
    bf1 = jnp.zeros((1, 128), jnp.float32).at[0, :120].set(p["fc1_b"])
    # fc2 / fc3: zero-pad hidden dims to 128 (numerically inert through ReLU / zero inputs).
    wf2 = jnp.zeros((128, 128), jnp.float32).at[:120, :84].set(p["fc2_w"])
    bf2 = jnp.zeros((1, 128), jnp.float32).at[0, :84].set(p["fc2_b"])
    wf3 = jnp.zeros((128, 10), jnp.float32).at[:84, :].set(p["fc3_w"])
    bf3 = p["fc3_b"].reshape(1, 10)
    return (w1, b1, s1e, s1o, w2, b2, s2e, s2o,
            jnp.asarray(wf1), bf1, wf2, bf2, wf3, bf3)


# ---------------------------------------------------------------------------
# Forward pass: one fused pallas_call, batch-tiled "parallel" grid.
# ---------------------------------------------------------------------------
def _resident_spec(a):
    # Full-array blocks with a constant index_map: weights stay resident across grid steps.
    if a.ndim == 2:
        return pl.BlockSpec(a.shape, lambda i: (0, 0))
    return pl.BlockSpec(a.shape, lambda i: (0, 0, 0))


@functools.partial(jax.jit, static_argnames=("block_b",))
def cifar10net_forward(x_nchw, prepared, block_b=8):
    B = x_nchw.shape[0]
    bt = min(block_b, B)                       # batch tile (8 when B >= 8)
    bpad = ((B + bt - 1) // bt) * bt
    # NCHW -> NHWC (boundary glue), then fold (W, Cin) onto the lane axis (free reshape).
    x = jnp.transpose(x_nchw, (0, 2, 3, 1)).reshape(B, 32, 32 * 3)
    if bpad != B:
        x = jnp.pad(x, ((0, bpad - B), (0, 0), (0, 0)))

    out = pl.pallas_call(
        _cifar10_fused_kernel,
        out_shape=jax.ShapeDtypeStruct((bpad, 10), jnp.float32),
        grid=(bpad // bt,),
        in_specs=[pl.BlockSpec((bt, 32, 96), lambda i: (i, 0, 0))]
                 + [_resident_spec(a) for a in prepared],
        out_specs=pl.BlockSpec((bt, 10), lambda i: (i, 0)),
        compiler_params=pltpu.CompilerParams(
            dimension_semantics=("parallel",),        # batch tiles are independent
            vmem_limit_bytes=32 * 1024 * 1024,
        ),
    )(x, *prepared)
    return out[:B]


# Pure-JAX reference (same math as the PyTorch module) for validation.
def reference_forward(x_nchw, p):
    dn = ("NCHW", "OIHW", "NCHW")
    y = lax.conv_general_dilated(x_nchw, p["conv1_w"], (1, 1), "VALID", dimension_numbers=dn)
    y = jax.nn.relu(y + p["conv1_b"].reshape(1, -1, 1, 1))
    y = lax.reduce_window(y, -jnp.inf, lax.max, (1, 1, 2, 2), (1, 1, 2, 2), "VALID")
    y = lax.conv_general_dilated(y, p["conv2_w"], (1, 1), "VALID", dimension_numbers=dn)
    y = jax.nn.relu(y + p["conv2_b"].reshape(1, -1, 1, 1))
    y = lax.reduce_window(y, -jnp.inf, lax.max, (1, 1, 2, 2), (1, 1, 2, 2), "VALID")
    y = y.reshape(y.shape[0], -1)
    y = jax.nn.relu(y @ p["fc1_w"] + p["fc1_b"])
    y = jax.nn.relu(y @ p["fc2_w"] + p["fc2_b"])
    y = y @ p["fc3_w"] + p["fc3_b"]
    return jax.nn.log_softmax(y, axis=1)


if __name__ == "__main__":
    params = init_params()
    prepared = prepare_params(params)   # all weight re-layouts done once, outside the forward

    # CIFAR-10 sized input (32x32 required so flatten gives 16*5*5 = 400), batch = 2.
    x = jax.random.normal(jax.random.PRNGKey(0), (2, 3, 32, 32), jnp.float32)

    out = cifar10net_forward(x, prepared)
    out = jax.block_until_ready(out)

    ref = reference_forward(x, params)
    assert out.shape == (2, 10), out.shape
    max_err = float(jnp.max(jnp.abs(out - ref)))
    assert jnp.allclose(out, ref, atol=1e-3, rtol=1e-3), f"max abs diff = {max_err}"
    print("KERNEL_OK")
</pallas_src>

<mosaic_0001>
module attributes {stable_mosaic.version = 11 : i64} {
  func.func @_cifar10_fused_kernel(%arg0: i32, %arg1: memref<2x32x96xf32, #tpu.memory_space<vmem>>, %arg2: memref<5x96x168xf32, #tpu.memory_space<vmem>>, %arg3: memref<1x168xf32, #tpu.memory_space<vmem>>, %arg4: memref<168x84xf32, #tpu.memory_space<vmem>>, %arg5: memref<168x84xf32, #tpu.memory_space<vmem>>, %arg6: memref<5x84x160xf32, #tpu.memory_space<vmem>>, %arg7: memref<1x160xf32, #tpu.memory_space<vmem>>, %arg8: memref<160x80xf32, #tpu.memory_space<vmem>>, %arg9: memref<160x80xf32, #tpu.memory_space<vmem>>, %arg10: memref<5x80x128xf32, #tpu.memory_space<vmem>>, %arg11: memref<1x128xf32, #tpu.memory_space<vmem>>, %arg12: memref<128x128xf32, #tpu.memory_space<vmem>>, %arg13: memref<1x128xf32, #tpu.memory_space<vmem>>, %arg14: memref<128x10xf32, #tpu.memory_space<vmem>>, %arg15: memref<1x10xf32, #tpu.memory_space<vmem>>, %arg16: memref<2x10xf32, #tpu.memory_space<vmem>>) attributes {dimension_semantics = [#tpu.dimension_semantics<parallel>], iteration_bounds = array<i64: 1>, scalar_prefetch = 0 : i64, scratch_operands = 0 : i64, tpu.core_type = #tpu.core_type<tc>, window_params = [{transform_indices = @transform_0, window_bounds = array<i64: 2, 32, 96>}, {pipeline_mode = #tpu.pipeline_mode<synchronous>, transform_indices = @transform_1, window_bounds = array<i64: 5, 96, 168>}, {pipeline_mode = #tpu.pipeline_mode<synchronous>, transform_indices = @transform_2, window_bounds = array<i64: 1, 168>}, {pipeline_mode = #tpu.pipeline_mode<synchronous>, transform_indices = @transform_3, window_bounds = array<i64: 168, 84>}, {pipeline_mode = #tpu.pipeline_mode<synchronous>, transform_indices = @transform_4, window_bounds = array<i64: 168, 84>}, {pipeline_mode = #tpu.pipeline_mode<synchronous>, transform_indices = @transform_5, window_bounds = array<i64: 5, 84, 160>}, {pipeline_mode = #tpu.pipeline_mode<synchronous>, transform_indices = @transform_6, window_bounds = array<i64: 1, 160>}, {pipeline_mode = #tpu.pipeline_mode<synchronous>, transform_indices = @transform_7, window_bounds = array<i64: 160, 80>}, {pipeline_mode = #tpu.pipeline_mode<synchronous>, transform_indices = @transform_8, window_bounds = array<i64: 160, 80>}, {pipeline_mode = #tpu.pipeline_mode<synchronous>, transform_indices = @transform_9, window_bounds = array<i64: 5, 80, 128>}, {pipeline_mode = #tpu.pipeline_mode<synchronous>, transform_indices = @transform_10, window_bounds = array<i64: 1, 128>}, {pipeline_mode = #tpu.pipeline_mode<synchronous>, transform_indices = @transform_11, window_bounds = array<i64: 128, 128>}, {pipeline_mode = #tpu.pipeline_mode<synchronous>, transform_indices = @transform_12, window_bounds = array<i64: 1, 128>}, {pipeline_mode = #tpu.pipeline_mode<synchronous>, transform_indices = @transform_13, window_bounds = array<i64: 128, 10>}, {pipeline_mode = #tpu.pipeline_mode<synchronous>, transform_indices = @transform_14, window_bounds = array<i64: 1, 10>}, {transform_indices = @transform_15, window_bounds = array<i64: 2, 10>}]} {
    %c0 = arith.constant 0 : index
    %c0_0 = arith.constant 0 : index
    %c0_1 = arith.constant 0 : index
    %0 = vector.load %arg1[%c0, %c0_0, %c0_1] : memref<2x32x96xf32, #tpu.memory_space<vmem>>, vector<2x32x96xf32>
    %cst = arith.constant 0.000000e+00 : f32
    %1 = vector.broadcast %cst : f32 to vector<56x168xf32>
    %2 = vector.extract_strided_slice %0 {offsets = [0, 0, 0], sizes = [2, 28, 96], strides = [1, 1, 1]} : vector<2x32x96xf32> to vector<2x28x96xf32>
    %3 = vector.shape_cast %2 : vector<2x28x96xf32> to vector<56x96xf32>
    %c0_2 = arith.constant 0 : index
    %c0_3 = arith.constant 0 : index
    %c0_4 = arith.constant 0 : index
    %4 = vector.load %arg2[%c0_2, %c0_3, %c0_4] : memref<5x96x168xf32, #tpu.memory_space<vmem>>, vector<1x96x168xf32>
    %5 = vector.shape_cast %4 : vector<1x96x168xf32> to vector<96x168xf32>
    %cst_5 = arith.constant dense<0.000000e+00> : vector<56x168xf32>
    %6 = tpu.matmul %3, %5, %cst_5 {dimension_numbers = #tpu.dot_dimension_numbers<[1], [0], [0], [1], [0, 0, 1, 1], [], []>} : vector<56x96xf32>, vector<96x168xf32>, vector<56x168xf32> -> vector<56x168xf32>
    %7 = arith.addf %1, %6 : vector<56x168xf32>
    %8 = vector.extract_strided_slice %0 {offsets = [0, 1, 0], sizes = [2, 28, 96], strides = [1, 1, 1]} : vector<2x32x96xf32> to vector<2x28x96xf32>
    %9 = vector.shape_cast %8 : vector<2x28x96xf32> to vector<56x96xf32>
    %c1 = arith.constant 1 : index
    %c0_6 = arith.constant 0 : index
    %c0_7 = arith.constant 0 : index
    %10 = vector.load %arg2[%c1, %c0_6, %c0_7] : memref<5x96x168xf32, #tpu.memory_space<vmem>>, vector<1x96x168xf32>
    %11 = vector.shape_cast %10 : vector<1x96x168xf32> to vector<96x168xf32>
    %cst_8 = arith.constant dense<0.000000e+00> : vector<56x168xf32>
    %12 = tpu.matmul %9, %11, %cst_8 {dimension_numbers = #tpu.dot_dimension_numbers<[1], [0], [0], [1], [0, 0, 1, 1], [], []>} : vector<56x96xf32>, vector<96x168xf32>, vector<56x168xf32> -> vector<56x168xf32>
    %13 = arith.addf %7, %12 : vector<56x168xf32>
    %14 = vector.extract_strided_slice %0 {offsets = [0, 2, 0], sizes = [2, 28, 96], strides = [1, 1, 1]} : vector<2x32x96xf32> to vector<2x28x96xf32>
    %15 = vector.shape_cast %14 : vector<2x28x96xf32> to vector<56x96xf32>
    %c2 = arith.constant 2 : index
    %c0_9 = arith.constant 0 : index
    %c0_10 = arith.constant 0 : index
    %16 = vector.load %arg2[%c2, %c0_9, %c0_10] : memref<5x96x168xf32, #tpu.memory_space<vmem>>, vector<1x96x168xf32>
    %17 = vector.shape_cast %16 : vector<1x96x168xf32> to vector<96x168xf32>
    %cst_11 = arith.constant dense<0.000000e+00> : vector<56x168xf32>
    %18 = tpu.matmul %15, %17, %cst_11 {dimension_numbers = #tpu.dot_dimension_numbers<[1], [0], [0], [1], [0, 0, 1, 1], [], []>} : vector<56x96xf32>, vector<96x168xf32>, vector<56x168xf32> -> vector<56x168xf32>
    %19 = arith.addf %13, %18 : vector<56x168xf32>
    %20 = vector.extract_strided_slice %0 {offsets = [0, 3, 0], sizes = [2, 28, 96], strides = [1, 1, 1]} : vector<2x32x96xf32> to vector<2x28x96xf32>
    %21 = vector.shape_cast %20 : vector<2x28x96xf32> to vector<56x96xf32>
    %c3 = arith.constant 3 : index
    %c0_12 = arith.constant 0 : index
    %c0_13 = arith.constant 0 : index
    %22 = vector.load %arg2[%c3, %c0_12, %c0_13] : memref<5x96x168xf32, #tpu.memory_space<vmem>>, vector<1x96x168xf32>
    %23 = vector.shape_cast %22 : vector<1x96x168xf32> to vector<96x168xf32>
    %cst_14 = arith.constant dense<0.000000e+00> : vector<56x168xf32>
    %24 = tpu.matmul %21, %23, %cst_14 {dimension_numbers = #tpu.dot_dimension_numbers<[1], [0], [0], [1], [0, 0, 1, 1], [], []>} : vector<56x96xf32>, vector<96x168xf32>, vector<56x168xf32> -> vector<56x168xf32>
    %25 = arith.addf %19, %24 : vector<56x168xf32>
    %26 = vector.extract_strided_slice %0 {offsets = [0, 4, 0], sizes = [2, 28, 96], strides = [1, 1, 1]} : vector<2x32x96xf32> to vector<2x28x96xf32>
    %27 = vector.shape_cast %26 : vector<2x28x96xf32> to vector<56x96xf32>
    %c4 = arith.constant 4 : index
    %c0_15 = arith.constant 0 : index
    %c0_16 = arith.constant 0 : index
    %28 = vector.load %arg2[%c4, %c0_15, %c0_16] : memref<5x96x168xf32, #tpu.memory_space<vmem>>, vector<1x96x168xf32>
    %29 = vector.shape_cast %28 : vector<1x96x168xf32> to vector<96x168xf32>
    %cst_17 = arith.constant dense<0.000000e+00> : vector<56x168xf32>
    %30 = tpu.matmul %27, %29, %cst_17 {dimension_numbers = #tpu.dot_dimension_numbers<[1], [0], [0], [1], [0, 0, 1, 1], [], []>} : vector<56x96xf32>, vector<96x168xf32>, vector<56x168xf32> -> vector<56x168xf32>
    %31 = arith.addf %25, %30 : vector<56x168xf32>
    %c0_18 = arith.constant 0 : index
    %c0_19 = arith.constant 0 : index
    %32 = vector.load %arg3[%c0_18, %c0_19] : memref<1x168xf32, #tpu.memory_space<vmem>>, vector<1x168xf32>
    %33 = vector.broadcast %32 : vector<1x168xf32> to vector<56x168xf32>
    %34 = arith.addf %31, %33 : vector<56x168xf32>
    %cst_20 = arith.constant 0.000000e+00 : f32
    %35 = vector.broadcast %cst_20 : f32 to vector<56x168xf32>
    %36 = arith.maximumf %34, %35 : vector<56x168xf32>
    %37 = vector.shape_cast %36 : vector<56x168xf32> to vector<2x14x2x168xf32>
    %38 = vector.extract_strided_slice %37 {offsets = [0, 0, 0, 0], sizes = [2, 14, 1, 168], strides = [1, 1, 1, 1]} : vector<2x14x2x168xf32> to vector<2x14x1x168xf32>
    %39 = vector.shape_cast %38 : vector<2x14x1x168xf32> to vector<2x14x168xf32>
    %40 = vector.extract_strided_slice %37 {offsets = [0, 0, 1, 0], sizes = [2, 14, 1, 168], strides = [1, 1, 1, 1]} : vector<2x14x2x168xf32> to vector<2x14x1x168xf32>
    %41 = vector.shape_cast %40 : vector<2x14x1x168xf32> to vector<2x14x168xf32>
    %42 = arith.maximumf %39, %41 : vector<2x14x168xf32>
    %43 = vector.shape_cast %42 : vector<2x14x168xf32> to vector<28x168xf32>
    %c0_21 = arith.constant 0 : index
    %c0_22 = arith.constant 0 : index
    %44 = vector.load %arg4[%c0_21, %c0_22] : memref<168x84xf32, #tpu.memory_space<vmem>>, vector<168x84xf32>
    %cst_23 = arith.constant dense<0.000000e+00> : vector<28x84xf32>
    %45 = tpu.matmul %43, %44, %cst_23 {dimension_numbers = #tpu.dot_dimension_numbers<[1], [0], [0], [1], [0, 0, 1, 1], [], []>} : vector<28x168xf32>, vector<168x84xf32>, vector<28x84xf32> -> vector<28x84xf32>
    %c0_24 = arith.constant 0 : index
    %c0_25 = arith.constant 0 : index
    %46 = vector.load %arg5[%c0_24, %c0_25] : memref<168x84xf32, #tpu.memory_space<vmem>>, vector<168x84xf32>
    %cst_26 = arith.constant dense<0.000000e+00> : vector<28x84xf32>
    %47 = tpu.matmul %43, %46, %cst_26 {dimension_numbers = #tpu.dot_dimension_numbers<[1], [0], [0], [1], [0, 0, 1, 1], [], []>} : vector<28x168xf32>, vector<168x84xf32>, vector<28x84xf32> -> vector<28x84xf32>
    %48 = arith.maximumf %45, %47 : vector<28x84xf32>
    %49 = vector.shape_cast %48 : vector<28x84xf32> to vector<2x14x84xf32>
    %cst_27 = arith.constant 0.000000e+00 : f32
    %50 = vector.broadcast %cst_27 : f32 to vector<20x160xf32>
    %51 = vector.extract_strided_slice %49 {offsets = [0, 0, 0], sizes = [2, 10, 84], strides = [1, 1, 1]} : vector<2x14x84xf32> to vector<2x10x84xf32>
    %52 = vector.shape_cast %51 : vector<2x10x84xf32> to vector<20x84xf32>
    %c0_28 = arith.constant 0 : index
    %c0_29 = arith.constant 0 : index
    %c0_30 = arith.constant 0 : index
    %53 = vector.load %arg6[%c0_28, %c0_29, %c0_30] : memref<5x84x160xf32, #tpu.memory_space<vmem>>, vector<1x84x160xf32>
    %54 = vector.shape_cast %53 : vector<1x84x160xf32> to vector<84x160xf32>
    %cst_31 = arith.constant dense<0.000000e+00> : vector<20x160xf32>
    %55 = tpu.matmul %52, %54, %cst_31 {dimension_numbers = #tpu.dot_dimension_numbers<[1], [0], [0], [1], [0, 0, 1, 1], [], []>} : vector<20x84xf32>, vector<84x160xf32>, vector<20x160xf32> -> vector<20x160xf32>
    %56 = arith.addf %50, %55 : vector<20x160xf32>
    %57 = vector.extract_strided_slice %49 {offsets = [0, 1, 0], sizes = [2, 10, 84], strides = [1, 1, 1]} : vector<2x14x84xf32> to vector<2x10x84xf32>
    %58 = vector.shape_cast %57 : vector<2x10x84xf32> to vector<20x84xf32>
    %c1_32 = arith.constant 1 : index
    %c0_33 = arith.constant 0 : index
    %c0_34 = arith.constant 0 : index
    %59 = vector.load %arg6[%c1_32, %c0_33, %c0_34] : memref<5x84x160xf32, #tpu.memory_space<vmem>>, vector<1x84x160xf32>
    %60 = vector.shape_cast %59 : vector<1x84x160xf32> to vector<84x160xf32>
    %cst_35 = arith.constant dense<0.000000e+00> : vector<20x160xf32>
    %61 = tpu.matmul %58, %60, %cst_35 {dimension_numbers = #tpu.dot_dimension_numbers<[1], [0], [0], [1], [0, 0, 1, 1], [], []>} : vector<20x84xf32>, vector<84x160xf32>, vector<20x160xf32> -> vector<20x160xf32>
    %62 = arith.addf %56, %61 : vector<20x160xf32>
    %63 = vector.extract_strided_slice %49 {offsets = [0, 2, 0], sizes = [2, 10, 84], strides = [1, 1, 1]} : vector<2x14x84xf32> to vector<2x10x84xf32>
    %64 = vector.shape_cast %63 : vector<2x10x84xf32> to vector<20x84xf32>
    %c2_36 = arith.constant 2 : index
    %c0_37 = arith.constant 0 : index
    %c0_38 = arith.constant 0 : index
    %65 = vector.load %arg6[%c2_36, %c0_37, %c0_38] : memref<5x84x160xf32, #tpu.memory_space<vmem>>, vector<1x84x160xf32>
    %66 = vector.shape_cast %65 : vector<1x84x160xf32> to vector<84x160xf32>
    %cst_39 = arith.constant dense<0.000000e+00> : vector<20x160xf32>
    %67 = tpu.matmul %64, %66, %cst_39 {dimension_numbers = #tpu.dot_dimension_numbers<[1], [0], [0], [1], [0, 0, 1, 1], [], []>} : vector<20x84xf32>, vector<84x160xf32>, vector<20x160xf32> -> vector<20x160xf32>
    %68 = arith.addf %62, %67 : vector<20x160xf32>
    %69 = vector.extract_strided_slice %49 {offsets = [0, 3, 0], sizes = [2, 10, 84], strides = [1, 1, 1]} : vector<2x14x84xf32> to vector<2x10x84xf32>
    %70 = vector.shape_cast %69 : vector<2x10x84xf32> to vector<20x84xf32>
    %c3_40 = arith.constant 3 : index
    %c0_41 = arith.constant 0 : index
    %c0_42 = arith.constant 0 : index
    %71 = vector.load %arg6[%c3_40, %c0_41, %c0_42] : memref<5x84x160xf32, #tpu.memory_space<vmem>>, vector<1x84x160xf32>
    %72 = vector.shape_cast %71 : vector<1x84x160xf32> to vector<84x160xf32>
    %cst_43 = arith.constant dense<0.000000e+00> : vector<20x160xf32>
    %73 = tpu.matmul %70, %72, %cst_43 {dimension_numbers = #tpu.dot_dimension_numbers<[1], [0], [0], [1], [0, 0, 1, 1], [], []>} : vector<20x84xf32>, vector<84x160xf32>, vector<20x160xf32> -> vector<20x160xf32>
    %74 = arith.addf %68, %73 : vector<20x160xf32>
    %75 = vector.extract_strided_slice %49 {offsets = [0, 4, 0], sizes = [2, 10, 84], strides = [1, 1, 1]} : vector<2x14x84xf32> to vector<2x10x84xf32>
    %76 = vector.shape_cast %75 : vector<2x10x84xf32> to vector<20x84xf32>
    %c4_44 = arith.constant 4 : index
    %c0_45 = arith.constant 0 : index
    %c0_46 = arith.constant 0 : index
    %77 = vector.load %arg6[%c4_44, %c0_45, %c0_46] : memref<5x84x160xf32, #tpu.memory_space<vmem>>, vector<1x84x160xf32>
    %78 = vector.shape_cast %77 : vector<1x84x160xf32> to vector<84x160xf32>
    %cst_47 = arith.constant dense<0.000000e+00> : vector<20x160xf32>
    %79 = tpu.matmul %76, %78, %cst_47 {dimension_numbers = #tpu.dot_dimension_numbers<[1], [0], [0], [1], [0, 0, 1, 1], [], []>} : vector<20x84xf32>, vector<84x160xf32>, vector<20x160xf32> -> vector<20x160xf32>
    %80 = arith.addf %74, %79 : vector<20x160xf32>
    %c0_48 = arith.constant 0 : index
    %c0_49 = arith.constant 0 : index
    %81 = vector.load %arg7[%c0_48, %c0_49] : memref<1x160xf32, #tpu.memory_space<vmem>>, vector<1x160xf32>
    %82 = vector.broadcast %81 : vector<1x160xf32> to vector<20x160xf32>
    %83 = arith.addf %80, %82 : vector<20x160xf32>
    %cst_50 = arith.constant 0.000000e+00 : f32
    %84 = vector.broadcast %cst_50 : f32 to vector<20x160xf32>
    %85 = arith.maximumf %83, %84 : vector<20x160xf32>
    %86 = vector.shape_cast %85 : vector<20x160xf32> to vector<2x5x2x160xf32>
    %87 = vector.extract_strided_slice %86 {offsets = [0, 0, 0, 0], sizes = [2, 5, 1, 160], strides = [1, 1, 1, 1]} : vector<2x5x2x160xf32> to vector<2x5x1x160xf32>
    %88 = vector.shape_cast %87 : vector<2x5x1x160xf32> to vector<2x5x160xf32>
    %89 = vector.extract_strided_slice %86 {offsets = [0, 0, 1, 0], sizes = [2, 5, 1, 160], strides = [1, 1, 1, 1]} : vector<2x5x2x160xf32> to vector<2x5x1x160xf32>
    %90 = vector.shape_cast %89 : vector<2x5x1x160xf32> to vector<2x5x160xf32>
    %91 = arith.maximumf %88, %90 : vector<2x5x160xf32>
    %92 = vector.shape_cast %91 : vector<2x5x160xf32> to vector<10x160xf32>
    %c0_51 = arith.constant 0 : index
    %c0_52 = arith.constant 0 : index
    %93 = vector.load %arg8[%c0_51, %c0_52] : memref<160x80xf32, #tpu.memory_space<vmem>>, vector<160x80xf32>
    %cst_53 = arith.constant dense<0.000000e+00> : vector<10x80xf32>
    %94 = tpu.matmul %92, %93, %cst_53 {dimension_numbers = #tpu.dot_dimension_numbers<[1], [0], [0], [1], [0, 0, 1, 1], [], []>} : vector<10x160xf32>, vector<160x80xf32>, vector<10x80xf32> -> vector<10x80xf32>
    %c0_54 = arith.constant 0 : index
    %c0_55 = arith.constant 0 : index
    %95 = vector.load %arg9[%c0_54, %c0_55] : memref<160x80xf32, #tpu.memory_space<vmem>>, vector<160x80xf32>
    %cst_56 = arith.constant dense<0.000000e+00> : vector<10x80xf32>
    %96 = tpu.matmul %92, %95, %cst_56 {dimension_numbers = #tpu.dot_dimension_numbers<[1], [0], [0], [1], [0, 0, 1, 1], [], []>} : vector<10x160xf32>, vector<160x80xf32>, vector<10x80xf32> -> vector<10x80xf32>
    %97 = arith.maximumf %94, %96 : vector<10x80xf32>
    %98 = vector.shape_cast %97 : vector<10x80xf32> to vector<2x5x80xf32>
    %cst_57 = arith.constant 0.000000e+00 : f32
    %99 = vector.broadcast %cst_57 : f32 to vector<2x128xf32>
    %100 = vector.extract_strided_slice %98 {offsets = [0, 0, 0], sizes = [2, 1, 80], strides = [1, 1, 1]} : vector<2x5x80xf32> to vector<2x1x80xf32>
    %101 = vector.shape_cast %100 : vector<2x1x80xf32> to vector<2x80xf32>
    %c0_58 = arith.constant 0 : index
    %c0_59 = arith.constant 0 : index
    %c0_60 = arith.constant 0 : index
    %102 = vector.load %arg10[%c0_58, %c0_59, %c0_60] : memref<5x80x128xf32, #tpu.memory_space<vmem>>, vector<1x80x128xf32>
    %103 = vector.shape_cast %102 : vector<1x80x128xf32> to vector<80x128xf32>
    %cst_61 = arith.constant dense<0.000000e+00> : vector<2x128xf32>
    %104 = tpu.matmul %101, %103, %cst_61 {dimension_numbers = #tpu.dot_dimension_numbers<[1], [0], [0], [1], [0, 0, 1, 1], [], []>} : vector<2x80xf32>, vector<80x128xf32>, vector<2x128xf32> -> vector<2x128xf32>
    %105 = arith.addf %99, %104 : vector<2x128xf32>
    %106 = vector.extract_strided_slice %98 {offsets = [0, 1, 0], sizes = [2, 1, 80], strides = [1, 1, 1]} : vector<2x5x80xf32> to vector<2x1x80xf32>
    %107 = vector.shape_cast %106 : vector<2x1x80xf32> to vector<2x80xf32>
    %c1_62 = arith.constant 1 : index
    %c0_63 = arith.constant 0 : index
    %c0_64 = arith.constant 0 : index
    %108 = vector.load %arg10[%c1_62, %c0_63, %c0_64] : memref<5x80x128xf32, #tpu.memory_space<vmem>>, vector<1x80x128xf32>
    %109 = vector.shape_cast %108 : vector<1x80x128xf32> to vector<80x128xf32>
    %cst_65 = arith.constant dense<0.000000e+00> : vector<2x128xf32>
    %110 = tpu.matmul %107, %109, %cst_65 {dimension_numbers = #tpu.dot_dimension_numbers<[1], [0], [0], [1], [0, 0, 1, 1], [], []>} : vector<2x80xf32>, vector<80x128xf32>, vector<2x128xf32> -> vector<2x128xf32>
    %111 = arith.addf %105, %110 : vector<2x128xf32>
    %112 = vector.extract_strided_slice %98 {offsets = [0, 2, 0], sizes = [2, 1, 80], strides = [1, 1, 1]} : vector<2x5x80xf32> to vector<2x1x80xf32>
    %113 = vector.shape_cast %112 : vector<2x1x80xf32> to vector<2x80xf32>
    %c2_66 = arith.constant 2 : index
    %c0_67 = arith.constant 0 : index
    %c0_68 = arith.constant 0 : index
    %114 = vector.load %arg10[%c2_66, %c0_67, %c0_68] : memref<5x80x128xf32, #tpu.memory_space<vmem>>, vector<1x80x128xf32>
    %115 = vector.shape_cast %114 : vector<1x80x128xf32> to vector<80x128xf32>
    %cst_69 = arith.constant dense<0.000000e+00> : vector<2x128xf32>
    %116 = tpu.matmul %113, %115, %cst_69 {dimension_numbers = #tpu.dot_dimension_numbers<[1], [0], [0], [1], [0, 0, 1, 1], [], []>} : vector<2x80xf32>, vector<80x128xf32>, vector<2x128xf32> -> vector<2x128xf32>
    %117 = arith.addf %111, %116 : vector<2x128xf32>
    %118 = vector.extract_strided_slice %98 {offsets = [0, 3, 0], sizes = [2, 1, 80], strides = [1, 1, 1]} : vector<2x5x80xf32> to vector<2x1x80xf32>
    %119 = vector.shape_cast %118 : vector<2x1x80xf32> to vector<2x80xf32>
    %c3_70 = arith.constant 3 : index
    %c0_71 = arith.constant 0 : index
    %c0_72 = arith.constant 0 : index
    %120 = vector.load %arg10[%c3_70, %c0_71, %c0_72] : memref<5x80x128xf32, #tpu.memory_space<vmem>>, vector<1x80x128xf32>
    %121 = vector.shape_cast %120 : vector<1x80x128xf32> to vector<80x128xf32>
    %cst_73 = arith.constant dense<0.000000e+00> : vector<2x128xf32>
    %122 = tpu.matmul %119, %121, %cst_73 {dimension_numbers = #tpu.dot_dimension_numbers<[1], [0], [0], [1], [0, 0, 1, 1], [], []>} : vector<2x80xf32>, vector<80x128xf32>, vector<2x128xf32> -> vector<2x128xf32>
    %123 = arith.addf %117, %122 : vector<2x128xf32>
    %124 = vector.extract_strided_slice %98 {offsets = [0, 4, 0], sizes = [2, 1, 80], strides = [1, 1, 1]} : vector<2x5x80xf32> to vector<2x1x80xf32>
    %125 = vector.shape_cast %124 : vector<2x1x80xf32> to vector<2x80xf32>
    %c4_74 = arith.constant 4 : index
    %c0_75 = arith.constant 0 : index
    %c0_76 = arith.constant 0 : index
    %126 = vector.load %arg10[%c4_74, %c0_75, %c0_76] : memref<5x80x128xf32, #tpu.memory_space<vmem>>, vector<1x80x128xf32>
    %127 = vector.shape_cast %126 : vector<1x80x128xf32> to vector<80x128xf32>
    %cst_77 = arith.constant dense<0.000000e+00> : vector<2x128xf32>
    %128 = tpu.matmul %125, %127, %cst_77 {dimension_numbers = #tpu.dot_dimension_numbers<[1], [0], [0], [1], [0, 0, 1, 1], [], []>} : vector<2x80xf32>, vector<80x128xf32>, vector<2x128xf32> -> vector<2x128xf32>
    %129 = arith.addf %123, %128 : vector<2x128xf32>
    %c0_78 = arith.constant 0 : index
    %c0_79 = arith.constant 0 : index
    %130 = vector.load %arg11[%c0_78, %c0_79] : memref<1x128xf32, #tpu.memory_space<vmem>>, vector<1x128xf32>
    %131 = vector.broadcast %130 : vector<1x128xf32> to vector<2x128xf32>
    %132 = arith.addf %129, %131 : vector<2x128xf32>
    %cst_80 = arith.constant 0.000000e+00 : f32
    %133 = vector.broadcast %cst_80 : f32 to vector<2x128xf32>
    %134 = arith.maximumf %132, %133 : vector<2x128xf32>
    %c0_81 = arith.constant 0 : index
    %c0_82 = arith.constant 0 : index
    %135 = vector.load %arg12[%c0_81, %c0_82] : memref<128x128xf32, #tpu.memory_space<vmem>>, vector<128x128xf32>
    %cst_83 = arith.constant dense<0.000000e+00> : vector<2x128xf32>
    %136 = tpu.matmul %134, %135, %cst_83 {dimension_numbers = #tpu.dot_dimension_numbers<[1], [0], [0], [1], [0, 0, 1, 1], [], []>} : vector<2x128xf32>, vector<128x128xf32>, vector<2x128xf32> -> vector<2x128xf32>
    %c0_84 = arith.constant 0 : index
    %c0_85 = arith.constant 0 : index
    %137 = vector.load %arg13[%c0_84, %c0_85] : memref<1x128xf32, #tpu.memory_space<vmem>>, vector<1x128xf32>
    %138 = vector.broadcast %137 : vector<1x128xf32> to vector<2x128xf32>
    %139 = arith.addf %136, %138 : vector<2x128xf32>
    %cst_86 = arith.constant 0.000000e+00 : f32
    %140 = vector.broadcast %cst_86 : f32 to vector<2x128xf32>
    %141 = arith.maximumf %139, %140 : vector<2x128xf32>
    %c0_87 = arith.constant 0 : index
    %c0_88 = arith.constant 0 : index
    %142 = vector.load %arg14[%c0_87, %c0_88] : memref<128x10xf32, #tpu.memory_space<vmem>>, vector<128x10xf32>
    %cst_89 = arith.constant dense<0.000000e+00> : vector<2x10xf32>
    %143 = tpu.matmul %141, %142, %cst_89 {dimension_numbers = #tpu.dot_dimension_numbers<[1], [0], [0], [1], [0, 0, 1, 1], [], []>} : vector<2x128xf32>, vector<128x10xf32>, vector<2x10xf32> -> vector<2x10xf32>
    %c0_90 = arith.constant 0 : index
    %c0_91 = arith.constant 0 : index
    %144 = vector.load %arg15[%c0_90, %c0_91] : memref<1x10xf32, #tpu.memory_space<vmem>>, vector<1x10xf32>
    %145 = vector.broadcast %144 : vector<1x10xf32> to vector<2x10xf32>
    %146 = arith.addf %143, %145 : vector<2x10xf32>
    %cst_92 = arith.constant dense<0xFF800000> : vector<2xf32>
    %147 = vector.multi_reduction <maximumf>, %146, %cst_92 [1] : vector<2x10xf32> to vector<2xf32>
    %148 = vector.shape_cast %147 : vector<2xf32> to vector<2x1xf32>
    %149 = vector.broadcast %148 : vector<2x1xf32> to vector<2x10xf32>
    %150 = arith.subf %146, %149 : vector<2x10xf32>
    %151 = math.exp %150 : vector<2x10xf32>
    %cst_93 = arith.constant dense<0.000000e+00> : vector<2xf32>
    %152 = vector.multi_reduction <add>, %151, %cst_93 [1] : vector<2x10xf32> to vector<2xf32>
    %153 = vector.shape_cast %152 : vector<2xf32> to vector<2x1xf32>
    %154 = math.log %153 : vector<2x1xf32>
    %155 = vector.broadcast %154 : vector<2x1xf32> to vector<2x10xf32>
    %156 = arith.subf %150, %155 : vector<2x10xf32>
    %c0_94 = arith.constant 0 : index
    %c0_95 = arith.constant 0 : index
    %157 = vector.load %arg16[%c0_94, %c0_95] : memref<2x10xf32, #tpu.memory_space<vmem>>, vector<2x10xf32>
    tpu.vector_store %arg16[%c0_94, %c0_95], %156 {strides = array<i32>} : memref<2x10xf32, #tpu.memory_space<vmem>>, vector<2x10xf32>,
    return
  }
  func.func @transform_0(%arg0: i32) -> (i32, i32, i32) {
    %c0_i32 = arith.constant 0 : i32
    %c0_i32_0 = arith.constant 0 : i32
    %c0_i32_1 = arith.constant 0 : i32
    return %arg0, %c0_i32, %c0_i32_0 : i32, i32, i32
  }
  func.func @transform_1(%arg0: i32) -> (i32, i32, i32) {
    %c0_i32 = arith.constant 0 : i32
    %c0_i32_0 = arith.constant 0 : i32
    %c0_i32_1 = arith.constant 0 : i32
    %c0_i32_2 = arith.constant 0 : i32
    return %c0_i32, %c0_i32_0, %c0_i32_1 : i32, i32, i32
  }
  func.func @transform_2(%arg0: i32) -> (i32, i32) {
    %c0_i32 = arith.constant 0 : i32
    %c0_i32_0 = arith.constant 0 : i32
    %c0_i32_1 = arith.constant 0 : i32
    return %c0_i32, %c0_i32_0 : i32, i32
  }
  func.func @transform_3(%arg0: i32) -> (i32, i32) {
    %c0_i32 = arith.constant 0 : i32
    %c0_i32_0 = arith.constant 0 : i32
    %c0_i32_1 = arith.constant 0 : i32
    return %c0_i32, %c0_i32_0 : i32, i32
  }
  func.func @transform_4(%arg0: i32) -> (i32, i32) {
    %c0_i32 = arith.constant 0 : i32
    %c0_i32_0 = arith.constant 0 : i32
    %c0_i32_1 = arith.constant 0 : i32
    return %c0_i32, %c0_i32_0 : i32, i32
  }
  func.func @transform_5(%arg0: i32) -> (i32, i32, i32) {
    %c0_i32 = arith.constant 0 : i32
    %c0_i32_0 = arith.constant 0 : i32
    %c0_i32_1 = arith.constant 0 : i32
    %c0_i32_2 = arith.constant 0 : i32
    return %c0_i32, %c0_i32_0, %c0_i32_1 : i32, i32, i32
  }
  func.func @transform_6(%arg0: i32) -> (i32, i32) {
    %c0_i32 = arith.constant 0 : i32
    %c0_i32_0 = arith.constant 0 : i32
    %c0_i32_1 = arith.constant 0 : i32
    return %c0_i32, %c0_i32_0 : i32, i32
  }
  func.func @transform_7(%arg0: i32) -> (i32, i32) {
    %c0_i32 = arith.constant 0 : i32
    %c0_i32_0 = arith.constant 0 : i32
    %c0_i32_1 = arith.constant 0 : i32
    return %c0_i32, %c0_i32_0 : i32, i32
  }
  func.func @transform_8(%arg0: i32) -> (i32, i32) {
    %c0_i32 = arith.constant 0 : i32
    %c0_i32_0 = arith.constant 0 : i32
    %c0_i32_1 = arith.constant 0 : i32
    return %c0_i32, %c0_i32_0 : i32, i32
  }
  func.func @transform_9(%arg0: i32) -> (i32, i32, i32) {
    %c0_i32 = arith.constant 0 : i32
    %c0_i32_0 = arith.constant 0 : i32
    %c0_i32_1 = arith.constant 0 : i32
    %c0_i32_2 = arith.constant 0 : i32
    return %c0_i32, %c0_i32_0, %c0_i32_1 : i32, i32, i32
  }
  func.func @transform_10(%arg0: i32) -> (i32, i32) {
    %c0_i32 = arith.constant 0 : i32
    %c0_i32_0 = arith.constant 0 : i32
    %c0_i32_1 = arith.constant 0 : i32
    return %c0_i32, %c0_i32_0 : i32, i32
  }
  func.func @transform_11(%arg0: i32) -> (i32, i32) {
    %c0_i32 = arith.constant 0 : i32
    %c0_i32_0 = arith.constant 0 : i32
    %c0_i32_1 = arith.constant 0 : i32
    return %c0_i32, %c0_i32_0 : i32, i32
  }
  func.func @transform_12(%arg0: i32) -> (i32, i32) {
    %c0_i32 = arith.constant 0 : i32
    %c0_i32_0 = arith.constant 0 : i32
    %c0_i32_1 = arith.constant 0 : i32
    return %c0_i32, %c0_i32_0 : i32, i32
  }
  func.func @transform_13(%arg0: i32) -> (i32, i32) {
    %c0_i32 = arith.constant 0 : i32
    %c0_i32_0 = arith.constant 0 : i32
    %c0_i32_1 = arith.constant 0 : i32
    return %c0_i32, %c0_i32_0 : i32, i32
  }
  func.func @transform_14(%arg0: i32) -> (i32, i32) {
    %c0_i32 = arith.constant 0 : i32
    %c0_i32_0 = arith.constant 0 : i32
    %c0_i32_1 = arith.constant 0 : i32
    return %c0_i32, %c0_i32_0 : i32, i32
  }
  func.func @transform_15(%arg0: i32) -> (i32, i32) {
    %c0_i32 = arith.constant 0 : i32
    %c0_i32_0 = arith.constant 0 : i32
    return %arg0, %c0_i32 : i32, i32
  }
}

</mosaic_0001>

<llo_original>
// kernel: cifar10net_forward.1
$region0: #{cifar10net_forward.1}
  #allocation0 [shape = 'u32[]', space=smem, size = 0x4, offset = 0x4, fixed_abs, tag = 'smem constant byte address 0x4 - core index']
  #allocation1 [shape = 'u32[144,128]{1,0:T(1,128)}', space=vmem, size = 0x12000, scoped, tag = 'internal scratch']
  %s0 = inlined_call_operand.vmem [shape: f32[2,32,96], index: 0, kind: input, shape index: {}]
  %s1 = inlined_call_operand.vmem [shape: f32[5,96,168], index: 1, kind: input, shape index: {}]
  %s2 = inlined_call_operand.vmem [shape: f32[1,168], index: 2, kind: input, shape index: {}]
  %s3 = inlined_call_operand.vmem [shape: f32[168,84], index: 3, kind: input, shape index: {}]
  %s4 = inlined_call_operand.vmem [shape: f32[168,84], index: 4, kind: input, shape index: {}]
  %s5 = inlined_call_operand.vmem [shape: f32[5,84,160], index: 5, kind: input, shape index: {}]
  %s6 = inlined_call_operand.vmem [shape: f32[1,160], index: 6, kind: input, shape index: {}]
  %s7 = inlined_call_operand.vmem [shape: f32[160,80], index: 7, kind: input, shape index: {}]
  %s8 = inlined_call_operand.vmem [shape: f32[160,80], index: 8, kind: input, shape index: {}]
  %s9 = inlined_call_operand.vmem [shape: f32[5,80,128], index: 9, kind: input, shape index: {}]
  %s10 = inlined_call_operand.vmem [shape: f32[1,128], index: 10, kind: input, shape index: {}]
  %s11 = inlined_call_operand.vmem [shape: f32[128,128], index: 11, kind: input, shape index: {}]
  %s12 = inlined_call_operand.vmem [shape: f32[1,128], index: 12, kind: input, shape index: {}]
  %s13 = inlined_call_operand.vmem [shape: f32[128,10], index: 13, kind: input, shape index: {}]
  %s14 = inlined_call_operand.vmem [shape: f32[1,10], index: 14, kind: input, shape index: {}]
  %s15 = inlined_call_operand.hbm [shape: f32[2,10], index: 15, kind: output, shape index: {}]
  %s16 = sld [smem:[#allocation0]]
  $region70: #{cifar10net_forward.1} parent=0
    _
  %s18 = ssub.s32 1, %s16
  %s19 = scalar_select 0, %s18, %s16
  $region1: #{cifar10net_forward.1} parent=0
    #allocation2 [shape = 'u8[1024]{0}', space=vmem, size = 0x400, scoped, tag = 'output window, operand 0, single buffered']
    #allocation3 [shape = 's32[1]{0}', space=sflag, size = 0x4, scoped, tag = 'scoped memory for cifar10net_forward.1']
    %20 = vsyncpa [#allocation3], 0
    // Predicated region
    $region2: #{cifar10net_forward.1} parent=1 // pred_check
      _
    $region3: #{cifar10net_forward.1} parent=1 // pred_check_branch
      %22 = sbr.rel (0) target = $region5
    $region4: #{cifar10net_forward.1} parent=1 // pred_region
      _
    $region5: #{cifar10net_forward.1} parent=1 // pred_fallthru
      _
    // Predicated region
    $region6: #{cifar10net_forward.1} parent=1 // pred_check
      _
    $region7: #{cifar10net_forward.1} parent=1 // pred_check_branch
      %24 = sbr.rel (0) target = $region9
    $region8: #{cifar10net_forward.1} parent=1 // pred_region
      _
    $region9: #{cifar10net_forward.1} parent=1 // pred_fallthru
      _
    // Predicated region
    $region10: #{cifar10net_forward.1} parent=1 // pred_check
      _
    $region11: #{cifar10net_forward.1} parent=1 // pred_check_branch
      %26 = sbr.rel (0) target = $region13
    $region12: #{cifar10net_forward.1} parent=1 // pred_region
      _
    $region13: #{cifar10net_forward.1} parent=1 // pred_fallthru
      _
    // Predicated region
    $region14: #{cifar10net_forward.1} parent=1 // pred_check
      _
    $region15: #{cifar10net_forward.1} parent=1 // pred_check_branch
      %28 = sbr.rel (0) target = $region17
    $region16: #{cifar10net_forward.1} parent=1 // pred_region
      _
    $region17: #{cifar10net_forward.1} parent=1 // pred_fallthru
      _
    // Predicated region
    $region18: #{cifar10net_forward.1} parent=1 // pred_check
      _
    $region19: #{cifar10net_forward.1} parent=1 // pred_check_branch
      %30 = sbr.rel (0) target = $region21
    $region20: #{cifar10net_forward.1} parent=1 // pred_region
      _
    $region21: #{cifar10net_forward.1} parent=1 // pred_fallthru
      _
    // Predicated region
    $region22: #{cifar10net_forward.1} parent=1 // pred_check
      _
    $region23: #{cifar10net_forward.1} parent=1 // pred_check_branch
      %32 = sbr.rel (0) target = $region25
    $region24: #{cifar10net_forward.1} parent=1 // pred_region
      _
    $region25: #{cifar10net_forward.1} parent=1 // pred_fallthru
      _
    // Predicated region
    $region26: #{cifar10net_forward.1} parent=1 // pred_check
      _
    $region27: #{cifar10net_forward.1} parent=1 // pred_check_branch
      %34 = sbr.rel (0) target = $region29
    $region28: #{cifar10net_forward.1} parent=1 // pred_region
      _
    $region29: #{cifar10net_forward.1} parent=1 // pred_fallthru
      _
    // Predicated region
    $region30: #{cifar10net_forward.1} parent=1 // pred_check
      _
    $region31: #{cifar10net_forward.1} parent=1 // pred_check_branch
      %36 = sbr.rel (0) target = $region33
    $region32: #{cifar10net_forward.1} parent=1 // pred_region
      _
    $region33: #{cifar10net_forward.1} parent=1 // pred_fallthru
      _
    // Predicated region
    $region34: #{cifar10net_forward.1} parent=1 // pred_check
      _
    $region35: #{cifar10net_forward.1} parent=1 // pred_check_branch
      %38 = sbr.rel (0) target = $region37
    $region36: #{cifar10net_forward.1} parent=1 // pred_region
      _
    $region37: #{cifar10net_forward.1} parent=1 // pred_fallthru
      _
    // Predicated region
    $region38: #{cifar10net_forward.1} parent=1 // pred_check
      _
    $region39: #{cifar10net_forward.1} parent=1 // pred_check_branch
      %40 = sbr.rel (0) target = $region41
    $region40: #{cifar10net_forward.1} parent=1 // pred_region
      _
    $region41: #{cifar10net_forward.1} parent=1 // pred_fallthru
      _
    // Predicated region
    $region42: #{cifar10net_forward.1} parent=1 // pred_check
      _
    $region43: #{cifar10net_forward.1} parent=1 // pred_check_branch
      %42 = sbr.rel (0) target = $region45
    $region44: #{cifar10net_forward.1} parent=1 // pred_region
      _
    $region45: #{cifar10net_forward.1} parent=1 // pred_fallthru
      _
    // Predicated region
    $region46: #{cifar10net_forward.1} parent=1 // pred_check
      _
    $region47: #{cifar10net_forward.1} parent=1 // pred_check_branch
      %44 = sbr.rel (0) target = $region49
    $region48: #{cifar10net_forward.1} parent=1 // pred_region
      _
    $region49: #{cifar10net_forward.1} parent=1 // pred_fallthru
      _
    // Predicated region
    $region50: #{cifar10net_forward.1} parent=1 // pred_check
      _
    $region51: #{cifar10net_forward.1} parent=1 // pred_check_branch
      %46 = sbr.rel (0) target = $region53
    $region52: #{cifar10net_forward.1} parent=1 // pred_region
      _
    $region53: #{cifar10net_forward.1} parent=1 // pred_fallthru
      _
    // Predicated region
    $region54: #{cifar10net_forward.1} parent=1 // pred_check
      _
    $region55: #{cifar10net_forward.1} parent=1 // pred_check_branch
      %48 = sbr.rel (0) target = $region57
    $region56: #{cifar10net_forward.1} parent=1 // pred_region
      _
    $region57: #{cifar10net_forward.1} parent=1 // pred_fallthru
      _
    // Predicated region
    $region58: #{cifar10net_forward.1} parent=1 // pred_check
      _
    $region59: #{cifar10net_forward.1} parent=1 // pred_check_branch
      %50 = sbr.rel (0) target = $region61
    $region60: #{cifar10net_forward.1} parent=1 // pred_region
      _
    $region61: #{cifar10net_forward.1} parent=1 // pred_fallthru
      _
    %v51 = vld [vmem:[%s0] sm:$0xff]
    %v52 = vld [vmem:[%s0 + $0x8] sm:$0xff]
    %v53 = vld [vmem:[%s0 + $0x10] sm:$0xff]
    %v54 = vld [vmem:[%s0 + $0x18] sm:$0xff]
    %v55 = vld [vmem:[%s0 + $0x20] sm:$0xff]
    %v56 = vld [vmem:[%s0 + $0x28] sm:$0xff]
    %v57 = vld [vmem:[%s0 + $0x30] sm:$0xff]
    %v58 = vld [vmem:[%s0 + $0x38] sm:$0xff]
    %v67 = vcombine.high %v51, %v51
    %v68 = vcombine.high %v52, %v52
    %v69 = vcombine.high %v53, %v53
    %v70 = vcombine.high %v55, %v55
    %v71 = vcombine.high %v56, %v56
    %v72 = vcombine.high %v57, %v57
    %v73 = vld [vmem:[%s1] sm:$0xff]
    %v74 = vld [vmem:[%s1 + $0x8] sm:$0xff]
    %v75 = vld [vmem:[%s1 + $0x10] sm:$0xff]
    %v76 = vld [vmem:[%s1 + $0x18] sm:$0xff]
    %v77 = vld [vmem:[%s1 + $0x20] sm:$0xff]
    %v78 = vld [vmem:[%s1 + $0x28] sm:$0xff]
    %v79 = vld [vmem:[%s1 + $0x30] sm:$0xff]
    %v80 = vld [vmem:[%s1 + $0x38] sm:$0xff]
    %v81 = vld [vmem:[%s1 + $0x40] sm:$0xff]
    %v82 = vld [vmem:[%s1 + $0x48] sm:$0xff]
    %v83 = vld [vmem:[%s1 + $0x50] sm:$0xff]
    %v84 = vld [vmem:[%s1 + $0x58] sm:$0xff]
    %v85 = vld [vmem:[%s1 + $0x60] sm:$0xff]
    %v86 = vld [vmem:[%s1 + $0x68] sm:$0xff]
    %v87 = vld [vmem:[%s1 + $0x70] sm:$0xff]
    %v88 = vld [vmem:[%s1 + $0x78] sm:$0xff]
    %v89 = vld [vmem:[%s1 + $0x80] sm:$0xff]
    %v90 = vld [vmem:[%s1 + $0x88] sm:$0xff]
    %v91 = vld [vmem:[%s1 + $0x90] sm:$0xff]
    %v92 = vld [vmem:[%s1 + $0x98] sm:$0xff]
    %v93 = vld [vmem:[%s1 + $0xa0] sm:$0xff]
    %v94 = vld [vmem:[%s1 + $0xa8] sm:$0xff]
    %v95 = vld [vmem:[%s1 + $0xb0] sm:$0xff]
    %v96 = vld [vmem:[%s1 + $0xb8] sm:$0xff]
    %v97 = vcombine.high %v54, %v54
    %v98 = vcombine.high %v58, %v58
    %vm99 = vcmask 1042432
    %vm100 = vcmask 1046532
    %vm101 = vmor %vm99, %vm100
    %v102 = vrot.slane %v51, 5
    %v103 = vrot.slane %v102, 4
    %v104 = vrot.slane %v67, 5
    %v105 = vsel %vm101, %v103, %v104
    %v106 = vrot.slane %v104, 4
    %v107 = vrot.slane %v52, 5
    %v108 = vsel %vm101, %v106, %v107
    %v109 = vrot.slane %v107, 4
    %v110 = vrot.slane %v68, 5
    %v111 = vsel %vm101, %v109, %v110
    %v112 = vrot.slane %v110, 4
    %v113 = vrot.slane %v53, 5
    %v114 = vsel %vm101, %v112, %v113
    %v115 = vrot.slane %v113, 4
    %v116 = vrot.slane %v69, 5
    %v117 = vsel %vm101, %v115, %v116
    %v118 = vrot.slane %v116, 4
    %v119 = vrot.slane %v54, 5
    %v120 = vsel %vm101, %v118, %v119
    %v121 = vrot.slane %v119, 4
    %v122 = vrot.slane %v97, 5
    %v123 = vsel %vm101, %v121, %v122
    %v124 = vrot.slane %v55, 5
    %v125 = vrot.slane %v124, 4
    %v126 = vrot.slane %v70, 5
    %v127 = vsel %vm101, %v125, %v126
    %v128 = vrot.slane %v126, 4
    %v129 = vrot.slane %v56, 5
    %v130 = vsel %vm101, %v128, %v129
    %v131 = vrot.slane %v129, 4
    %v132 = vrot.slane %v71, 5
    %v133 = vsel %vm101, %v131, %v132
    %v134 = vrot.slane %v132, 4
    %v135 = vrot.slane %v57, 5
    %v136 = vsel %vm101, %v134, %v135
    %v137 = vrot.slane %v135, 4
    %v138 = vrot.slane %v72, 5
    %v139 = vsel %vm101, %v137, %v138
    %v140 = vrot.slane %v138, 4
    %v141 = vrot.slane %v58, 5
    %v142 = vsel %vm101, %v140, %v141
    %v143 = vrot.slane %v141, 4
    %v144 = vrot.slane %v98, 5
    %v145 = vsel %vm101, %v143, %v144
    %s146 = scalar_lea.vmem %s1, 192
    %v147 = vld [vmem:[%s146] sm:$0xff]
    %v148 = vld [vmem:[%s146 + $0x8] sm:$0xff]
    %v149 = vld [vmem:[%s146 + $0x10] sm:$0xff]
    %v150 = vld [vmem:[%s146 + $0x18] sm:$0xff]
    %v151 = vld [vmem:[%s146 + $0x20] sm:$0xff]
    %v152 = vld [vmem:[%s146 + $0x28] sm:$0xff]
    %v153 = vld [vmem:[%s146 + $0x30] sm:$0xff]
    %v154 = vld [vmem:[%s146 + $0x38] sm:$0xff]
    %v155 = vld [vmem:[%s146 + $0x40] sm:$0xff]
    %v156 = vld [vmem:[%s146 + $0x48] sm:$0xff]
    %v157 = vld [vmem:[%s146 + $0x50] sm:$0xff]
    %v158 = vld [vmem:[%s146 + $0x58] sm:$0xff]
    %v159 = vld [vmem:[%s146 + $0x60] sm:$0xff]
    %v160 = vld [vmem:[%s146 + $0x68] sm:$0xff]
    %v161 = vld [vmem:[%s146 + $0x70] sm:$0xff]
    %v162 = vld [vmem:[%s146 + $0x78] sm:$0xff]
    %v163 = vld [vmem:[%s146 + $0x80] sm:$0xff]
    %v164 = vld [vmem:[%s146 + $0x88] sm:$0xff]
    %v165 = vld [vmem:[%s146 + $0x90] sm:$0xff]
    %v166 = vld [vmem:[%s146 + $0x98] sm:$0xff]
    %v167 = vld [vmem:[%s146 + $0xa0] sm:$0xff]
    %v168 = vld [vmem:[%s146 + $0xa8] sm:$0xff]
    %v169 = vld [vmem:[%s146 + $0xb0] sm:$0xff]
    %v170 = vld [vmem:[%s146 + $0xb8] sm:$0xff]
    %v171 = vcombine.low %v105, %v108
    %v172 = vcombine.low %v111, %v114
    %v173 = vcombine.low %v117, %v120
    %v174 = vcombine.low %v123, %v127
    %v175 = vcombine.low %v130, %v133
    %v176 = vcombine.low %v136, %v139
    %v177 = vcombine.low %v142, %v145
    %vm178 = vcmask 785408
    %v179 = vsel %vm178, %v171, 0
    %v181 = vsel %vm178, %v172, 0
    %v183 = vsel %vm178, %v173, 0
    %v185 = vsel %vm178, %v174, 0
    %v187 = vsel %vm178, %v175, 0
    %v189 = vsel %vm178, %v176, 0
    %v191 = vsel %vm178, %v177, 0
    %193 = vmatprep.subr.mxu0 0.0
    %194 = vmatpush1.msra.mxu0 0.0
    %195 = vmatprep.subr.mxu0 0.0
    %196 = vmatpush1.msra.mxu0 0.0
    %197 = vmatprep.subr.mxu0 0.0
    %198 = vmatpush1.msra.mxu0 0.0
    %199 = vmatprep.subr.mxu0 0.0
    %200 = vmatpush1.msra.mxu0 0.0
    %201 = vmatprep.subr.mxu0 %v170
    %202 = vmatpush1.msra.mxu0 %v169
    %203 = vmatprep.subr.mxu0 %v168
    %204 = vmatpush1.msra.mxu0 %v167
    %205 = vmatprep.subr.mxu0 %v166
    %206 = vmatpush1.msra.mxu0 %v165
    %207 = vmatprep.subr.mxu0 %v164
    %208 = vmatpush1.msra.mxu0 %v163
    %209 = vmatprep.subr.mxu0 %v162
    %210 = vmatpush1.msra.mxu0 %v161
    %211 = vmatprep.subr.mxu0 %v160
    %212 = vmatpush1.msra.mxu0 %v159
    %213 = vmatprep.subr.mxu0 %v158
    %214 = vmatpush1.msra.mxu0 %v157
    %215 = vmatprep.subr.mxu0 %v156
    %216 = vmatpush1.msra.mxu0 %v155
    %217 = vmatprep.subr.mxu0 %v154
    %218 = vmatpush1.msra.mxu0 %v153
    %219 = vmatprep.subr.mxu0 %v152
    %220 = vmatpush1.msra.mxu0 %v151
    %221 = vmatprep.subr.mxu0 %v150
    %222 = vmatpush1.msra.mxu0 %v149
    %223 = vmatprep.subr.mxu0 %v148
    %224 = vmatpush1.msra.mxu0 %v147
    %225 = vmatprep.subr.mxu0 0.0
    %226 = vmatpush2.msra.mxu0 0.0
    %227 = vmatprep.subr.mxu0 0.0
    %228 = vmatpush2.msra.mxu0 0.0
    %229 = vmatprep.subr.mxu0 0.0
    %230 = vmatpush2.msra.mxu0 0.0
    %231 = vmatprep.subr.mxu0 0.0
    %232 = vmatpush2.msra.mxu0 0.0
    %233 = vmatprep.subr.mxu0 0.0
    %234 = vmatpush2.msra.mxu0 0.0
    %235 = vmatprep.subr.mxu0 0.0
    %236 = vmatpush2.msra.mxu0 0.0
    %237 = vmatprep.subr.mxu0 0.0
    %238 = vmatpush2.msra.mxu0 0.0
    %239 = vmatprep.subr.mxu0 0.0
    %240 = vmatpush2.msra.mxu0 0.0
    %241 = vmatprep.subr.mxu0 0.0
    %242 = vmatpush2.msra.mxu0 0.0
    %243 = vmatprep.subr.mxu0 0.0
    %244 = vmatpush2.msra.mxu0 0.0
    %245 = vmatprep.subr.mxu0 0.0
    %246 = vmatpush2.msra.mxu0 0.0
    %247 = vmatprep.subr.mxu0 0.0
    %248 = vmatpush2.msra.mxu0 0.0
    %249 = vmatprep.subr.mxu0 0.0
    %250 = vmatpush2.msra.mxu0 0.0
    %251 = vmatprep.subr.mxu0 0.0
    %252 = vmatpush2.msra.mxu0 0.0
    %253 = vmatprep.subr.mxu0 0.0
    %254 = vmatpush2.msra.mxu0 0.0
    %255 = vmatprep.subr.mxu0 0.0
    %256 = vmatpush2.msra.mxu0 0.0
    %257 = vmatprep.mubr.f32.mxu0 0.0
    %258 = vmatmul.mubr.f32.gmra.mxu0 %v179
    %v259 = vpop.f32.mrf.mxu0
    %v260 = vadd.f32 0.0, %v259
    %v261 = vpop.f32.mrf.mxu0
    %v262 = vadd.f32 0.0, %v261
    %263 = vmatprep.mubr.f32.mxu0 0.0
    %264 = vmatmul.mubr.f32.gmra.mxu0 %v181
    %v265 = vpop.f32.mrf.mxu0
    %v266 = vadd.f32 0.0, %v265
    %v267 = vpop.f32.mrf.mxu0
    %v268 = vadd.f32 0.0, %v267
    %269 = vmatprep.mubr.f32.mxu0 0.0
    %270 = vmatmul.mubr.f32.gmra.mxu0 %v183
    %v271 = vpop.f32.mrf.mxu0
    %v272 = vadd.f32 0.0, %v271
    %v273 = vpop.f32.mrf.mxu0
    %v274 = vadd.f32 0.0, %v273
    %275 = vmatprep.mubr.f32.mxu0 0.0
    %276 = vmatmul.mubr.f32.gmra.mxu0 %v185
    %v277 = vpop.f32.mrf.mxu0
    %v278 = vadd.f32 0.0, %v277
    %v279 = vpop.f32.mrf.mxu0
    %v280 = vadd.f32 0.0, %v279
    %281 = vmatprep.mubr.f32.mxu0 0.0
    %282 = vmatmul.mubr.f32.gmra.mxu0 %v187
    %v283 = vpop.f32.mrf.mxu0
    %v284 = vadd.f32 0.0, %v283
    %v285 = vpop.f32.mrf.mxu0
    %v286 = vadd.f32 0.0, %v285
    %287 = vmatprep.mubr.f32.mxu0 0.0
    %288 = vmatmul.mubr.f32.gmra.mxu0 %v189
    %v289 = vpop.f32.mrf.mxu0
    %v290 = vadd.f32 0.0, %v289
    %v291 = vpop.f32.mrf.mxu0
    %v292 = vadd.f32 0.0, %v291
    %293 = vmatprep.mubr.f32.mxu0 0.0
    %294 = vmatmul.mubr.f32.gmra.mxu0 %v191
    %v295 = vpop.f32.mrf.mxu0
    %v296 = vadd.f32 0.0, %v295
    %v297 = vpop.f32.mrf.mxu0
    %v298 = vadd.f32 0.0, %v297
    %299 = vdwg.mxu0
    %v300 = vcombine.low %v51, %v67
    %v301 = vcombine.low %v52, %v68
    %v302 = vcombine.low %v53, %v69
    %v303 = vcombine.low %v54, %v55
    %v304 = vcombine.low %v70, %v56
    %v305 = vcombine.low %v71, %v57
    %v306 = vcombine.low %v72, %v58
    %v307 = vsel %vm178, %v300, 0
    %v309 = vsel %vm178, %v301, 0
    %v311 = vsel %vm178, %v302, 0
    %v313 = vsel %vm178, %v303, 0
    %v315 = vsel %vm178, %v304, 0
    %v317 = vsel %vm178, %v305, 0
    %v319 = vsel %vm178, %v306, 0
    %321 = vmatprep.subr.mxu0 0.0
    %322 = vmatpush1.msra.mxu0 0.0
    %323 = vmatprep.subr.mxu0 0.0
    %324 = vmatpush1.msra.mxu0 0.0
    %325 = vmatprep.subr.mxu0 0.0
    %326 = vmatpush1.msra.mxu0 0.0
    %327 = vmatprep.subr.mxu0 0.0
    %328 = vmatpush1.msra.mxu0 0.0
    %329 = vmatprep.subr.mxu0 %v96
    %330 = vmatpush1.msra.mxu0 %v95
    %331 = vmatprep.subr.mxu0 %v94
    %332 = vmatpush1.msra.mxu0 %v93
    %333 = vmatprep.subr.mxu0 %v92
    %334 = vmatpush1.msra.mxu0 %v91
    %335 = vmatprep.subr.mxu0 %v90
    %336 = vmatpush1.msra.mxu0 %v89
    %337 = vmatprep.subr.mxu0 %v88
    %338 = vmatpush1.msra.mxu0 %v87
    %339 = vmatprep.subr.mxu0 %v86
    %340 = vmatpush1.msra.mxu0 %v85
    %341 = vmatprep.subr.mxu0 %v84
    %342 = vmatpush1.msra.mxu0 %v83
    %343 = vmatprep.subr.mxu0 %v82
    %344 = vmatpush1.msra.mxu0 %v81
    %345 = vmatprep.subr.mxu0 %v80
    %346 = vmatpush1.msra.mxu0 %v79
    %347 = vmatprep.subr.mxu0 %v78
    %348 = vmatpush1.msra.mxu0 %v77
    %349 = vmatprep.subr.mxu0 %v76
    %350 = vmatpush1.msra.mxu0 %v75
    %351 = vmatprep.subr.mxu0 %v74
    %352 = vmatpush1.msra.mxu0 %v73
    %353 = vmatprep.subr.mxu0 0.0
    %354 = vmatpush2.msra.mxu0 0.0
    %355 = vmatprep.subr.mxu0 0.0
    %356 = vmatpush2.msra.mxu0 0.0
    %357 = vmatprep.subr.mxu0 0.0
    %358 = vmatpush2.msra.mxu0 0.0
    %359 = vmatprep.subr.mxu0 0.0
    %360 = vmatpush2.msra.mxu0 0.0
    %361 = vmatprep.subr.mxu0 0.0
    %362 = vmatpush2.msra.mxu0 0.0
    %363 = vmatprep.subr.mxu0 0.0
    %364 = vmatpush2.msra.mxu0 0.0
    %365 = vmatprep.subr.mxu0 0.0
    %366 = vmatpush2.msra.mxu0 0.0
    %367 = vmatprep.subr.mxu0 0.0
    %368 = vmatpush2.msra.mxu0 0.0
    %369 = vmatprep.subr.mxu0 0.0
    %370 = vmatpush2.msra.mxu0 0.0
    %371 = vmatprep.subr.mxu0 0.0
    %372 = vmatpush2.msra.mxu0 0.0
    %373 = vmatprep.subr.mxu0 0.0
    %374 = vmatpush2.msra.mxu0 0.0
    %375 = vmatprep.subr.mxu0 0.0
    %376 = vmatpush2.msra.mxu0 0.0
    %377 = vmatprep.subr.mxu0 0.0
    %378 = vmatpush2.msra.mxu0 0.0
    %379 = vmatprep.subr.mxu0 0.0
    %380 = vmatpush2.msra.mxu0 0.0
    %381 = vmatprep.subr.mxu0 0.0
    %382 = vmatpush2.msra.mxu0 0.0
    %383 = vmatprep.subr.mxu0 0.0
    %384 = vmatpush2.msra.mxu0 0.0
    %385 = vmatprep.mubr.f32.mxu0 0.0
    %386 = vmatmul.mubr.f32.gmra.mxu0 %v307
    %v387 = vpop.f32.mrf.mxu0
    %v388 = vadd.f32 %v260, %v387
    %v389 = vpop.f32.mrf.mxu0
    %v390 = vadd.f32 %v262, %v389
    %391 = vmatprep.mubr.f32.mxu0 0.0
    %392 = vmatmul.mubr.f32.gmra.mxu0 %v309
    %v393 = vpop.f32.mrf.mxu0
    %v394 = vadd.f32 %v266, %v393
    %v395 = vpop.f32.mrf.mxu0
    %v396 = vadd.f32 %v268, %v395
    %397 = vmatprep.mubr.f32.mxu0 0.0
    %398 = vmatmul.mubr.f32.gmra.mxu0 %v311
    %v399 = vpop.f32.mrf.mxu0
    %v400 = vadd.f32 %v272, %v399
    %v401 = vpop.f32.mrf.mxu0
    %v402 = vadd.f32 %v274, %v401
    %403 = vmatprep.mubr.f32.mxu0 0.0
    %404 = vmatmul.mubr.f32.gmra.mxu0 %v313
    %v405 = vpop.f32.mrf.mxu0
    %v406 = vadd.f32 %v278, %v405
    %v407 = vpop.f32.mrf.mxu0
    %v408 = vadd.f32 %v280, %v407
    %409 = vmatprep.mubr.f32.mxu0 0.0
    %410 = vmatmul.mubr.f32.gmra.mxu0 %v315
    %v411 = vpop.f32.mrf.mxu0
    %v412 = vadd.f32 %v284, %v411
    %v413 = vpop.f32.mrf.mxu0
    %v414 = vadd.f32 %v286, %v413
    %415 = vmatprep.mubr.f32.mxu0 0.0
    %416 = vmatmul.mubr.f32.gmra.mxu0 %v317
    %v417 = vpop.f32.mrf.mxu0
    %v418 = vadd.f32 %v290, %v417
    %v419 = vpop.f32.mrf.mxu0
    %v420 = vadd.f32 %v292, %v419
    %421 = vmatprep.mubr.f32.mxu0 0.0
    %422 = vmatmul.mubr.f32.gmra.mxu0 %v319
    %v423 = vpop.f32.mrf.mxu0
    %v424 = vadd.f32 %v296, %v423
    %v425 = vpop.f32.mrf.mxu0
    %v426 = vadd.f32 %v298, %v425
    %427 = vdwg.mxu0
    %vm428 = vcmask 1041408
    %vm429 = vcmask 1045508
    %vm430 = vmor %vm428, %vm429
    %v431 = vrot.slane %v51, 6
    %v432 = vrot.slane %v431, 4
    %v433 = vrot.slane %v67, 6
    %v434 = vsel %vm430, %v432, %v433
    %v435 = vrot.slane %v433, 4
    %v436 = vrot.slane %v52, 6
    %v437 = vsel %vm430, %v435, %v436
    %v438 = vrot.slane %v436, 4
    %v439 = vrot.slane %v68, 6
    %v440 = vsel %vm430, %v438, %v439
    %v441 = vrot.slane %v439, 4
    %v442 = vrot.slane %v53, 6
    %v443 = vsel %vm430, %v441, %v442
    %v444 = vrot.slane %v442, 4
    %v445 = vrot.slane %v69, 6
    %v446 = vsel %vm430, %v444, %v445
    %v447 = vrot.slane %v445, 4
    %v448 = vrot.slane %v54, 6
    %v449 = vsel %vm430, %v447, %v448
    %v450 = vrot.slane %v448, 4
    %v451 = vrot.slane %v97, 6
    %v452 = vsel %vm430, %v450, %v451
    %v453 = vrot.slane %v55, 6
    %v454 = vrot.slane %v453, 4
    %v455 = vrot.slane %v70, 6
    %v456 = vsel %vm430, %v454, %v455
    %v457 = vrot.slane %v455, 4
    %v458 = vrot.slane %v56, 6
    %v459 = vsel %vm430, %v457, %v458
    %v460 = vrot.slane %v458, 4
    %v461 = vrot.slane %v71, 6
    %v462 = vsel %vm430, %v460, %v461
    %v463 = vrot.slane %v461, 4
    %v464 = vrot.slane %v57, 6
    %v465 = vsel %vm430, %v463, %v464
    %v466 = vrot.slane %v464, 4
    %v467 = vrot.slane %v72, 6
    %v468 = vsel %vm430, %v466, %v467
    %v469 = vrot.slane %v467, 4
    %v470 = vrot.slane %v58, 6
    %v471 = vsel %vm430, %v469, %v470
    %v472 = vrot.slane %v470, 4
    %v473 = vrot.slane %v98, 6
    %v474 = vsel %vm430, %v472, %v473
    %s475 = scalar_lea.vmem %s1, 384
    %v476 = vld [vmem:[%s475] sm:$0xff]
    %v477 = vld [vmem:[%s475 + $0x8] sm:$0xff]
    %v478 = vld [vmem:[%s475 + $0x10] sm:$0xff]
    %v479 = vld [vmem:[%s475 + $0x18] sm:$0xff]
    %v480 = vld [vmem:[%s475 + $0x20] sm:$0xff]
    %v481 = vld [vmem:[%s475 + $0x28] sm:$0xff]
    %v482 = vld [vmem:[%s475 + $0x30] sm:$0xff]
    %v483 = vld [vmem:[%s475 + $0x38] sm:$0xff]
    %v484 = vld [vmem:[%s475 + $0x40] sm:$0xff]
    %v485 = vld [vmem:[%s475 + $0x48] sm:$0xff]
    %v486 = vld [vmem:[%s475 + $0x50] sm:$0xff]
    %v487 = vld [vmem:[%s475 + $0x58] sm:$0xff]
    %v488 = vld [vmem:[%s475 + $0x60] sm:$0xff]
    %v489 = vld [vmem:[%s475 + $0x68] sm:$0xff]
    %v490 = vld [vmem:[%s475 + $0x70] sm:$0xff]
    %v491 = vld [vmem:[%s475 + $0x78] sm:$0xff]
    %v492 = vld [vmem:[%s475 + $0x80] sm:$0xff]
    %v493 = vld [vmem:[%s475 + $0x88] sm:$0xff]
    %v494 = vld [vmem:[%s475 + $0x90] sm:$0xff]
    %v495 = vld [vmem:[%s475 + $0x98] sm:$0xff]
    %v496 = vld [vmem:[%s475 + $0xa0] sm:$0xff]
    %v497 = vld [vmem:[%s475 + $0xa8] sm:$0xff]
    %v498 = vld [vmem:[%s475 + $0xb0] sm:$0xff]
    %v499 = vld [vmem:[%s475 + $0xb8] sm:$0xff]
    %v500 = vcombine.low %v434, %v437
    %v501 = vcombine.low %v440, %v443
    %v502 = vcombine.low %v446, %v449
    %v503 = vcombine.low %v452, %v456
    %v504 = vcombine.low %v459, %v462
    %v505 = vcombine.low %v465, %v468
    %v506 = vcombine.low %v471, %v474
    %v507 = vsel %vm178, %v500, 0
    %v509 = vsel %vm178, %v501, 0
    %v511 = vsel %vm178, %v502, 0
    %v513 = vsel %vm178, %v503, 0
    %v515 = vsel %vm178, %v504, 0
    %v517 = vsel %vm178, %v505, 0
    %v519 = vsel %vm178, %v506, 0
    %521 = vmatprep.subr.mxu0 0.0
    %522 = vmatpush1.msra.mxu0 0.0
    %523 = vmatprep.subr.mxu0 0.0
    %524 = vmatpush1.msra.mxu0 0.0
    %525 = vmatprep.subr.mxu0 0.0
    %526 = vmatpush1.msra.mxu0 0.0
    %527 = vmatprep.subr.mxu0 0.0
    %528 = vmatpush1.msra.mxu0 0.0
    %529 = vmatprep.subr.mxu0 %v499
    %530 = vmatpush1.msra.mxu0 %v498
    %531 = vmatprep.subr.mxu0 %v497
    %532 = vmatpush1.msra.mxu0 %v496
    %533 = vmatprep.subr.mxu0 %v495
    %534 = vmatpush1.msra.mxu0 %v494
    %535 = vmatprep.subr.mxu0 %v493
    %536 = vmatpush1.msra.mxu0 %v492
    %537 = vmatprep.subr.mxu0 %v491
    %538 = vmatpush1.msra.mxu0 %v490
    %539 = vmatprep.subr.mxu0 %v489
    %540 = vmatpush1.msra.mxu0 %v488
    %541 = vmatprep.subr.mxu0 %v487
    %542 = vmatpush1.msra.mxu0 %v486
    %543 = vmatprep.subr.mxu0 %v485
    %544 = vmatpush1.msra.mxu0 %v484
    %545 = vmatprep.subr.mxu0 %v483
    %546 = vmatpush1.msra.mxu0 %v482
    %547 = vmatprep.subr.mxu0 %v481
    %548 = vmatpush1.msra.mxu0 %v480
    %549 = vmatprep.subr.mxu0 %v479
    %550 = vmatpush1.msra.mxu0 %v478
    %551 = vmatprep.subr.mxu0 %v477
    %552 = vmatpush1.msra.mxu0 %v476
    %553 = vmatprep.subr.mxu0 0.0
    %554 = vmatpush2.msra.mxu0 0.0
    %555 = vmatprep.subr.mxu0 0.0
    %556 = vmatpush2.msra.mxu0 0.0
    %557 = vmatprep.subr.mxu0 0.0
    %558 = vmatpush2.msra.mxu0 0.0
    %559 = vmatprep.subr.mxu0 0.0
    %560 = vmatpush2.msra.mxu0 0.0
    %561 = vmatprep.subr.mxu0 0.0
    %562 = vmatpush2.msra.mxu0 0.0
    %563 = vmatprep.subr.mxu0 0.0
    %564 = vmatpush2.msra.mxu0 0.0
    %565 = vmatprep.subr.mxu0 0.0
    %566 = vmatpush2.msra.mxu0 0.0
    %567 = vmatprep.subr.mxu0 0.0
    %568 = vmatpush2.msra.mxu0 0.0
    %569 = vmatprep.subr.mxu0 0.0
    %570 = vmatpush2.msra.mxu0 0.0
    %571 = vmatprep.subr.mxu0 0.0
    %572 = vmatpush2.msra.mxu0 0.0
    %573 = vmatprep.subr.mxu0 0.0
    %574 = vmatpush2.msra.mxu0 0.0
    %575 = vmatprep.subr.mxu0 0.0
    %576 = vmatpush2.msra.mxu0 0.0
    %577 = vmatprep.subr.mxu0 0.0
    %578 = vmatpush2.msra.mxu0 0.0
    %579 = vmatprep.subr.mxu0 0.0
    %580 = vmatpush2.msra.mxu0 0.0
    %581 = vmatprep.subr.mxu0 0.0
    %582 = vmatpush2.msra.mxu0 0.0
    %583 = vmatprep.subr.mxu0 0.0
    %584 = vmatpush2.msra.mxu0 0.0
    %585 = vmatprep.mubr.f32.mxu0 0.0
    %586 = vmatmul.mubr.f32.gmra.mxu0 %v507
    %v587 = vpop.f32.mrf.mxu0
    %v588 = vadd.f32 0.0, %v587
    %v589 = vpop.f32.mrf.mxu0
    %v590 = vadd.f32 0.0, %v589
    %591 = vmatprep.mubr.f32.mxu0 0.0
    %592 = vmatmul.mubr.f32.gmra.mxu0 %v509
    %v593 = vpop.f32.mrf.mxu0
    %v594 = vadd.f32 0.0, %v593
    %v595 = vpop.f32.mrf.mxu0
    %v596 = vadd.f32 0.0, %v595
    %597 = vmatprep.mubr.f32.mxu0 0.0
    %598 = vmatmul.mubr.f32.gmra.mxu0 %v511
    %v599 = vpop.f32.mrf.mxu0
    %v600 = vadd.f32 0.0, %v599
    %v601 = vpop.f32.mrf.mxu0
    %v602 = vadd.f32 0.0, %v601
    %603 = vmatprep.mubr.f32.mxu0 0.0
    %604 = vmatmul.mubr.f32.gmra.mxu0 %v513
    %v605 = vpop.f32.mrf.mxu0
    %v606 = vadd.f32 0.0, %v605
    %v607 = vpop.f32.mrf.mxu0
    %v608 = vadd.f32 0.0, %v607
    %609 = vmatprep.mubr.f32.mxu0 0.0
    %610 = vmatmul.mubr.f32.gmra.mxu0 %v515
    %v611 = vpop.f32.mrf.mxu0
    %v612 = vadd.f32 0.0, %v611
    %v613 = vpop.f32.mrf.mxu0
    %v614 = vadd.f32 0.0, %v613
    %615 = vmatprep.mubr.f32.mxu0 0.0
    %616 = vmatmul.mubr.f32.gmra.mxu0 %v517
    %v617 = vpop.f32.mrf.mxu0
    %v618 = vadd.f32 0.0, %v617
    %v619 = vpop.f32.mrf.mxu0
    %v620 = vadd.f32 0.0, %v619
    %621 = vmatprep.mubr.f32.mxu0 0.0
    %622 = vmatmul.mubr.f32.gmra.mxu0 %v519
    %v623 = vpop.f32.mrf.mxu0
    %v624 = vadd.f32 0.0, %v623
    %v625 = vpop.f32.mrf.mxu0
    %v626 = vadd.f32 0.0, %v625
    %627 = vdwg.mxu0
    %v628 = vadd.f32 %v388, %v588
    %v629 = vadd.f32 %v390, %v590
    %v630 = vadd.f32 %v394, %v594
    %v631 = vadd.f32 %v396, %v596
    %v632 = vadd.f32 %v400, %v600
    %v633 = vadd.f32 %v402, %v602
    %v634 = vadd.f32 %v406, %v606
    %v635 = vadd.f32 %v408, %v608
    %v636 = vadd.f32 %v412, %v612
    %v637 = vadd.f32 %v414, %v614
    %v638 = vadd.f32 %v418, %v618
    %v639 = vadd.f32 %v420, %v620
    %v640 = vadd.f32 %v424, %v624
    %v641 = vadd.f32 %v426, %v626
    %vm642 = vcmask 1040384
    %vm643 = vcmask 1044484
    %vm644 = vmor %vm642, %vm643
    %v645 = vrot.slane %v51, 7
    %v646 = vrot.slane %v645, 4
    %v647 = vrot.slane %v67, 7
    %v648 = vsel %vm644, %v646, %v647
    %v649 = vrot.slane %v647, 4
    %v650 = vrot.slane %v52, 7
    %v651 = vsel %vm644, %v649, %v650
    %v652 = vrot.slane %v650, 4
    %v653 = vrot.slane %v68, 7
    %v654 = vsel %vm644, %v652, %v653
    %v655 = vrot.slane %v653, 4
    %v656 = vrot.slane %v53, 7
    %v657 = vsel %vm644, %v655, %v656
    %v658 = vrot.slane %v656, 4
    %v659 = vrot.slane %v69, 7
    %v660 = vsel %vm644, %v658, %v659
    %v661 = vrot.slane %v659, 4
    %v662 = vrot.slane %v54, 7
    %v663 = vsel %vm644, %v661, %v662
    %v664 = vrot.slane %v662, 4
    %v665 = vrot.slane %v97, 7
    %v666 = vsel %vm644, %v664, %v665
    %v667 = vrot.slane %v55, 7
    %v668 = vrot.slane %v667, 4
    %v669 = vrot.slane %v70, 7
    %v670 = vsel %vm644, %v668, %v669
    %v671 = vrot.slane %v669, 4
    %v672 = vrot.slane %v56, 7
    %v673 = vsel %vm644, %v671, %v672
    %v674 = vrot.slane %v672, 4
    %v675 = vrot.slane %v71, 7
    %v676 = vsel %vm644, %v674, %v675
    %v677 = vrot.slane %v675, 4
    %v678 = vrot.slane %v57, 7
    %v679 = vsel %vm644, %v677, %v678
    %v680 = vrot.slane %v678, 4
    %v681 = vrot.slane %v72, 7
    %v682 = vsel %vm644, %v680, %v681
    %v683 = vrot.slane %v681, 4
    %v684 = vrot.slane %v58, 7
    %v685 = vsel %vm644, %v683, %v684
    %v686 = vrot.slane %v684, 4
    %v687 = vrot.slane %v98, 7
    %v688 = vsel %vm644, %v686, %v687
    %s689 = scalar_lea.vmem %s1, 576
    %v690 = vld [vmem:[%s689] sm:$0xff]
    %v691 = vld [vmem:[%s689 + $0x8] sm:$0xff]
    %v692 = vld [vmem:[%s689 + $0x10] sm:$0xff]
    %v693 = vld [vmem:[%s689 + $0x18] sm:$0xff]
    %v694 = vld [vmem:[%s689 + $0x20] sm:$0xff]
    %v695 = vld [vmem:[%s689 + $0x28] sm:$0xff]
    %v696 = vld [vmem:[%s689 + $0x30] sm:$0xff]
    %v697 = vld [vmem:[%s689 + $0x38] sm:$0xff]
    %v698 = vld [vmem:[%s689 + $0x40] sm:$0xff]
    %v699 = vld [vmem:[%s689 + $0x48] sm:$0xff]
    %v700 = vld [vmem:[%s689 + $0x50] sm:$0xff]
    %v701 = vld [vmem:[%s689 + $0x58] sm:$0xff]
    %v702 = vld [vmem:[%s689 + $0x60] sm:$0xff]
    %v703 = vld [vmem:[%s689 + $0x68] sm:$0xff]
    %v704 = vld [vmem:[%s689 + $0x70] sm:$0xff]
    %v705 = vld [vmem:[%s689 + $0x78] sm:$0xff]
    %v706 = vld [vmem:[%s689 + $0x80] sm:$0xff]
    %v707 = vld [vmem:[%s689 + $0x88] sm:$0xff]
    %v708 = vld [vmem:[%s689 + $0x90] sm:$0xff]
    %v709 = vld [vmem:[%s689 + $0x98] sm:$0xff]
    %v710 = vld [vmem:[%s689 + $0xa0] sm:$0xff]
    %v711 = vld [vmem:[%s689 + $0xa8] sm:$0xff]
    %v712 = vld [vmem:[%s689 + $0xb0] sm:$0xff]
    %v713 = vld [vmem:[%s689 + $0xb8] sm:$0xff]
    %v714 = vcombine.low %v648, %v651
    %v715 = vcombine.low %v654, %v657
    %v716 = vcombine.low %v660, %v663
    %v717 = vcombine.low %v666, %v670
    %v718 = vcombine.low %v673, %v676
    %v719 = vcombine.low %v679, %v682
    %v720 = vcombine.low %v685, %v688
    %v721 = vsel %vm178, %v714, 0
    %v723 = vsel %vm178, %v715, 0
    %v725 = vsel %vm178, %v716, 0
    %v727 = vsel %vm178, %v717, 0
    %v729 = vsel %vm178, %v718, 0
    %v731 = vsel %vm178, %v719, 0
    %v733 = vsel %vm178, %v720, 0
    %735 = vmatprep.subr.mxu0 0.0
    %736 = vmatpush1.msra.mxu0 0.0
    %737 = vmatprep.subr.mxu0 0.0
    %738 = vmatpush1.msra.mxu0 0.0
    %739 = vmatprep.subr.mxu0 0.0
    %740 = vmatpush1.msra.mxu0 0.0
    %741 = vmatprep.subr.mxu0 0.0
    %742 = vmatpush1.msra.mxu0 0.0
    %743 = vmatprep.subr.mxu0 %v713
    %744 = vmatpush1.msra.mxu0 %v712
    %745 = vmatprep.subr.mxu0 %v711
    %746 = vmatpush1.msra.mxu0 %v710
    %747 = vmatprep.subr.mxu0 %v709
    %748 = vmatpush1.msra.mxu0 %v708
    %749 = vmatprep.subr.mxu0 %v707
    %750 = vmatpush1.msra.mxu0 %v706
    %751 = vmatprep.subr.mxu0 %v705
    %752 = vmatpush1.msra.mxu0 %v704
    %753 = vmatprep.subr.mxu0 %v703
    %754 = vmatpush1.msra.mxu0 %v702
    %755 = vmatprep.subr.mxu0 %v701
    %756 = vmatpush1.msra.mxu0 %v700
    %757 = vmatprep.subr.mxu0 %v699
    %758 = vmatpush1.msra.mxu0 %v698
    %759 = vmatprep.subr.mxu0 %v697
    %760 = vmatpush1.msra.mxu0 %v696
    %761 = vmatprep.subr.mxu0 %v695
    %762 = vmatpush1.msra.mxu0 %v694
    %763 = vmatprep.subr.mxu0 %v693
    %764 = vmatpush1.msra.mxu0 %v692
    %765 = vmatprep.subr.mxu0 %v691
    %766 = vmatpush1.msra.mxu0 %v690
    %767 = vmatprep.subr.mxu0 0.0
    %768 = vmatpush2.msra.mxu0 0.0
    %769 = vmatprep.subr.mxu0 0.0
    %770 = vmatpush2.msra.mxu0 0.0
    %771 = vmatprep.subr.mxu0 0.0
    %772 = vmatpush2.msra.mxu0 0.0
    %773 = vmatprep.subr.mxu0 0.0
    %774 = vmatpush2.msra.mxu0 0.0
    %775 = vmatprep.subr.mxu0 0.0
    %776 = vmatpush2.msra.mxu0 0.0
    %777 = vmatprep.subr.mxu0 0.0
    %778 = vmatpush2.msra.mxu0 0.0
    %779 = vmatprep.subr.mxu0 0.0
    %780 = vmatpush2.msra.mxu0 0.0
    %781 = vmatprep.subr.mxu0 0.0
    %782 = vmatpush2.msra.mxu0 0.0
    %783 = vmatprep.subr.mxu0 0.0
    %784 = vmatpush2.msra.mxu0 0.0
    %785 = vmatprep.subr.mxu0 0.0
    %786 = vmatpush2.msra.mxu0 0.0
    %787 = vmatprep.subr.mxu0 0.0
    %788 = vmatpush2.msra.mxu0 0.0
    %789 = vmatprep.subr.mxu0 0.0
    %790 = vmatpush2.msra.mxu0 0.0
    %791 = vmatprep.subr.mxu0 0.0
    %792 = vmatpush2.msra.mxu0 0.0
    %793 = vmatprep.subr.mxu0 0.0
    %794 = vmatpush2.msra.mxu0 0.0
    %795 = vmatprep.subr.mxu0 0.0
    %796 = vmatpush2.msra.mxu0 0.0
    %797 = vmatprep.subr.mxu0 0.0
    %798 = vmatpush2.msra.mxu0 0.0
    %799 = vmatprep.mubr.f32.mxu0 0.0
    %800 = vmatmul.mubr.f32.gmra.mxu0 %v721
    %v801 = vpop.f32.mrf.mxu0
    %v802 = vadd.f32 0.0, %v801
    %v803 = vpop.f32.mrf.mxu0
    %v804 = vadd.f32 0.0, %v803
    %805 = vmatprep.mubr.f32.mxu0 0.0
    %806 = vmatmul.mubr.f32.gmra.mxu0 %v723
    %v807 = vpop.f32.mrf.mxu0
    %v808 = vadd.f32 0.0, %v807
    %v809 = vpop.f32.mrf.mxu0
    %v810 = vadd.f32 0.0, %v809
    %811 = vmatprep.mubr.f32.mxu0 0.0
    %812 = vmatmul.mubr.f32.gmra.mxu0 %v725
    %v813 = vpop.f32.mrf.mxu0
    %v814 = vadd.f32 0.0, %v813
    %v815 = vpop.f32.mrf.mxu0
    %v816 = vadd.f32 0.0, %v815
    %817 = vmatprep.mubr.f32.mxu0 0.0
    %818 = vmatmul.mubr.f32.gmra.mxu0 %v727
    %v819 = vpop.f32.mrf.mxu0
    %v820 = vadd.f32 0.0, %v819
    %v821 = vpop.f32.mrf.mxu0
    %v822 = vadd.f32 0.0, %v821
    %823 = vmatprep.mubr.f32.mxu0 0.0
    %824 = vmatmul.mubr.f32.gmra.mxu0 %v729
    %v825 = vpop.f32.mrf.mxu0
    %v826 = vadd.f32 0.0, %v825
    %v827 = vpop.f32.mrf.mxu0
    %v828 = vadd.f32 0.0, %v827
    %829 = vmatprep.mubr.f32.mxu0 0.0
    %830 = vmatmul.mubr.f32.gmra.mxu0 %v731
    %v831 = vpop.f32.mrf.mxu0
    %v832 = vadd.f32 0.0, %v831
    %v833 = vpop.f32.mrf.mxu0
    %v834 = vadd.f32 0.0, %v833
    %835 = vmatprep.mubr.f32.mxu0 0.0
    %836 = vmatmul.mubr.f32.gmra.mxu0 %v733
    %v837 = vpop.f32.mrf.mxu0
    %v838 = vadd.f32 0.0, %v837
    %v839 = vpop.f32.mrf.mxu0
    %v840 = vadd.f32 0.0, %v839
    %841 = vdwg.mxu0
    %v842 = vadd.f32 %v628, %v802
    %v843 = vadd.f32 %v629, %v804
    %v844 = vadd.f32 %v630, %v808
    %v845 = vadd.f32 %v631, %v810
    %v846 = vadd.f32 %v632, %v814
    %v847 = vadd.f32 %v633, %v816
    %v848 = vadd.f32 %v634, %v820
    %v849 = vadd.f32 %v635, %v822
    %v850 = vadd.f32 %v636, %v826
    %v851 = vadd.f32 %v637, %v828
    %v852 = vadd.f32 %v638, %v832
    %v853 = vadd.f32 %v639, %v834
    %v854 = vadd.f32 %v640, %v838
    %v855 = vadd.f32 %v641, %v840
    %s856 = scalar_lea.vmem %s1, 768
    %v857 = vld [vmem:[%s856] sm:$0xff]
    %v858 = vld [vmem:[%s856 + $0x8] sm:$0xff]
    %v859 = vld [vmem:[%s856 + $0x10] sm:$0xff]
    %v860 = vld [vmem:[%s856 + $0x18] sm:$0xff]
    %v861 = vld [vmem:[%s856 + $0x20] sm:$0xff]
    %v862 = vld [vmem:[%s856 + $0x28] sm:$0xff]
    %v863 = vld [vmem:[%s856 + $0x30] sm:$0xff]
    %v864 = vld [vmem:[%s856 + $0x38] sm:$0xff]
    %v865 = vld [vmem:[%s856 + $0x40] sm:$0xff]
    %v866 = vld [vmem:[%s856 + $0x48] sm:$0xff]
    %v867 = vld [vmem:[%s856 + $0x50] sm:$0xff]
    %v868 = vld [vmem:[%s856 + $0x58] sm:$0xff]
    %v869 = vld [vmem:[%s856 + $0x60] sm:$0xff]
    %v870 = vld [vmem:[%s856 + $0x68] sm:$0xff]
    %v871 = vld [vmem:[%s856 + $0x70] sm:$0xff]
    %v872 = vld [vmem:[%s856 + $0x78] sm:$0xff]
    %v873 = vld [vmem:[%s856 + $0x80] sm:$0xff]
    %v874 = vld [vmem:[%s856 + $0x88] sm:$0xff]
    %v875 = vld [vmem:[%s856 + $0x90] sm:$0xff]
    %v876 = vld [vmem:[%s856 + $0x98] sm:$0xff]
    %v877 = vld [vmem:[%s856 + $0xa0] sm:$0xff]
    %v878 = vld [vmem:[%s856 + $0xa8] sm:$0xff]
    %v879 = vld [vmem:[%s856 + $0xb0] sm:$0xff]
    %v880 = vld [vmem:[%s856 + $0xb8] sm:$0xff]
    %v881 = vcombine.low %v67, %v52
    %v882 = vcombine.low %v68, %v53
    %v883 = vcombine.low %v69, %v54
    %v884 = vcombine.low %v97, %v70
    %v885 = vcombine.low %v56, %v71
    %v886 = vcombine.low %v57, %v72
    %v887 = vcombine.low %v58, %v98
    %v888 = vsel %vm178, %v881, 0
    %v890 = vsel %vm178, %v882, 0
    %v892 = vsel %vm178, %v883, 0
    %v894 = vsel %vm178, %v884, 0
    %v896 = vsel %vm178, %v885, 0
    %v898 = vsel %vm178, %v886, 0
    %v900 = vsel %vm178, %v887, 0
    %902 = vmatprep.subr.mxu0 0.0
    %903 = vmatpush1.msra.mxu0 0.0
    %904 = vmatprep.subr.mxu0 0.0
    %905 = vmatpush1.msra.mxu0 0.0
    %906 = vmatprep.subr.mxu0 0.0
    %907 = vmatpush1.msra.mxu0 0.0
    %908 = vmatprep.subr.mxu0 0.0
    %909 = vmatpush1.msra.mxu0 0.0
    %910 = vmatprep.subr.mxu0 %v880
    %911 = vmatpush1.msra.mxu0 %v879
    %912 = vmatprep.subr.mxu0 %v878
    %913 = vmatpush1.msra.mxu0 %v877
    %914 = vmatprep.subr.mxu0 %v876
    %915 = vmatpush1.msra.mxu0 %v875
    %916 = vmatprep.subr.mxu0 %v874
    %917 = vmatpush1.msra.mxu0 %v873
    %918 = vmatprep.subr.mxu0 %v872
    %919 = vmatpush1.msra.mxu0 %v871
    %920 = vmatprep.subr.mxu0 %v870
    %921 = vmatpush1.msra.mxu0 %v869
    %922 = vmatprep.subr.mxu0 %v868
    %923 = vmatpush1.msra.mxu0 %v867
    %924 = vmatprep.subr.mxu0 %v866
    %925 = vmatpush1.msra.mxu0 %v865
    %926 = vmatprep.subr.mxu0 %v864
    %927 = vmatpush1.msra.mxu0 %v863
    %928 = vmatprep.subr.mxu0 %v862
    %929 = vmatpush1.msra.mxu0 %v861
    %930 = vmatprep.subr.mxu0 %v860
    %931 = vmatpush1.msra.mxu0 %v859
    %932 = vmatprep.subr.mxu0 %v858
    %933 = vmatpush1.msra.mxu0 %v857
    %934 = vmatprep.subr.mxu0 0.0
    %935 = vmatpush2.msra.mxu0 0.0
    %936 = vmatprep.subr.mxu0 0.0
    %937 = vmatpush2.msra.mxu0 0.0
    %938 = vmatprep.subr.mxu0 0.0
    %939 = vmatpush2.msra.mxu0 0.0
    %940 = vmatprep.subr.mxu0 0.0
    %941 = vmatpush2.msra.mxu0 0.0
    %942 = vmatprep.subr.mxu0 0.0
    %943 = vmatpush2.msra.mxu0 0.0
    %944 = vmatprep.subr.mxu0 0.0
    %945 = vmatpush2.msra.mxu0 0.0
    %946 = vmatprep.subr.mxu0 0.0
    %947 = vmatpush2.msra.mxu0 0.0
    %948 = vmatprep.subr.mxu0 0.0
    %949 = vmatpush2.msra.mxu0 0.0
    %950 = vmatprep.subr.mxu0 0.0
    %951 = vmatpush2.msra.mxu0 0.0
    %952 = vmatprep.subr.mxu0 0.0
    %953 = vmatpush2.msra.mxu0 0.0
    %954 = vmatprep.subr.mxu0 0.0
    %955 = vmatpush2.msra.mxu0 0.0
    %956 = vmatprep.subr.mxu0 0.0
    %957 = vmatpush2.msra.mxu0 0.0
    %958 = vmatprep.subr.mxu0 0.0
    %959 = vmatpush2.msra.mxu0 0.0
    %960 = vmatprep.subr.mxu0 0.0
    %961 = vmatpush2.msra.mxu0 0.0
    %962 = vmatprep.subr.mxu0 0.0
    %963 = vmatpush2.msra.mxu0 0.0
    %964 = vmatprep.subr.mxu0 0.0
    %965 = vmatpush2.msra.mxu0 0.0
    %966 = vmatprep.mubr.f32.mxu0 0.0
    %967 = vmatmul.mubr.f32.gmra.mxu0 %v888
    %v968 = vpop.f32.mrf.mxu0
    %v969 = vadd.f32 0.0, %v968
    %v970 = vpop.f32.mrf.mxu0
    %v971 = vadd.f32 0.0, %v970
    %972 = vmatprep.mubr.f32.mxu0 0.0
    %973 = vmatmul.mubr.f32.gmra.mxu0 %v890
    %v974 = vpop.f32.mrf.mxu0
    %v975 = vadd.f32 0.0, %v974
    %v976 = vpop.f32.mrf.mxu0
    %v977 = vadd.f32 0.0, %v976
    %978 = vmatprep.mubr.f32.mxu0 0.0
    %979 = vmatmul.mubr.f32.gmra.mxu0 %v892
    %v980 = vpop.f32.mrf.mxu0
    %v981 = vadd.f32 0.0, %v980
    %v982 = vpop.f32.mrf.mxu0
    %v983 = vadd.f32 0.0, %v982
    %984 = vmatprep.mubr.f32.mxu0 0.0
    %985 = vmatmul.mubr.f32.gmra.mxu0 %v894
    %v986 = vpop.f32.mrf.mxu0
    %v987 = vadd.f32 0.0, %v986
    %v988 = vpop.f32.mrf.mxu0
    %v989 = vadd.f32 0.0, %v988
    %990 = vmatprep.mubr.f32.mxu0 0.0
    %991 = vmatmul.mubr.f32.gmra.mxu0 %v896
    %v992 = vpop.f32.mrf.mxu0
    %v993 = vadd.f32 0.0, %v992
    %v994 = vpop.f32.mrf.mxu0
    %v995 = vadd.f32 0.0, %v994
    %996 = vmatprep.mubr.f32.mxu0 0.0
    %997 = vmatmul.mubr.f32.gmra.mxu0 %v898
    %v998 = vpop.f32.mrf.mxu0
    %v999 = vadd.f32 0.0, %v998
    %v1000 = vpop.f32.mrf.mxu0
    %v1001 = vadd.f32 0.0, %v1000
    %1002 = vmatprep.mubr.f32.mxu0 0.0
    %1003 = vmatmul.mubr.f32.gmra.mxu0 %v900
    %v1004 = vpop.f32.mrf.mxu0
    %v1005 = vadd.f32 0.0, %v1004
    %v1006 = vpop.f32.mrf.mxu0
    %v1007 = vadd.f32 0.0, %v1006
    %1008 = vdwg.mxu0
    %v1009 = vadd.f32 %v842, %v969
    %v1010 = vadd.f32 %v843, %v971
    %v1011 = vadd.f32 %v844, %v975
    %v1012 = vadd.f32 %v845, %v977
    %v1013 = vadd.f32 %v846, %v981
    %v1014 = vadd.f32 %v847, %v983
    %v1015 = vadd.f32 %v848, %v987
    %v1016 = vadd.f32 %v849, %v989
    %v1017 = vadd.f32 %v850, %v993
    %v1018 = vadd.f32 %v851, %v995
    %v1019 = vadd.f32 %v852, %v999
    %v1020 = vadd.f32 %v853, %v1001
    %v1021 = vadd.f32 %v854, %v1005
    %v1022 = vadd.f32 %v855, %v1007
    %v1023 = vld [vmem:[%s2] sm:$0x3]
    %v1025 = vlaneseq
    %v1026 = vshrl.u32 %v1025, 7
    %v1027 = vsub.s32 0, %v1026
    %v1028 = vrot.slane %v1023, %v1027
    %v1029 = vlaneseq
    %v1030 = vshrl.u32 %v1029, 7
    %v1031 = vsub.s32 1, %v1030
    %v1032 = vrot.slane %v1023, %v1031
    %v1035 = vadd.f32 %v1009, %v1028
    %v1036 = vadd.f32 %v1010, %v1032
    %v1037 = vadd.f32 %v1011, %v1028
    %v1038 = vadd.f32 %v1012, %v1032
    %v1039 = vadd.f32 %v1013, %v1028
    %v1040 = vadd.f32 %v1014, %v1032
    %v1041 = vadd.f32 %v1015, %v1028
    %v1042 = vadd.f32 %v1016, %v1032
    %v1043 = vadd.f32 %v1017, %v1028
    %v1044 = vadd.f32 %v1018, %v1032
    %v1045 = vadd.f32 %v1019, %v1028
    %v1046 = vadd.f32 %v1020, %v1032
    %v1047 = vadd.f32 %v1021, %v1028
    %v1048 = vadd.f32 %v1022, %v1032
    %v1049 = vmax.f32 %v1035, 0.0
    %v1050 = vmax.f32 %v1036, 0.0
    %v1051 = vmax.f32 %v1037, 0.0
    %v1052 = vmax.f32 %v1038, 0.0
    %v1053 = vmax.f32 %v1039, 0.0
    %v1054 = vmax.f32 %v1040, 0.0
    %v1055 = vmax.f32 %v1041, 0.0
    %v1056 = vmax.f32 %v1042, 0.0
    %v1057 = vmax.f32 %v1043, 0.0
    %v1058 = vmax.f32 %v1044, 0.0
    %v1059 = vmax.f32 %v1045, 0.0
    %v1060 = vmax.f32 %v1046, 0.0
    %v1061 = vmax.f32 %v1047, 0.0
    %v1062 = vmax.f32 %v1048, 0.0
    %v1077 = vcombine.low %v1049, %v1050
    %v1078 = vcombine.high %v1049, %v1050
    %v1080 = vunpack.c.l.s4 1983009808
    %v1081 = vunpack.c.0.s8 %v1080
    %v1082 = vlaneseq
    %v1083 = vshrl.u32 %v1082, 7
    %v1084 = vsub.s32 %v1081, %v1083
    %v1085 = vrot.slane %v1077, %v1084
    %v1087 = vunpack.c.l.s4 1983009808
    %v1088 = vunpack.c.0.s8 %v1087
    %v1089 = vlaneseq
    %v1090 = vshrl.u32 %v1089, 7
    %v1091 = vsub.s32 %v1088, %v1090
    %v1092 = vrot.slane %v1078, %v1091
    %v1093 = vcombine.high %v1085, %v1085
    %v1094 = vcombine.high %v1092, %v1092
    %v1095 = vcombine.low %v1051, %v1052
    %v1096 = vcombine.high %v1051, %v1052
    %v1098 = vunpack.c.l.s4 1983009808
    %v1099 = vunpack.c.0.s8 %v1098
    %v1100 = vlaneseq
    %v1101 = vshrl.u32 %v1100, 7
    %v1102 = vsub.s32 %v1099, %v1101
    %v1103 = vrot.slane %v1095, %v1102
    %v1105 = vunpack.c.l.s4 1983009808
    %v1106 = vunpack.c.0.s8 %v1105
    %v1107 = vlaneseq
    %v1108 = vshrl.u32 %v1107, 7
    %v1109 = vsub.s32 %v1106, %v1108
    %v1110 = vrot.slane %v1096, %v1109
    %v1111 = vcombine.high %v1103, %v1103
    %v1112 = vcombine.high %v1110, %v1110
    %v1113 = vcombine.low %v1053, %v1054
    %v1114 = vcombine.high %v1053, %v1054
    %v1116 = vunpack.c.l.s4 1983009808
    %v1117 = vunpack.c.0.s8 %v1116
    %v1118 = vlaneseq
    %v1119 = vshrl.u32 %v1118, 7
    %v1120 = vsub.s32 %v1117, %v1119
    %v1121 = vrot.slane %v1113, %v1120
    %v1123 = vunpack.c.l.s4 1983009808
    %v1124 = vunpack.c.0.s8 %v1123
    %v1125 = vlaneseq
    %v1126 = vshrl.u32 %v1125, 7
    %v1127 = vsub.s32 %v1124, %v1126
    %v1128 = vrot.slane %v1114, %v1127
    %v1129 = vcombine.high %v1121, %v1121
    %v1130 = vcombine.high %v1128, %v1128
    %v1131 = vcombine.low %v1055, %v1056
    %v1132 = vcombine.high %v1055, %v1056
    %v1134 = vunpack.c.l.s4 1983009808
    %v1135 = vunpack.c.0.s8 %v1134
    %v1136 = vlaneseq
    %v1137 = vshrl.u32 %v1136, 7
    %v1138 = vsub.s32 %v1135, %v1137
    %v1139 = vrot.slane %v1131, %v1138
    %v1141 = vunpack.c.l.s4 1983009808
    %v1142 = vunpack.c.0.s8 %v1141
    %v1143 = vlaneseq
    %v1144 = vshrl.u32 %v1143, 7
    %v1145 = vsub.s32 %v1142, %v1144
    %v1146 = vrot.slane %v1132, %v1145
    %v1147 = vcombine.high %v1139, %v1139
    %v1148 = vcombine.high %v1146, %v1146
    %v1149 = vcombine.low %v1057, %v1058
    %v1150 = vcombine.high %v1057, %v1058
    %v1152 = vunpack.c.l.s4 1983009808
    %v1153 = vunpack.c.0.s8 %v1152
    %v1154 = vlaneseq
    %v1155 = vshrl.u32 %v1154, 7
    %v1156 = vsub.s32 %v1153, %v1155
    %v1157 = vrot.slane %v1149, %v1156
    %v1159 = vunpack.c.l.s4 1983009808
    %v1160 = vunpack.c.0.s8 %v1159
    %v1161 = vlaneseq
    %v1162 = vshrl.u32 %v1161, 7
    %v1163 = vsub.s32 %v1160, %v1162
    %v1164 = vrot.slane %v1150, %v1163
    %v1165 = vcombine.high %v1157, %v1157
    %v1166 = vcombine.high %v1164, %v1164
    %v1167 = vcombine.low %v1059, %v1060
    %v1168 = vcombine.high %v1059, %v1060
    %v1170 = vunpack.c.l.s4 1983009808
    %v1171 = vunpack.c.0.s8 %v1170
    %v1172 = vlaneseq
    %v1173 = vshrl.u32 %v1172, 7
    %v1174 = vsub.s32 %v1171, %v1173
    %v1175 = vrot.slane %v1167, %v1174
    %v1177 = vunpack.c.l.s4 1983009808
    %v1178 = vunpack.c.0.s8 %v1177
    %v1179 = vlaneseq
    %v1180 = vshrl.u32 %v1179, 7
    %v1181 = vsub.s32 %v1178, %v1180
    %v1182 = vrot.slane %v1168, %v1181
    %v1183 = vcombine.high %v1175, %v1175
    %v1184 = vcombine.high %v1182, %v1182
    %v1185 = vcombine.low %v1061, %v1062
    %v1186 = vcombine.high %v1061, %v1062
    %v1188 = vunpack.c.l.s4 1983009808
    %v1189 = vunpack.c.0.s8 %v1188
    %v1190 = vlaneseq
    %v1191 = vshrl.u32 %v1190, 7
    %v1192 = vsub.s32 %v1189, %v1191
    %v1193 = vrot.slane %v1185, %v1192
    %v1195 = vunpack.c.l.s4 1983009808
    %v1196 = vunpack.c.0.s8 %v1195
    %v1197 = vlaneseq
    %v1198 = vshrl.u32 %v1197, 7
    %v1199 = vsub.s32 %v1196, %v1198
    %v1200 = vrot.slane %v1186, %v1199
    %v1201 = vcombine.high %v1193, %v1193
    %v1202 = vcombine.high %v1200, %v1200
    %v1231 = vrot.slane %v1085, 7
    %v1232 = vrot.slane %v1231, 2
    %v1233 = vrot.slane %v1093, 7
    %v1234 = vrot.slane %v1233, 2
    %v1235 = vrot.slane %v1092, 7
    %v1236 = vrot.slane %v1235, 2
    %v1237 = vrot.slane %v1094, 7
    %v1238 = vrot.slane %v1237, 2
    %v1239 = vrot.slane %v1103, 7
    %v1240 = vrot.slane %v1239, 2
    %v1241 = vrot.slane %v1111, 7
    %v1242 = vrot.slane %v1241, 2
    %v1243 = vrot.slane %v1110, 7
    %v1244 = vrot.slane %v1243, 2
    %v1245 = vrot.slane %v1112, 7
    %v1246 = vrot.slane %v1245, 2
    %v1247 = vrot.slane %v1121, 7
    %v1248 = vrot.slane %v1247, 2
    %v1249 = vrot.slane %v1129, 7
    %v1250 = vrot.slane %v1249, 2
    %v1251 = vrot.slane %v1128, 7
    %v1252 = vrot.slane %v1251, 2
    %v1253 = vrot.slane %v1130, 7
    %v1254 = vrot.slane %v1253, 2
    %v1255 = vrot.slane %v1139, 7
    %v1256 = vrot.slane %v1255, 2
    %v1257 = vrot.slane %v1147, 7
    %v1258 = vrot.slane %v1257, 2
    %v1259 = vrot.slane %v1146, 7
    %v1260 = vrot.slane %v1259, 2
    %v1261 = vrot.slane %v1148, 7
    %v1262 = vrot.slane %v1261, 2
    %v1263 = vrot.slane %v1157, 7
    %v1264 = vrot.slane %v1263, 2
    %v1265 = vrot.slane %v1165, 7
    %v1266 = vrot.slane %v1265, 2
    %v1267 = vrot.slane %v1164, 7
    %v1268 = vrot.slane %v1267, 2
    %v1269 = vrot.slane %v1166, 7
    %v1270 = vrot.slane %v1269, 2
    %v1271 = vrot.slane %v1175, 7
    %v1272 = vrot.slane %v1271, 2
    %v1273 = vrot.slane %v1183, 7
    %v1274 = vrot.slane %v1273, 2
    %v1275 = vrot.slane %v1182, 7
    %v1276 = vrot.slane %v1275, 2
    %v1277 = vrot.slane %v1184, 7
    %v1278 = vrot.slane %v1277, 2
    %v1279 = vrot.slane %v1193, 7
    %v1280 = vrot.slane %v1279, 2
    %v1281 = vrot.slane %v1201, 7
    %v1282 = vrot.slane %v1281, 2
    %v1283 = vrot.slane %v1200, 7
    %v1284 = vrot.slane %v1283, 2
    %v1285 = vrot.slane %v1202, 7
    %v1286 = vrot.slane %v1285, 2
    %v1315 = vmax.f32 %v1085, %v1232
    %v1316 = vmax.f32 %v1093, %v1234
    %v1317 = vmax.f32 %v1092, %v1236
    %v1318 = vmax.f32 %v1094, %v1238
    %v1319 = vmax.f32 %v1103, %v1240
    %v1320 = vmax.f32 %v1111, %v1242
    %v1321 = vmax.f32 %v1110, %v1244
    %v1322 = vmax.f32 %v1112, %v1246
    %v1323 = vmax.f32 %v1121, %v1248
    %v1324 = vmax.f32 %v1129, %v1250
    %v1325 = vmax.f32 %v1128, %v1252
    %v1326 = vmax.f32 %v1130, %v1254
    %v1327 = vmax.f32 %v1139, %v1256
    %v1328 = vmax.f32 %v1147, %v1258
    %v1329 = vmax.f32 %v1146, %v1260
    %v1330 = vmax.f32 %v1148, %v1262
    %v1331 = vmax.f32 %v1157, %v1264
    %v1332 = vmax.f32 %v1165, %v1266
    %v1333 = vmax.f32 %v1164, %v1268
    %v1334 = vmax.f32 %v1166, %v1270
    %v1335 = vmax.f32 %v1175, %v1272
    %v1336 = vmax.f32 %v1183, %v1274
    %v1337 = vmax.f32 %v1182, %v1276
    %v1338 = vmax.f32 %v1184, %v1278
    %v1339 = vmax.f32 %v1193, %v1280
    %v1340 = vmax.f32 %v1201, %v1282
    %v1341 = vmax.f32 %v1200, %v1284
    %v1342 = vmax.f32 %v1202, %v1286
    %v1343 = vld [vmem:[%s3] sm:$0xff]
    %v1344 = vld [vmem:[%s3 + $0x8] sm:$0xff]
    %v1345 = vld [vmem:[%s3 + $0x10] sm:$0xff]
    %v1346 = vld [vmem:[%s3 + $0x18] sm:$0xff]
    %v1347 = vld [vmem:[%s3 + $0x20] sm:$0xff]
    %v1348 = vld [vmem:[%s3 + $0x28] sm:$0xff]
    %v1349 = vld [vmem:[%s3 + $0x30] sm:$0xff]
    %v1350 = vld [vmem:[%s3 + $0x38] sm:$0xff]
    %v1351 = vld [vmem:[%s3 + $0x40] sm:$0xff]
    %v1352 = vld [vmem:[%s3 + $0x48] sm:$0xff]
    %v1353 = vld [vmem:[%s3 + $0x50] sm:$0xff]
    %v1354 = vld [vmem:[%s3 + $0x58] sm:$0xff]
    %v1355 = vld [vmem:[%s3 + $0x60] sm:$0xff]
    %v1356 = vld [vmem:[%s3 + $0x68] sm:$0xff]
    %v1357 = vld [vmem:[%s3 + $0x70] sm:$0xff]
    %v1358 = vld [vmem:[%s3 + $0x78] sm:$0xff]
    %v1359 = vld [vmem:[%s3 + $0x80] sm:$0xff]
    %v1360 = vld [vmem:[%s3 + $0x88] sm:$0xff]
    %v1361 = vld [vmem:[%s3 + $0x90] sm:$0xff]
    %v1362 = vld [vmem:[%s3 + $0x98] sm:$0xff]
    %v1363 = vld [vmem:[%s3 + $0xa0] sm:$0xff]
    %v1392 = vlaneseq
    %v1393 = vshrl.u32 %v1392, 7
    %v1394 = vsub.s32 0, %v1393
    %v1395 = vrot.slane %v1315, %v1394
    %v1396 = vlaneseq
    %v1397 = vshrl.u32 %v1396, 7
    %v1398 = vsub.s32 2, %v1397
    %v1399 = vrot.slane %v1315, %v1398
    %v1400 = vlaneseq
    %v1401 = vshrl.u32 %v1400, 7
    %v1402 = vsub.s32 0, %v1401
    %v1403 = vrot.slane %v1316, %v1402
    %v1404 = vlaneseq
    %v1405 = vshrl.u32 %v1404, 7
    %v1406 = vsub.s32 2, %v1405
    %v1407 = vrot.slane %v1316, %v1406
    %v1408 = vlaneseq
    %v1409 = vshrl.u32 %v1408, 7
    %v1410 = vsub.s32 0, %v1409
    %v1411 = vrot.slane %v1317, %v1410
    %v1412 = vlaneseq
    %v1413 = vshrl.u32 %v1412, 7
    %v1414 = vsub.s32 2, %v1413
    %v1415 = vrot.slane %v1317, %v1414
    %v1416 = vlaneseq
    %v1417 = vshrl.u32 %v1416, 7
    %v1418 = vsub.s32 0, %v1417
    %v1419 = vrot.slane %v1318, %v1418
    %v1420 = vlaneseq
    %v1421 = vshrl.u32 %v1420, 7
    %v1422 = vsub.s32 2, %v1421
    %v1423 = vrot.slane %v1318, %v1422
    %v1424 = vlaneseq
    %v1425 = vshrl.u32 %v1424, 7
    %v1426 = vsub.s32 0, %v1425
    %v1427 = vrot.slane %v1319, %v1426
    %v1428 = vlaneseq
    %v1429 = vshrl.u32 %v1428, 7
    %v1430 = vsub.s32 2, %v1429
    %v1431 = vrot.slane %v1319, %v1430
    %v1432 = vlaneseq
    %v1433 = vshrl.u32 %v1432, 7
    %v1434 = vsub.s32 0, %v1433
    %v1435 = vrot.slane %v1320, %v1434
    %v1436 = vlaneseq
    %v1437 = vshrl.u32 %v1436, 7
    %v1438 = vsub.s32 2, %v1437
    %v1439 = vrot.slane %v1320, %v1438
    %v1440 = vlaneseq
    %v1441 = vshrl.u32 %v1440, 7
    %v1442 = vsub.s32 0, %v1441
    %v1443 = vrot.slane %v1321, %v1442
    %v1444 = vlaneseq
    %v1445 = vshrl.u32 %v1444, 7
    %v1446 = vsub.s32 2, %v1445
    %v1447 = vrot.slane %v1321, %v1446
    %v1448 = vlaneseq
    %v1449 = vshrl.u32 %v1448, 7
    %v1450 = vsub.s32 0, %v1449
    %v1451 = vrot.slane %v1322, %v1450
    %v1452 = vlaneseq
    %v1453 = vshrl.u32 %v1452, 7
    %v1454 = vsub.s32 2, %v1453
    %v1455 = vrot.slane %v1322, %v1454
    %v1456 = vlaneseq
    %v1457 = vshrl.u32 %v1456, 7
    %v1458 = vsub.s32 0, %v1457
    %v1459 = vrot.slane %v1323, %v1458
    %v1460 = vlaneseq
    %v1461 = vshrl.u32 %v1460, 7
    %v1462 = vsub.s32 2, %v1461
    %v1463 = vrot.slane %v1323, %v1462
    %v1464 = vlaneseq
    %v1465 = vshrl.u32 %v1464, 7
    %v1466 = vsub.s32 0, %v1465
    %v1467 = vrot.slane %v1324, %v1466
    %v1468 = vlaneseq
    %v1469 = vshrl.u32 %v1468, 7
    %v1470 = vsub.s32 2, %v1469
    %v1471 = vrot.slane %v1324, %v1470
    %v1472 = vlaneseq
    %v1473 = vshrl.u32 %v1472, 7
    %v1474 = vsub.s32 0, %v1473
    %v1475 = vrot.slane %v1325, %v1474
    %v1476 = vlaneseq
    %v1477 = vshrl.u32 %v1476, 7
    %v1478 = vsub.s32 2, %v1477
    %v1479 = vrot.slane %v1325, %v1478
    %v1480 = vlaneseq
    %v1481 = vshrl.u32 %v1480, 7
    %v1482 = vsub.s32 0, %v1481
    %v1483 = vrot.slane %v1326, %v1482
    %v1484 = vlaneseq
    %v1485 = vshrl.u32 %v1484, 7
    %v1486 = vsub.s32 2, %v1485
    %v1487 = vrot.slane %v1326, %v1486
    %v1488 = vlaneseq
    %v1489 = vshrl.u32 %v1488, 7
    %v1490 = vsub.s32 0, %v1489
    %v1491 = vrot.slane %v1327, %v1490
    %v1492 = vlaneseq
    %v1493 = vshrl.u32 %v1492, 7
    %v1494 = vsub.s32 2, %v1493
    %v1495 = vrot.slane %v1327, %v1494
    %v1496 = vlaneseq
    %v1497 = vshrl.u32 %v1496, 7
    %v1498 = vsub.s32 0, %v1497
    %v1499 = vrot.slane %v1328, %v1498
    %v1500 = vlaneseq
    %v1501 = vshrl.u32 %v1500, 7
    %v1502 = vsub.s32 2, %v1501
    %v1503 = vrot.slane %v1328, %v1502
    %v1504 = vlaneseq
    %v1505 = vshrl.u32 %v1504, 7
    %v1506 = vsub.s32 0, %v1505
    %v1507 = vrot.slane %v1329, %v1506
    %v1508 = vlaneseq
    %v1509 = vshrl.u32 %v1508, 7
    %v1510 = vsub.s32 2, %v1509
    %v1511 = vrot.slane %v1329, %v1510
    %v1512 = vlaneseq
    %v1513 = vshrl.u32 %v1512, 7
    %v1514 = vsub.s32 0, %v1513
    %v1515 = vrot.slane %v1330, %v1514
    %v1516 = vlaneseq
    %v1517 = vshrl.u32 %v1516, 7
    %v1518 = vsub.s32 2, %v1517
    %v1519 = vrot.slane %v1330, %v1518
    %v1520 = vlaneseq
    %v1521 = vshrl.u32 %v1520, 7
    %v1522 = vsub.s32 0, %v1521
    %v1523 = vrot.slane %v1331, %v1522
    %v1524 = vlaneseq
    %v1525 = vshrl.u32 %v1524, 7
    %v1526 = vsub.s32 2, %v1525
    %v1527 = vrot.slane %v1331, %v1526
    %v1528 = vlaneseq
    %v1529 = vshrl.u32 %v1528, 7
    %v1530 = vsub.s32 0, %v1529
    %v1531 = vrot.slane %v1332, %v1530
    %v1532 = vlaneseq
    %v1533 = vshrl.u32 %v1532, 7
    %v1534 = vsub.s32 2, %v1533
    %v1535 = vrot.slane %v1332, %v1534
    %v1536 = vlaneseq
    %v1537 = vshrl.u32 %v1536, 7
    %v1538 = vsub.s32 0, %v1537
    %v1539 = vrot.slane %v1333, %v1538
    %v1540 = vlaneseq
    %v1541 = vshrl.u32 %v1540, 7
    %v1542 = vsub.s32 2, %v1541
    %v1543 = vrot.slane %v1333, %v1542
    %v1544 = vlaneseq
    %v1545 = vshrl.u32 %v1544, 7
    %v1546 = vsub.s32 0, %v1545
    %v1547 = vrot.slane %v1334, %v1546
    %v1548 = vlaneseq
    %v1549 = vshrl.u32 %v1548, 7
    %v1550 = vsub.s32 2, %v1549
    %v1551 = vrot.slane %v1334, %v1550
    %v1552 = vlaneseq
    %v1553 = vshrl.u32 %v1552, 7
    %v1554 = vsub.s32 0, %v1553
    %v1555 = vrot.slane %v1335, %v1554
    %v1556 = vlaneseq
    %v1557 = vshrl.u32 %v1556, 7
    %v1558 = vsub.s32 2, %v1557
    %v1559 = vrot.slane %v1335, %v1558
    %v1560 = vlaneseq
    %v1561 = vshrl.u32 %v1560, 7
    %v1562 = vsub.s32 0, %v1561
    %v1563 = vrot.slane %v1336, %v1562
    %v1564 = vlaneseq
    %v1565 = vshrl.u32 %v1564, 7
    %v1566 = vsub.s32 2, %v1565
    %v1567 = vrot.slane %v1336, %v1566
    %v1568 = vlaneseq
    %v1569 = vshrl.u32 %v1568, 7
    %v1570 = vsub.s32 0, %v1569
    %v1571 = vrot.slane %v1337, %v1570
    %v1572 = vlaneseq
    %v1573 = vshrl.u32 %v1572, 7
    %v1574 = vsub.s32 2, %v1573
    %v1575 = vrot.slane %v1337, %v1574
    %v1576 = vlaneseq
    %v1577 = vshrl.u32 %v1576, 7
    %v1578 = vsub.s32 0, %v1577
    %v1579 = vrot.slane %v1338, %v1578
    %v1580 = vlaneseq
    %v1581 = vshrl.u32 %v1580, 7
    %v1582 = vsub.s32 2, %v1581
    %v1583 = vrot.slane %v1338, %v1582
    %v1584 = vlaneseq
    %v1585 = vshrl.u32 %v1584, 7
    %v1586 = vsub.s32 0, %v1585
    %v1587 = vrot.slane %v1339, %v1586
    %v1588 = vlaneseq
    %v1589 = vshrl.u32 %v1588, 7
    %v1590 = vsub.s32 2, %v1589
    %v1591 = vrot.slane %v1339, %v1590
    %v1592 = vlaneseq
    %v1593 = vshrl.u32 %v1592, 7
    %v1594 = vsub.s32 0, %v1593
    %v1595 = vrot.slane %v1340, %v1594
    %v1596 = vlaneseq
    %v1597 = vshrl.u32 %v1596, 7
    %v1598 = vsub.s32 2, %v1597
    %v1599 = vrot.slane %v1340, %v1598
    %v1600 = vlaneseq
    %v1601 = vshrl.u32 %v1600, 7
    %v1602 = vsub.s32 0, %v1601
    %v1603 = vrot.slane %v1341, %v1602
    %v1604 = vlaneseq
    %v1605 = vshrl.u32 %v1604, 7
    %v1606 = vsub.s32 2, %v1605
    %v1607 = vrot.slane %v1341, %v1606
    %v1608 = vlaneseq
    %v1609 = vshrl.u32 %v1608, 7
    %v1610 = vsub.s32 0, %v1609
    %v1611 = vrot.slane %v1342, %v1610
    %v1612 = vlaneseq
    %v1613 = vshrl.u32 %v1612, 7
    %v1614 = vsub.s32 2, %v1613
    %v1615 = vrot.slane %v1342, %v1614
    %vm1616 = vcmask 1041409
    %v1617 = vsel %vm1616, %v1403, %v1395
    %vm1618 = vcmask 1042434
    %v1619 = vsel %vm1618, %v1411, %v1617
    %vm1620 = vcmask 1043459
    %v1621 = vsel %vm1620, %v1419, %v1619
    %v1622 = vsel %vm643, %v1427, %v1621
    %vm1623 = vcmask 1045509
    %v1624 = vsel %vm1623, %v1435, %v1622
    %vm1625 = vcmask 1046534
    %v1626 = vsel %vm1625, %v1443, %v1624
    %vm1627 = vcmask 1047559
    %v1628 = vsel %vm1627, %v1451, %v1626
    %v1629 = vsel %vm1616, %v1407, %v1399
    %v1630 = vsel %vm1618, %v1415, %v1629
    %v1631 = vsel %vm1620, %v1423, %v1630
    %v1632 = vsel %vm643, %v1431, %v1631
    %v1633 = vsel %vm1623, %v1439, %v1632
    %v1634 = vsel %vm1625, %v1447, %v1633
    %v1635 = vsel %vm1627, %v1455, %v1634
    %v1636 = vsel %vm1616, %v1467, %v1459
    %v1637 = vsel %vm1618, %v1475, %v1636
    %v1638 = vsel %vm1620, %v1483, %v1637
    %v1639 = vsel %vm643, %v1491, %v1638
    %v1640 = vsel %vm1623, %v1499, %v1639
    %v1641 = vsel %vm1625, %v1507, %v1640
    %v1642 = vsel %vm1627, %v1515, %v1641
    %v1643 = vsel %vm1616, %v1471, %v1463
    %v1644 = vsel %vm1618, %v1479, %v1643
    %v1645 = vsel %vm1620, %v1487, %v1644
    %v1646 = vsel %vm643, %v1495, %v1645
    %v1647 = vsel %vm1623, %v1503, %v1646
    %v1648 = vsel %vm1625, %v1511, %v1647
    %v1649 = vsel %vm1627, %v1519, %v1648
    %v1650 = vsel %vm1616, %v1531, %v1523
    %v1651 = vsel %vm1618, %v1539, %v1650
    %v1652 = vsel %vm1620, %v1547, %v1651
    %v1653 = vsel %vm643, %v1555, %v1652
    %v1654 = vsel %vm1623, %v1563, %v1653
    %v1655 = vsel %vm1625, %v1571, %v1654
    %v1656 = vsel %vm1627, %v1579, %v1655
    %v1657 = vsel %vm1616, %v1535, %v1527
    %v1658 = vsel %vm1618, %v1543, %v1657
    %v1659 = vsel %vm1620, %v1551, %v1658
    %v1660 = vsel %vm643, %v1559, %v1659
    %v1661 = vsel %vm1623, %v1567, %v1660
    %v1662 = vsel %vm1625, %v1575, %v1661
    %v1663 = vsel %vm1627, %v1583, %v1662
    %v1664 = vsel %vm1616, %v1595, %v1587
    %v1665 = vsel %vm1618, %v1603, %v1664
    %v1666 = vsel %vm1620, %v1611, %v1665
    %v1667 = vsel %vm1616, %v1599, %v1591
    %v1668 = vsel %vm1618, %v1607, %v1667
    %v1669 = vsel %vm1620, %v1615, %v1668
    %vm1674 = vcmask 326656
    %v1675 = vsel %vm1674, %v1635, 0
    %v1677 = vsel %vm1674, %v1649, 0
    %v1679 = vsel %vm1674, %v1663, 0
    %v1681 = vsel %vm1674, %v1669, 0
    %1683 = vmatprep.subr.mxu0 0.0
    %1684 = vmatpush1.msra.mxu0 %v1358
    %1685 = vmatprep.subr.mxu0 0.0
    %1686 = vmatpush1.msra.mxu0 %v1357
    %1687 = vmatprep.subr.mxu0 0.0
    %1688 = vmatpush1.msra.mxu0 %v1356
    %1689 = vmatprep.subr.mxu0 0.0
    %1690 = vmatpush1.msra.mxu0 %v1355
    %1691 = vmatprep.subr.mxu0 0.0
    %1692 = vmatpush1.msra.mxu0 %v1354
    %1693 = vmatprep.subr.mxu0 0.0
    %1694 = vmatpush1.msra.mxu0 %v1353
    %1695 = vmatprep.subr.mxu0 0.0
    %1696 = vmatpush1.msra.mxu0 %v1352
    %1697 = vmatprep.subr.mxu0 0.0
    %1698 = vmatpush1.msra.mxu0 %v1351
    %1699 = vmatprep.subr.mxu0 0.0
    %1700 = vmatpush1.msra.mxu0 %v1350
    %1701 = vmatprep.subr.mxu0 0.0
    %1702 = vmatpush1.msra.mxu0 %v1349
    %1703 = vmatprep.subr.mxu0 0.0
    %1704 = vmatpush1.msra.mxu0 %v1348
    %1705 = vmatprep.subr.mxu0 0.0
    %1706 = vmatpush1.msra.mxu0 %v1347
    %1707 = vmatprep.subr.mxu0 0.0
    %1708 = vmatpush1.msra.mxu0 %v1346
    %1709 = vmatprep.subr.mxu0 0.0
    %1710 = vmatpush1.msra.mxu0 %v1345
    %1711 = vmatprep.subr.mxu0 0.0
    %1712 = vmatpush1.msra.mxu0 %v1344
    %1713 = vmatprep.subr.mxu0 0.0
    %1714 = vmatpush1.msra.mxu0 %v1343
    %1715 = vmatprep.subr.mxu0 0.0
    %1716 = vmatpush2.msra.mxu0 0.0
    %1717 = vmatprep.subr.mxu0 0.0
    %1718 = vmatpush2.msra.mxu0 0.0
    %1719 = vmatprep.subr.mxu0 0.0
    %1720 = vmatpush2.msra.mxu0 0.0
    %1721 = vmatprep.subr.mxu0 0.0
    %1722 = vmatpush2.msra.mxu0 0.0
    %1723 = vmatprep.subr.mxu0 0.0
    %1724 = vmatpush2.msra.mxu0 0.0
    %1725 = vmatprep.subr.mxu0 0.0
    %1726 = vmatpush2.msra.mxu0 0.0
    %1727 = vmatprep.subr.mxu0 0.0
    %1728 = vmatpush2.msra.mxu0 0.0
    %1729 = vmatprep.subr.mxu0 0.0
    %1730 = vmatpush2.msra.mxu0 0.0
    %1731 = vmatprep.subr.mxu0 0.0
    %1732 = vmatpush2.msra.mxu0 0.0
    %1733 = vmatprep.subr.mxu0 0.0
    %1734 = vmatpush2.msra.mxu0 0.0
    %1735 = vmatprep.subr.mxu0 0.0
    %1736 = vmatpush2.msra.mxu0 0.0
    %1737 = vmatprep.subr.mxu0 0.0
    %1738 = vmatpush2.msra.mxu0 %v1363
    %1739 = vmatprep.subr.mxu0 0.0
    %1740 = vmatpush2.msra.mxu0 %v1362
    %1741 = vmatprep.subr.mxu0 0.0
    %1742 = vmatpush2.msra.mxu0 %v1361
    %1743 = vmatprep.subr.mxu0 0.0
    %1744 = vmatpush2.msra.mxu0 %v1360
    %1745 = vmatprep.subr.mxu0 0.0
    %1746 = vmatpush2.msra.mxu0 %v1359
    %1747 = vmatprep.mubr.f32.mxu0 %v1675
    %1748 = vmatmul.mubr.f32.gmra.mxu0 %v1628
    %v1749 = vpop.f32.mrf.mxu0
    %v1750 = vadd.f32 0.0, %v1749
    %v1751 = vpop.f32.mrf.mxu0
    %1752 = vmatprep.mubr.f32.mxu0 %v1677
    %1753 = vmatmul.mubr.f32.gmra.mxu0 %v1642
    %v1754 = vpop.f32.mrf.mxu0
    %v1755 = vadd.f32 0.0, %v1754
    %v1756 = vpop.f32.mrf.mxu0
    %1757 = vmatprep.mubr.f32.mxu0 %v1679
    %1758 = vmatmul.mubr.f32.gmra.mxu0 %v1656
    %v1759 = vpop.f32.mrf.mxu0
    %v1760 = vadd.f32 0.0, %v1759
    %v1761 = vpop.f32.mrf.mxu0
    %1762 = vmatprep.mubr.f32.mxu0 %v1681
    %1763 = vmatmul.mubr.f32.gmra.mxu0 %v1666
    %v1764 = vpop.f32.mrf.mxu0
    %v1765 = vadd.f32 0.0, %v1764
    %v1766 = vpop.f32.mrf.mxu0
    %1767 = vdwg.mxu0
    %v1768 = vld [vmem:[%s4] sm:$0xff]
    %v1769 = vld [vmem:[%s4 + $0x8] sm:$0xff]
    %v1770 = vld [vmem:[%s4 + $0x10] sm:$0xff]
    %v1771 = vld [vmem:[%s4 + $0x18] sm:$0xff]
    %v1772 = vld [vmem:[%s4 + $0x20] sm:$0xff]
    %v1773 = vld [vmem:[%s4 + $0x28] sm:$0xff]
    %v1774 = vld [vmem:[%s4 + $0x30] sm:$0xff]
    %v1775 = vld [vmem:[%s4 + $0x38] sm:$0xff]
    %v1776 = vld [vmem:[%s4 + $0x40] sm:$0xff]
    %v1777 = vld [vmem:[%s4 + $0x48] sm:$0xff]
    %v1778 = vld [vmem:[%s4 + $0x50] sm:$0xff]
    %v1779 = vld [vmem:[%s4 + $0x58] sm:$0xff]
    %v1780 = vld [vmem:[%s4 + $0x60] sm:$0xff]
    %v1781 = vld [vmem:[%s4 + $0x68] sm:$0xff]
    %v1782 = vld [vmem:[%s4 + $0x70] sm:$0xff]
    %v1783 = vld [vmem:[%s4 + $0x78] sm:$0xff]
    %v1784 = vld [vmem:[%s4 + $0x80] sm:$0xff]
    %v1785 = vld [vmem:[%s4 + $0x88] sm:$0xff]
    %v1786 = vld [vmem:[%s4 + $0x90] sm:$0xff]
    %v1787 = vld [vmem:[%s4 + $0x98] sm:$0xff]
    %v1788 = vld [vmem:[%s4 + $0xa0] sm:$0xff]
    %1789 = vmatprep.subr.mxu0 0.0
    %1790 = vmatpush1.msra.mxu0 %v1783
    %1791 = vmatprep.subr.mxu0 0.0
    %1792 = vmatpush1.msra.mxu0 %v1782
    %1793 = vmatprep.subr.mxu0 0.0
    %1794 = vmatpush1.msra.mxu0 %v1781
    %1795 = vmatprep.subr.mxu0 0.0
    %1796 = vmatpush1.msra.mxu0 %v1780
    %1797 = vmatprep.subr.mxu0 0.0
    %1798 = vmatpush1.msra.mxu0 %v1779
    %1799 = vmatprep.subr.mxu0 0.0
    %1800 = vmatpush1.msra.mxu0 %v1778
    %1801 = vmatprep.subr.mxu0 0.0
    %1802 = vmatpush1.msra.mxu0 %v1777
    %1803 = vmatprep.subr.mxu0 0.0
    %1804 = vmatpush1.msra.mxu0 %v1776
    %1805 = vmatprep.subr.mxu0 0.0
    %1806 = vmatpush1.msra.mxu0 %v1775
    %1807 = vmatprep.subr.mxu0 0.0
    %1808 = vmatpush1.msra.mxu0 %v1774
    %1809 = vmatprep.subr.mxu0 0.0
    %1810 = vmatpush1.msra.mxu0 %v1773
    %1811 = vmatprep.subr.mxu0 0.0
    %1812 = vmatpush1.msra.mxu0 %v1772
    %1813 = vmatprep.subr.mxu0 0.0
    %1814 = vmatpush1.msra.mxu0 %v1771
    %1815 = vmatprep.subr.mxu0 0.0
    %1816 = vmatpush1.msra.mxu0 %v1770
    %1817 = vmatprep.subr.mxu0 0.0
    %1818 = vmatpush1.msra.mxu0 %v1769
    %1819 = vmatprep.subr.mxu0 0.0
    %1820 = vmatpush1.msra.mxu0 %v1768
    %1821 = vmatprep.subr.mxu0 0.0
    %1822 = vmatpush2.msra.mxu0 0.0
    %1823 = vmatprep.subr.mxu0 0.0
    %1824 = vmatpush2.msra.mxu0 0.0
    %1825 = vmatprep.subr.mxu0 0.0
    %1826 = vmatpush2.msra.mxu0 0.0
    %1827 = vmatprep.subr.mxu0 0.0
    %1828 = vmatpush2.msra.mxu0 0.0
    %1829 = vmatprep.subr.mxu0 0.0
    %1830 = vmatpush2.msra.mxu0 0.0
    %1831 = vmatprep.subr.mxu0 0.0
    %1832 = vmatpush2.msra.mxu0 0.0
    %1833 = vmatprep.subr.mxu0 0.0
    %1834 = vmatpush2.msra.mxu0 0.0
    %1835 = vmatprep.subr.mxu0 0.0
    %1836 = vmatpush2.msra.mxu0 0.0
    %1837 = vmatprep.subr.mxu0 0.0
    %1838 = vmatpush2.msra.mxu0 0.0
    %1839 = vmatprep.subr.mxu0 0.0
    %1840 = vmatpush2.msra.mxu0 0.0
    %1841 = vmatprep.subr.mxu0 0.0
    %1842 = vmatpush2.msra.mxu0 0.0
    %1843 = vmatprep.subr.mxu0 0.0
    %1844 = vmatpush2.msra.mxu0 %v1788
    %1845 = vmatprep.subr.mxu0 0.0
    %1846 = vmatpush2.msra.mxu0 %v1787
    %1847 = vmatprep.subr.mxu0 0.0
    %1848 = vmatpush2.msra.mxu0 %v1786
    %1849 = vmatprep.subr.mxu0 0.0
    %1850 = vmatpush2.msra.mxu0 %v1785
    %1851 = vmatprep.subr.mxu0 0.0
    %1852 = vmatpush2.msra.mxu0 %v1784
    %1853 = vmatprep.mubr.f32.mxu0 %v1675
    %1854 = vmatmul.mubr.f32.gmra.mxu0 %v1628
    %v1855 = vpop.f32.mrf.mxu0
    %v1856 = vadd.f32 0.0, %v1855
    %v1857 = vpop.f32.mrf.mxu0
    %1858 = vmatprep.mubr.f32.mxu0 %v1677
    %1859 = vmatmul.mubr.f32.gmra.mxu0 %v1642
    %v1860 = vpop.f32.mrf.mxu0
    %v1861 = vadd.f32 0.0, %v1860
    %v1862 = vpop.f32.mrf.mxu0
    %1863 = vmatprep.mubr.f32.mxu0 %v1679
    %1864 = vmatmul.mubr.f32.gmra.mxu0 %v1656
    %v1865 = vpop.f32.mrf.mxu0
    %v1866 = vadd.f32 0.0, %v1865
    %v1867 = vpop.f32.mrf.mxu0
    %1868 = vmatprep.mubr.f32.mxu0 %v1681
    %1869 = vmatmul.mubr.f32.gmra.mxu0 %v1666
    %v1870 = vpop.f32.mrf.mxu0
    %v1871 = vadd.f32 0.0, %v1870
    %v1872 = vpop.f32.mrf.mxu0
    %1873 = vdwg.mxu0
    %v1874 = vmax.f32 %v1750, %v1856
    %v1875 = vmax.f32 %v1755, %v1861
    %v1876 = vmax.f32 %v1760, %v1866
    %v1877 = vmax.f32 %v1765, %v1871
    %v1882 = vcombine.high %v1874, %v1874
    %v1884 = vunpack.c.l.s4 1983009808
    %v1885 = vunpack.c.0.s8 %v1884
    %v1886 = vlaneseq
    %v1887 = vshrl.u32 %v1886, 7
    %v1888 = vsub.s32 %v1885, %v1887
    %v1889 = vrot.slane %v1874, %v1888
    %v1891 = vunpack.c.l.s4 1983009808
    %v1892 = vunpack.c.0.s8 %v1891
    %v1893 = vlaneseq
    %v1894 = vshrl.u32 %v1893, 7
    %v1895 = vsub.s32 %v1892, %v1894
    %v1896 = vrot.slane %v1882, %v1895
    %v1897 = vcombine.high %v1889, %v1889
    %v1898 = vcombine.high %v1896, %v1896
    %v1899 = vcombine.high %v1875, %v1875
    %v1901 = vunpack.c.l.s4 1983009808
    %v1902 = vunpack.c.0.s8 %v1901
    %v1903 = vlaneseq
    %v1904 = vshrl.u32 %v1903, 7
    %v1905 = vsub.s32 %v1902, %v1904
    %v1906 = vrot.slane %v1875, %v1905
    %v1908 = vunpack.c.l.s4 1983009808
    %v1909 = vunpack.c.0.s8 %v1908
    %v1910 = vlaneseq
    %v1911 = vshrl.u32 %v1910, 7
    %v1912 = vsub.s32 %v1909, %v1911
    %v1913 = vrot.slane %v1899, %v1912
    %v1914 = vcombine.high %v1906, %v1906
    %v1915 = vcombine.high %v1913, %v1913
    %v1916 = vcombine.high %v1876, %v1876
    %v1918 = vunpack.c.l.s4 1983009808
    %v1919 = vunpack.c.0.s8 %v1918
    %v1920 = vlaneseq
    %v1921 = vshrl.u32 %v1920, 7
    %v1922 = vsub.s32 %v1919, %v1921
    %v1923 = vrot.slane %v1876, %v1922
    %v1925 = vunpack.c.l.s4 1983009808
    %v1926 = vunpack.c.0.s8 %v1925
    %v1927 = vlaneseq
    %v1928 = vshrl.u32 %v1927, 7
    %v1929 = vsub.s32 %v1926, %v1928
    %v1930 = vrot.slane %v1916, %v1929
    %v1931 = vcombine.high %v1923, %v1923
    %v1932 = vcombine.high %v1930, %v1930
    %v1934 = vunpack.c.l.s4 1983009808
    %v1935 = vunpack.c.0.s8 %v1934
    %v1936 = vlaneseq
    %v1937 = vshrl.u32 %v1936, 7
    %v1938 = vsub.s32 %v1935, %v1937
    %v1939 = vrot.slane %v1877, %v1938
    %v1940 = vcombine.high %v1939, %v1939
    %v1941 = vld [vmem:[%s5] sm:$0xff]
    %v1942 = vld [vmem:[%s5 + $0x8] sm:$0xff]
    %v1943 = vld [vmem:[%s5 + $0x10] sm:$0xff]
    %v1944 = vld [vmem:[%s5 + $0x18] sm:$0xff]
    %v1945 = vld [vmem:[%s5 + $0x20] sm:$0xff]
    %v1946 = vld [vmem:[%s5 + $0x28] sm:$0xff]
    %v1947 = vld [vmem:[%s5 + $0x30] sm:$0xff]
    %v1948 = vld [vmem:[%s5 + $0x38] sm:$0xff]
    %v1949 = vld [vmem:[%s5 + $0x40] sm:$0xff]
    %v1950 = vld [vmem:[%s5 + $0x48] sm:$0xff]
    %v1951 = vld [vmem:[%s5 + $0x50] sm:$0xff]
    %v1952 = vld [vmem:[%s5 + $0x58] sm:$0xff]
    %v1953 = vld [vmem:[%s5 + $0x60] sm:$0xff]
    %v1954 = vld [vmem:[%s5 + $0x68] sm:$0xff]
    %v1955 = vld [vmem:[%s5 + $0x70] sm:$0xff]
    %v1956 = vld [vmem:[%s5 + $0x78] sm:$0xff]
    %v1957 = vld [vmem:[%s5 + $0x80] sm:$0xff]
    %v1958 = vld [vmem:[%s5 + $0x88] sm:$0xff]
    %v1959 = vld [vmem:[%s5 + $0x90] sm:$0xff]
    %v1960 = vld [vmem:[%s5 + $0x98] sm:$0xff]
    %v1961 = vld [vmem:[%s5 + $0xa0] sm:$0xf]
    %v1962 = vld [vmem:[%s5 + $0xa8] sm:$0xf]
    %vm1963 = vmor %vm642, %vm1618
    %vm1964 = vmor %vm1963, %vm643
    %vm1965 = vmor %vm1964, %vm1625
    %v1966 = vrot.slane %v1889, 7
    %v1967 = vrot.slane %v1966, 2
    %v1968 = vrot.slane %v1897, 7
    %v1969 = vsel %vm1965, %v1967, %v1968
    %v1970 = vrot.slane %v1968, 2
    %v1971 = vrot.slane %v1896, 7
    %v1972 = vsel %vm1965, %v1970, %v1971
    %v1973 = vrot.slane %v1971, 2
    %v1974 = vrot.slane %v1898, 7
    %v1975 = vsel %vm1965, %v1973, %v1974
    %v1976 = vrot.slane %v1974, 2
    %v1977 = vrot.slane %v1906, 7
    %v1978 = vsel %vm1965, %v1976, %v1977
    %v1979 = vrot.slane %v1977, 2
    %v1980 = vrot.slane %v1914, 7
    %v1981 = vsel %vm1965, %v1979, %v1980
    %v1982 = vrot.slane %v1915, 7
    %v1983 = vrot.slane %v1982, 2
    %v1984 = vrot.slane %v1923, 7
    %v1985 = vsel %vm1965, %v1983, %v1984
    %v1986 = vrot.slane %v1984, 2
    %v1987 = vrot.slane %v1931, 7
    %v1988 = vsel %vm1965, %v1986, %v1987
    %v1989 = vrot.slane %v1987, 2
    %v1990 = vrot.slane %v1930, 7
    %v1991 = vsel %vm1965, %v1989, %v1990
    %v1992 = vrot.slane %v1990, 2
    %v1993 = vrot.slane %v1932, 7
    %v1994 = vsel %vm1965, %v1992, %v1993
    %v1995 = vrot.slane %v1993, 2
    %v1996 = vrot.slane %v1939, 7
    %v1997 = vsel %vm1965, %v1995, %v1996
    %s1998 = scalar_lea.vmem %s5, 176
    %v1999 = vld [vmem:[%s1998] sm:$0xff]
    %v2000 = vld [vmem:[%s1998 + $0x8] sm:$0xff]
    %v2001 = vld [vmem:[%s1998 + $0x10] sm:$0xff]
    %v2002 = vld [vmem:[%s1998 + $0x18] sm:$0xff]
    %v2003 = vld [vmem:[%s1998 + $0x20] sm:$0xff]
    %v2004 = vld [vmem:[%s1998 + $0x28] sm:$0xff]
    %v2005 = vld [vmem:[%s1998 + $0x30] sm:$0xff]
    %v2006 = vld [vmem:[%s1998 + $0x38] sm:$0xff]
    %v2007 = vld [vmem:[%s1998 + $0x40] sm:$0xff]
    %v2008 = vld [vmem:[%s1998 + $0x48] sm:$0xff]
    %v2009 = vld [vmem:[%s1998 + $0x50] sm:$0xff]
    %v2010 = vld [vmem:[%s1998 + $0x58] sm:$0xff]
    %v2011 = vld [vmem:[%s1998 + $0x60] sm:$0xff]
    %v2012 = vld [vmem:[%s1998 + $0x68] sm:$0xff]
    %v2013 = vld [vmem:[%s1998 + $0x70] sm:$0xff]
    %v2014 = vld [vmem:[%s1998 + $0x78] sm:$0xff]
    %v2015 = vld [vmem:[%s1998 + $0x80] sm:$0xff]
    %v2016 = vld [vmem:[%s1998 + $0x88] sm:$0xff]
    %v2017 = vld [vmem:[%s1998 + $0x90] sm:$0xff]
    %v2018 = vld [vmem:[%s1998 + $0x98] sm:$0xff]
    %v2019 = vld [vmem:[%s1998 + $0xa0] sm:$0xf]
    %v2020 = vld [vmem:[%s1998 + $0xa8] sm:$0xf]
    %v2021 = vcombine.low %v1969, %v1972
    %v2022 = vcombine.low %v1975, %v1978
    %v2024 = vunpack.c.l.s4 1983009808
    %v2025 = vunpack.c.0.s8 %v2024
    %v2026 = vlaneseq
    %v2027 = vshrl.u32 %v2026, 7
    %v2028 = vsub.s32 %v2025, %v2027
    %v2029 = vrot.slane %v2021, %v2028
    %v2031 = vunpack.c.l.s4 1983009808
    %v2032 = vunpack.c.0.s8 %v2031
    %v2033 = vlaneseq
    %v2034 = vshrl.u32 %v2033, 7
    %v2035 = vsub.s32 %v2032, %v2034
    %v2036 = vrot.slane %v2022, %v2035
    %v2037 = vcombine.low %v2029, %v2036
    %v2038 = vcombine.low %v1981, %v1985
    %v2039 = vcombine.low %v1988, %v1991
    %v2041 = vunpack.c.l.s4 1983009808
    %v2042 = vunpack.c.0.s8 %v2041
    %v2043 = vlaneseq
    %v2044 = vshrl.u32 %v2043, 7
    %v2045 = vsub.s32 %v2042, %v2044
    %v2046 = vrot.slane %v2038, %v2045
    %v2048 = vunpack.c.l.s4 1983009808
    %v2049 = vunpack.c.0.s8 %v2048
    %v2050 = vlaneseq
    %v2051 = vshrl.u32 %v2050, 7
    %v2052 = vsub.s32 %v2049, %v2051
    %v2053 = vrot.slane %v2039, %v2052
    %v2054 = vcombine.low %v2046, %v2053
    %v2055 = vcombine.low %v1994, %v1997
    %v2057 = vunpack.c.l.s4 1983009808
    %v2058 = vunpack.c.0.s8 %v2057
    %v2059 = vlaneseq
    %v2060 = vshrl.u32 %v2059, 7
    %v2061 = vsub.s32 %v2058, %v2060
    %v2062 = vrot.slane %v2055, %v2061
    %vm2063 = vcmask 687104
    %v2064 = vsel %vm2063, %v2037, 0
    %v2066 = vsel %vm2063, %v2054, 0
    %v2068 = vsel %vm2063, %v2062, 0
    %vm2070 = vcmask 1043456
    %v2072 = vsel %vm2070, %v2019, 0
    %v2075 = vsel %vm2070, %v2020, 0
    %2077 = vmatprep.subr.mxu0 0.0
    %2078 = vmatpush1.msra.mxu0 0.0
    %2079 = vmatprep.subr.mxu0 0.0
    %2080 = vmatpush1.msra.mxu0 0.0
    %2081 = vmatprep.subr.mxu0 0.0
    %2082 = vmatpush1.msra.mxu0 0.0
    %2083 = vmatprep.subr.mxu0 0.0
    %2084 = vmatpush1.msra.mxu0 0.0
    %2085 = vmatprep.subr.mxu0 0.0
    %2086 = vmatpush1.msra.mxu0 0.0
    %2087 = vmatprep.subr.mxu0 %v2075
    %2088 = vmatpush1.msra.mxu0 %v2072
    %2089 = vmatprep.subr.mxu0 %v2018
    %2090 = vmatpush1.msra.mxu0 %v2017
    %2091 = vmatprep.subr.mxu0 %v2016
    %2092 = vmatpush1.msra.mxu0 %v2015
    %2093 = vmatprep.subr.mxu0 %v2014
    %2094 = vmatpush1.msra.mxu0 %v2013
    %2095 = vmatprep.subr.mxu0 %v2012
    %2096 = vmatpush1.msra.mxu0 %v2011
    %2097 = vmatprep.subr.mxu0 %v2010
    %2098 = vmatpush1.msra.mxu0 %v2009
    %2099 = vmatprep.subr.mxu0 %v2008
    %2100 = vmatpush1.msra.mxu0 %v2007
    %2101 = vmatprep.subr.mxu0 %v2006
    %2102 = vmatpush1.msra.mxu0 %v2005
    %2103 = vmatprep.subr.mxu0 %v2004
    %2104 = vmatpush1.msra.mxu0 %v2003
    %2105 = vmatprep.subr.mxu0 %v2002
    %2106 = vmatpush1.msra.mxu0 %v2001
    %2107 = vmatprep.subr.mxu0 %v2000
    %2108 = vmatpush1.msra.mxu0 %v1999
    %2109 = vmatprep.subr.mxu0 0.0
    %2110 = vmatpush2.msra.mxu0 0.0
    %2111 = vmatprep.subr.mxu0 0.0
    %2112 = vmatpush2.msra.mxu0 0.0
    %2113 = vmatprep.subr.mxu0 0.0
    %2114 = vmatpush2.msra.mxu0 0.0
    %2115 = vmatprep.subr.mxu0 0.0
    %2116 = vmatpush2.msra.mxu0 0.0
    %2117 = vmatprep.subr.mxu0 0.0
    %2118 = vmatpush2.msra.mxu0 0.0
    %2119 = vmatprep.subr.mxu0 0.0
    %2120 = vmatpush2.msra.mxu0 0.0
    %2121 = vmatprep.subr.mxu0 0.0
    %2122 = vmatpush2.msra.mxu0 0.0
    %2123 = vmatprep.subr.mxu0 0.0
    %2124 = vmatpush2.msra.mxu0 0.0
    %2125 = vmatprep.subr.mxu0 0.0
    %2126 = vmatpush2.msra.mxu0 0.0
    %2127 = vmatprep.subr.mxu0 0.0
    %2128 = vmatpush2.msra.mxu0 0.0
    %2129 = vmatprep.subr.mxu0 0.0
    %2130 = vmatpush2.msra.mxu0 0.0
    %2131 = vmatprep.subr.mxu0 0.0
    %2132 = vmatpush2.msra.mxu0 0.0
    %2133 = vmatprep.subr.mxu0 0.0
    %2134 = vmatpush2.msra.mxu0 0.0
    %2135 = vmatprep.subr.mxu0 0.0
    %2136 = vmatpush2.msra.mxu0 0.0
    %2137 = vmatprep.subr.mxu0 0.0
    %2138 = vmatpush2.msra.mxu0 0.0
    %2139 = vmatprep.subr.mxu0 0.0
    %2140 = vmatpush2.msra.mxu0 0.0
    %2141 = vmatprep.mubr.f32.mxu0 0.0
    %2142 = vmatmul.mubr.f32.gmra.mxu0 %v2064
    %v2143 = vpop.f32.mrf.mxu0
    %v2144 = vadd.f32 0.0, %v2143
    %v2145 = vpop.f32.mrf.mxu0
    %v2146 = vadd.f32 0.0, %v2145
    %2147 = vmatprep.mubr.f32.mxu0 0.0
    %2148 = vmatmul.mubr.f32.gmra.mxu0 %v2066
    %v2149 = vpop.f32.mrf.mxu0
    %v2150 = vadd.f32 0.0, %v2149
    %v2151 = vpop.f32.mrf.mxu0
    %v2152 = vadd.f32 0.0, %v2151
    %2153 = vmatprep.mubr.f32.mxu0 0.0
    %2154 = vmatmul.mubr.f32.gmra.mxu0 %v2068
    %v2155 = vpop.f32.mrf.mxu0
    %v2156 = vadd.f32 0.0, %v2155
    %v2157 = vpop.f32.mrf.mxu0
    %v2158 = vadd.f32 0.0, %v2157
    %2159 = vdwg.mxu0
    %v2160 = vcombine.low %v1889, %v1897
    %v2161 = vcombine.low %v1896, %v1898
    %v2163 = vunpack.c.l.s4 1983009808
    %v2164 = vunpack.c.0.s8 %v2163
    %v2165 = vlaneseq
    %v2166 = vshrl.u32 %v2165, 7
    %v2167 = vsub.s32 %v2164, %v2166
    %v2168 = vrot.slane %v2160, %v2167
    %v2170 = vunpack.c.l.s4 1983009808
    %v2171 = vunpack.c.0.s8 %v2170
    %v2172 = vlaneseq
    %v2173 = vshrl.u32 %v2172, 7
    %v2174 = vsub.s32 %v2171, %v2173
    %v2175 = vrot.slane %v2161, %v2174
    %v2176 = vcombine.low %v2168, %v2175
    %v2177 = vcombine.low %v1906, %v1915
    %v2178 = vcombine.low %v1923, %v1931
    %v2180 = vunpack.c.l.s4 1983009808
    %v2181 = vunpack.c.0.s8 %v2180
    %v2182 = vlaneseq
    %v2183 = vshrl.u32 %v2182, 7
    %v2184 = vsub.s32 %v2181, %v2183
    %v2185 = vrot.slane %v2177, %v2184
    %v2187 = vunpack.c.l.s4 1983009808
    %v2188 = vunpack.c.0.s8 %v2187
    %v2189 = vlaneseq
    %v2190 = vshrl.u32 %v2189, 7
    %v2191 = vsub.s32 %v2188, %v2190
    %v2192 = vrot.slane %v2178, %v2191
    %v2193 = vcombine.low %v2185, %v2192
    %v2194 = vcombine.low %v1930, %v1932
    %v2196 = vunpack.c.l.s4 1983009808
    %v2197 = vunpack.c.0.s8 %v2196
    %v2198 = vlaneseq
    %v2199 = vshrl.u32 %v2198, 7
    %v2200 = vsub.s32 %v2197, %v2199
    %v2201 = vrot.slane %v2194, %v2200
    %v2202 = vsel %vm2063, %v2176, 0
    %v2204 = vsel %vm2063, %v2193, 0
    %v2206 = vsel %vm2063, %v2201, 0
    %v2209 = vsel %vm2070, %v1961, 0
    %v2212 = vsel %vm2070, %v1962, 0
    %2214 = vmatprep.subr.mxu0 0.0
    %2215 = vmatpush1.msra.mxu0 0.0
    %2216 = vmatprep.subr.mxu0 0.0
    %2217 = vmatpush1.msra.mxu0 0.0
    %2218 = vmatprep.subr.mxu0 0.0
    %2219 = vmatpush1.msra.mxu0 0.0
    %2220 = vmatprep.subr.mxu0 0.0
    %2221 = vmatpush1.msra.mxu0 0.0
    %2222 = vmatprep.subr.mxu0 0.0
    %2223 = vmatpush1.msra.mxu0 0.0
    %2224 = vmatprep.subr.mxu0 %v2212
    %2225 = vmatpush1.msra.mxu0 %v2209
    %2226 = vmatprep.subr.mxu0 %v1960
    %2227 = vmatpush1.msra.mxu0 %v1959
    %2228 = vmatprep.subr.mxu0 %v1958
    %2229 = vmatpush1.msra.mxu0 %v1957
    %2230 = vmatprep.subr.mxu0 %v1956
    %2231 = vmatpush1.msra.mxu0 %v1955
    %2232 = vmatprep.subr.mxu0 %v1954
    %2233 = vmatpush1.msra.mxu0 %v1953
    %2234 = vmatprep.subr.mxu0 %v1952
    %2235 = vmatpush1.msra.mxu0 %v1951
    %2236 = vmatprep.subr.mxu0 %v1950
    %2237 = vmatpush1.msra.mxu0 %v1949
    %2238 = vmatprep.subr.mxu0 %v1948
    %2239 = vmatpush1.msra.mxu0 %v1947
    %2240 = vmatprep.subr.mxu0 %v1946
    %2241 = vmatpush1.msra.mxu0 %v1945
    %2242 = vmatprep.subr.mxu0 %v1944
    %2243 = vmatpush1.msra.mxu0 %v1943
    %2244 = vmatprep.subr.mxu0 %v1942
    %2245 = vmatpush1.msra.mxu0 %v1941
    %2246 = vmatprep.subr.mxu0 0.0
    %2247 = vmatpush2.msra.mxu0 0.0
    %2248 = vmatprep.subr.mxu0 0.0
    %2249 = vmatpush2.msra.mxu0 0.0
    %2250 = vmatprep.subr.mxu0 0.0
    %2251 = vmatpush2.msra.mxu0 0.0
    %2252 = vmatprep.subr.mxu0 0.0
    %2253 = vmatpush2.msra.mxu0 0.0
    %2254 = vmatprep.subr.mxu0 0.0
    %2255 = vmatpush2.msra.mxu0 0.0
    %2256 = vmatprep.subr.mxu0 0.0
    %2257 = vmatpush2.msra.mxu0 0.0
    %2258 = vmatprep.subr.mxu0 0.0
    %2259 = vmatpush2.msra.mxu0 0.0
    %2260 = vmatprep.subr.mxu0 0.0
    %2261 = vmatpush2.msra.mxu0 0.0
    %2262 = vmatprep.subr.mxu0 0.0
    %2263 = vmatpush2.msra.mxu0 0.0
    %2264 = vmatprep.subr.mxu0 0.0
    %2265 = vmatpush2.msra.mxu0 0.0
    %2266 = vmatprep.subr.mxu0 0.0
    %2267 = vmatpush2.msra.mxu0 0.0
    %2268 = vmatprep.subr.mxu0 0.0
    %2269 = vmatpush2.msra.mxu0 0.0
    %2270 = vmatprep.subr.mxu0 0.0
    %2271 = vmatpush2.msra.mxu0 0.0
    %2272 = vmatprep.subr.mxu0 0.0
    %2273 = vmatpush2.msra.mxu0 0.0
    %2274 = vmatprep.subr.mxu0 0.0
    %2275 = vmatpush2.msra.mxu0 0.0
    %2276 = vmatprep.subr.mxu0 0.0
    %2277 = vmatpush2.msra.mxu0 0.0
    %2278 = vmatprep.mubr.f32.mxu0 0.0
    %2279 = vmatmul.mubr.f32.gmra.mxu0 %v2202
    %v2280 = vpop.f32.mrf.mxu0
    %v2281 = vadd.f32 %v2144, %v2280
    %v2282 = vpop.f32.mrf.mxu0
    %v2283 = vadd.f32 %v2146, %v2282
    %2284 = vmatprep.mubr.f32.mxu0 0.0
    %2285 = vmatmul.mubr.f32.gmra.mxu0 %v2204
    %v2286 = vpop.f32.mrf.mxu0
    %v2287 = vadd.f32 %v2150, %v2286
    %v2288 = vpop.f32.mrf.mxu0
    %v2289 = vadd.f32 %v2152, %v2288
    %2290 = vmatprep.mubr.f32.mxu0 0.0
    %2291 = vmatmul.mubr.f32.gmra.mxu0 %v2206
    %v2292 = vpop.f32.mrf.mxu0
    %v2293 = vadd.f32 %v2156, %v2292
    %v2294 = vpop.f32.mrf.mxu0
    %v2295 = vadd.f32 %v2158, %v2294
    %2296 = vdwg.mxu0
    %s2297 = scalar_lea.vmem %s5, 352
    %v2298 = vld [vmem:[%s2297] sm:$0xff]
    %v2299 = vld [vmem:[%s2297 + $0x8] sm:$0xff]
    %v2300 = vld [vmem:[%s2297 + $0x10] sm:$0xff]
    %v2301 = vld [vmem:[%s2297 + $0x18] sm:$0xff]
    %v2302 = vld [vmem:[%s2297 + $0x20] sm:$0xff]
    %v2303 = vld [vmem:[%s2297 + $0x28] sm:$0xff]
    %v2304 = vld [vmem:[%s2297 + $0x30] sm:$0xff]
    %v2305 = vld [vmem:[%s2297 + $0x38] sm:$0xff]
    %v2306 = vld [vmem:[%s2297 + $0x40] sm:$0xff]
    %v2307 = vld [vmem:[%s2297 + $0x48] sm:$0xff]
    %v2308 = vld [vmem:[%s2297 + $0x50] sm:$0xff]
    %v2309 = vld [vmem:[%s2297 + $0x58] sm:$0xff]
    %v2310 = vld [vmem:[%s2297 + $0x60] sm:$0xff]
    %v2311 = vld [vmem:[%s2297 + $0x68] sm:$0xff]
    %v2312 = vld [vmem:[%s2297 + $0x70] sm:$0xff]
    %v2313 = vld [vmem:[%s2297 + $0x78] sm:$0xff]
    %v2314 = vld [vmem:[%s2297 + $0x80] sm:$0xff]
    %v2315 = vld [vmem:[%s2297 + $0x88] sm:$0xff]
    %v2316 = vld [vmem:[%s2297 + $0x90] sm:$0xff]
    %v2317 = vld [vmem:[%s2297 + $0x98] sm:$0xff]
    %v2318 = vld [vmem:[%s2297 + $0xa0] sm:$0xf]
    %v2319 = vld [vmem:[%s2297 + $0xa8] sm:$0xf]
    %v2320 = vcombine.low %v1897, %v1896
    %v2321 = vcombine.low %v1898, %v1906
    %v2323 = vunpack.c.l.s4 1983009808
    %v2324 = vunpack.c.0.s8 %v2323
    %v2325 = vlaneseq
    %v2326 = vshrl.u32 %v2325, 7
    %v2327 = vsub.s32 %v2324, %v2326
    %v2328 = vrot.slane %v2320, %v2327
    %v2330 = vunpack.c.l.s4 1983009808
    %v2331 = vunpack.c.0.s8 %v2330
    %v2332 = vlaneseq
    %v2333 = vshrl.u32 %v2332, 7
    %v2334 = vsub.s32 %v2331, %v2333
    %v2335 = vrot.slane %v2321, %v2334
    %v2336 = vcombine.low %v2328, %v2335
    %v2337 = vcombine.low %v1914, %v1923
    %v2338 = vcombine.low %v1931, %v1930
    %v2340 = vunpack.c.l.s4 1983009808
    %v2341 = vunpack.c.0.s8 %v2340
    %v2342 = vlaneseq
    %v2343 = vshrl.u32 %v2342, 7
    %v2344 = vsub.s32 %v2341, %v2343
    %v2345 = vrot.slane %v2337, %v2344
    %v2347 = vunpack.c.l.s4 1983009808
    %v2348 = vunpack.c.0.s8 %v2347
    %v2349 = vlaneseq
    %v2350 = vshrl.u32 %v2349, 7
    %v2351 = vsub.s32 %v2348, %v2350
    %v2352 = vrot.slane %v2338, %v2351
    %v2353 = vcombine.low %v2345, %v2352
    %v2354 = vcombine.low %v1932, %v1939
    %v2356 = vunpack.c.l.s4 1983009808
    %v2357 = vunpack.c.0.s8 %v2356
    %v2358 = vlaneseq
    %v2359 = vshrl.u32 %v2358, 7
    %v2360 = vsub.s32 %v2357, %v2359
    %v2361 = vrot.slane %v2354, %v2360
    %v2362 = vsel %vm2063, %v2336, 0
    %v2364 = vsel %vm2063, %v2353, 0
    %v2366 = vsel %vm2063, %v2361, 0
    %v2369 = vsel %vm2070, %v2318, 0
    %v2372 = vsel %vm2070, %v2319, 0
    %2374 = vmatprep.subr.mxu0 0.0
    %2375 = vmatpush1.msra.mxu0 0.0
    %2376 = vmatprep.subr.mxu0 0.0
    %2377 = vmatpush1.msra.mxu0 0.0
    %2378 = vmatprep.subr.mxu0 0.0
    %2379 = vmatpush1.msra.mxu0 0.0
    %2380 = vmatprep.subr.mxu0 0.0
    %2381 = vmatpush1.msra.mxu0 0.0
    %2382 = vmatprep.subr.mxu0 0.0
    %2383 = vmatpush1.msra.mxu0 0.0
    %2384 = vmatprep.subr.mxu0 %v2372
    %2385 = vmatpush1.msra.mxu0 %v2369
    %2386 = vmatprep.subr.mxu0 %v2317
    %2387 = vmatpush1.msra.mxu0 %v2316
    %2388 = vmatprep.subr.mxu0 %v2315
    %2389 = vmatpush1.msra.mxu0 %v2314
    %2390 = vmatprep.subr.mxu0 %v2313
    %2391 = vmatpush1.msra.mxu0 %v2312
    %2392 = vmatprep.subr.mxu0 %v2311
    %2393 = vmatpush1.msra.mxu0 %v2310
    %2394 = vmatprep.subr.mxu0 %v2309
    %2395 = vmatpush1.msra.mxu0 %v2308
    %2396 = vmatprep.subr.mxu0 %v2307
    %2397 = vmatpush1.msra.mxu0 %v2306
    %2398 = vmatprep.subr.mxu0 %v2305
    %2399 = vmatpush1.msra.mxu0 %v2304
    %2400 = vmatprep.subr.mxu0 %v2303
    %2401 = vmatpush1.msra.mxu0 %v2302
    %2402 = vmatprep.subr.mxu0 %v2301
    %2403 = vmatpush1.msra.mxu0 %v2300
    %2404 = vmatprep.subr.mxu0 %v2299
    %2405 = vmatpush1.msra.mxu0 %v2298
    %2406 = vmatprep.subr.mxu0 0.0
    %2407 = vmatpush2.msra.mxu0 0.0
    %2408 = vmatprep.subr.mxu0 0.0
    %2409 = vmatpush2.msra.mxu0 0.0
    %2410 = vmatprep.subr.mxu0 0.0
    %2411 = vmatpush2.msra.mxu0 0.0
    %2412 = vmatprep.subr.mxu0 0.0
    %2413 = vmatpush2.msra.mxu0 0.0
    %2414 = vmatprep.subr.mxu0 0.0
    %2415 = vmatpush2.msra.mxu0 0.0
    %2416 = vmatprep.subr.mxu0 0.0
    %2417 = vmatpush2.msra.mxu0 0.0
    %2418 = vmatprep.subr.mxu0 0.0
    %2419 = vmatpush2.msra.mxu0 0.0
    %2420 = vmatprep.subr.mxu0 0.0
    %2421 = vmatpush2.msra.mxu0 0.0
    %2422 = vmatprep.subr.mxu0 0.0
    %2423 = vmatpush2.msra.mxu0 0.0
    %2424 = vmatprep.subr.mxu0 0.0
    %2425 = vmatpush2.msra.mxu0 0.0
    %2426 = vmatprep.subr.mxu0 0.0
    %2427 = vmatpush2.msra.mxu0 0.0
    %2428 = vmatprep.subr.mxu0 0.0
    %2429 = vmatpush2.msra.mxu0 0.0
    %2430 = vmatprep.subr.mxu0 0.0
    %2431 = vmatpush2.msra.mxu0 0.0
    %2432 = vmatprep.subr.mxu0 0.0
    %2433 = vmatpush2.msra.mxu0 0.0
    %2434 = vmatprep.subr.mxu0 0.0
    %2435 = vmatpush2.msra.mxu0 0.0
    %2436 = vmatprep.subr.mxu0 0.0
    %2437 = vmatpush2.msra.mxu0 0.0
    %2438 = vmatprep.mubr.f32.mxu0 0.0
    %2439 = vmatmul.mubr.f32.gmra.mxu0 %v2362
    %v2440 = vpop.f32.mrf.mxu0
    %v2441 = vadd.f32 0.0, %v2440
    %v2442 = vpop.f32.mrf.mxu0
    %v2443 = vadd.f32 0.0, %v2442
    %2444 = vmatprep.mubr.f32.mxu0 0.0
    %2445 = vmatmul.mubr.f32.gmra.mxu0 %v2364
    %v2446 = vpop.f32.mrf.mxu0
    %v2447 = vadd.f32 0.0, %v2446
    %v2448 = vpop.f32.mrf.mxu0
    %v2449 = vadd.f32 0.0, %v2448
    %2450 = vmatprep.mubr.f32.mxu0 0.0
    %2451 = vmatmul.mubr.f32.gmra.mxu0 %v2366
    %v2452 = vpop.f32.mrf.mxu0
    %v2453 = vadd.f32 0.0, %v2452
    %v2454 = vpop.f32.mrf.mxu0
    %v2455 = vadd.f32 0.0, %v2454
    %2456 = vdwg.mxu0
    %v2457 = vadd.f32 %v2281, %v2441
    %v2458 = vadd.f32 %v2283, %v2443
    %v2459 = vadd.f32 %v2287, %v2447
    %v2460 = vadd.f32 %v2289, %v2449
    %v2461 = vadd.f32 %v2293, %v2453
    %v2462 = vadd.f32 %v2295, %v2455
    %v2463 = vrot.slane %v1980, 2
    %v2464 = vrot.slane %v1913, 7
    %v2465 = vsel %vm1965, %v2463, %v2464
    %v2466 = vrot.slane %v1996, 2
    %v2467 = vrot.slane %v1940, 7
    %v2468 = vsel %vm1965, %v2466, %v2467
    %s2469 = scalar_lea.vmem %s5, 528
    %v2470 = vld [vmem:[%s2469] sm:$0xff]
    %v2471 = vld [vmem:[%s2469 + $0x8] sm:$0xff]
    %v2472 = vld [vmem:[%s2469 + $0x10] sm:$0xff]
    %v2473 = vld [vmem:[%s2469 + $0x18] sm:$0xff]
    %v2474 = vld [vmem:[%s2469 + $0x20] sm:$0xff]
    %v2475 = vld [vmem:[%s2469 + $0x28] sm:$0xff]
    %v2476 = vld [vmem:[%s2469 + $0x30] sm:$0xff]
    %v2477 = vld [vmem:[%s2469 + $0x38] sm:$0xff]
    %v2478 = vld [vmem:[%s2469 + $0x40] sm:$0xff]
    %v2479 = vld [vmem:[%s2469 + $0x48] sm:$0xff]
    %v2480 = vld [vmem:[%s2469 + $0x50] sm:$0xff]
    %v2481 = vld [vmem:[%s2469 + $0x58] sm:$0xff]
    %v2482 = vld [vmem:[%s2469 + $0x60] sm:$0xff]
    %v2483 = vld [vmem:[%s2469 + $0x68] sm:$0xff]
    %v2484 = vld [vmem:[%s2469 + $0x70] sm:$0xff]
    %v2485 = vld [vmem:[%s2469 + $0x78] sm:$0xff]
    %v2486 = vld [vmem:[%s2469 + $0x80] sm:$0xff]
    %v2487 = vld [vmem:[%s2469 + $0x88] sm:$0xff]
    %v2488 = vld [vmem:[%s2469 + $0x90] sm:$0xff]
    %v2489 = vld [vmem:[%s2469 + $0x98] sm:$0xff]
    %v2490 = vld [vmem:[%s2469 + $0xa0] sm:$0xf]
    %v2491 = vld [vmem:[%s2469 + $0xa8] sm:$0xf]
    %v2492 = vcombine.low %v1972, %v1975
    %v2493 = vcombine.low %v1978, %v1981
    %v2495 = vunpack.c.l.s4 1983009808
    %v2496 = vunpack.c.0.s8 %v2495
    %v2497 = vlaneseq
    %v2498 = vshrl.u32 %v2497, 7
    %v2499 = vsub.s32 %v2496, %v2498
    %v2500 = vrot.slane %v2492, %v2499
    %v2502 = vunpack.c.l.s4 1983009808
    %v2503 = vunpack.c.0.s8 %v2502
    %v2504 = vlaneseq
    %v2505 = vshrl.u32 %v2504, 7
    %v2506 = vsub.s32 %v2503, %v2505
    %v2507 = vrot.slane %v2493, %v2506
    %v2508 = vcombine.low %v2500, %v2507
    %v2509 = vcombine.low %v2465, %v1988
    %v2510 = vcombine.low %v1991, %v1994
    %v2512 = vunpack.c.l.s4 1983009808
    %v2513 = vunpack.c.0.s8 %v2512
    %v2514 = vlaneseq
    %v2515 = vshrl.u32 %v2514, 7
    %v2516 = vsub.s32 %v2513, %v2515
    %v2517 = vrot.slane %v2509, %v2516
    %v2519 = vunpack.c.l.s4 1983009808
    %v2520 = vunpack.c.0.s8 %v2519
    %v2521 = vlaneseq
    %v2522 = vshrl.u32 %v2521, 7
    %v2523 = vsub.s32 %v2520, %v2522
    %v2524 = vrot.slane %v2510, %v2523
    %v2525 = vcombine.low %v2517, %v2524
    %v2526 = vcombine.low %v1997, %v2468
    %v2528 = vunpack.c.l.s4 1983009808
    %v2529 = vunpack.c.0.s8 %v2528
    %v2530 = vlaneseq
    %v2531 = vshrl.u32 %v2530, 7
    %v2532 = vsub.s32 %v2529, %v2531
    %v2533 = vrot.slane %v2526, %v2532
    %v2534 = vsel %vm2063, %v2508, 0
    %v2536 = vsel %vm2063, %v2525, 0
    %v2538 = vsel %vm2063, %v2533, 0
    %v2541 = vsel %vm2070, %v2490, 0
    %v2544 = vsel %vm2070, %v2491, 0
    %2546 = vmatprep.subr.mxu0 0.0
    %2547 = vmatpush1.msra.mxu0 0.0
    %2548 = vmatprep.subr.mxu0 0.0
    %2549 = vmatpush1.msra.mxu0 0.0
    %2550 = vmatprep.subr.mxu0 0.0
    %2551 = vmatpush1.msra.mxu0 0.0
    %2552 = vmatprep.subr.mxu0 0.0
    %2553 = vmatpush1.msra.mxu0 0.0
    %2554 = vmatprep.subr.mxu0 0.0
    %2555 = vmatpush1.msra.mxu0 0.0
    %2556 = vmatprep.subr.mxu0 %v2544
    %2557 = vmatpush1.msra.mxu0 %v2541
    %2558 = vmatprep.subr.mxu0 %v2489
    %2559 = vmatpush1.msra.mxu0 %v2488
    %2560 = vmatprep.subr.mxu0 %v2487
    %2561 = vmatpush1.msra.mxu0 %v2486
    %2562 = vmatprep.subr.mxu0 %v2485
    %2563 = vmatpush1.msra.mxu0 %v2484
    %2564 = vmatprep.subr.mxu0 %v2483
    %2565 = vmatpush1.msra.mxu0 %v2482
    %2566 = vmatprep.subr.mxu0 %v2481
    %2567 = vmatpush1.msra.mxu0 %v2480
    %2568 = vmatprep.subr.mxu0 %v2479
    %2569 = vmatpush1.msra.mxu0 %v2478
    %2570 = vmatprep.subr.mxu0 %v2477
    %2571 = vmatpush1.msra.mxu0 %v2476
    %2572 = vmatprep.subr.mxu0 %v2475
    %2573 = vmatpush1.msra.mxu0 %v2474
    %2574 = vmatprep.subr.mxu0 %v2473
    %2575 = vmatpush1.msra.mxu0 %v2472
    %2576 = vmatprep.subr.mxu0 %v2471
    %2577 = vmatpush1.msra.mxu0 %v2470
    %2578 = vmatprep.subr.mxu0 0.0
    %2579 = vmatpush2.msra.mxu0 0.0
    %2580 = vmatprep.subr.mxu0 0.0
    %2581 = vmatpush2.msra.mxu0 0.0
    %2582 = vmatprep.subr.mxu0 0.0
    %2583 = vmatpush2.msra.mxu0 0.0
    %2584 = vmatprep.subr.mxu0 0.0
    %2585 = vmatpush2.msra.mxu0 0.0
    %2586 = vmatprep.subr.mxu0 0.0
    %2587 = vmatpush2.msra.mxu0 0.0
    %2588 = vmatprep.subr.mxu0 0.0
    %2589 = vmatpush2.msra.mxu0 0.0
    %2590 = vmatprep.subr.mxu0 0.0
    %2591 = vmatpush2.msra.mxu0 0.0
    %2592 = vmatprep.subr.mxu0 0.0
    %2593 = vmatpush2.msra.mxu0 0.0
    %2594 = vmatprep.subr.mxu0 0.0
    %2595 = vmatpush2.msra.mxu0 0.0
    %2596 = vmatprep.subr.mxu0 0.0
    %2597 = vmatpush2.msra.mxu0 0.0
    %2598 = vmatprep.subr.mxu0 0.0
    %2599 = vmatpush2.msra.mxu0 0.0
    %2600 = vmatprep.subr.mxu0 0.0
    %2601 = vmatpush2.msra.mxu0 0.0
    %2602 = vmatprep.subr.mxu0 0.0
    %2603 = vmatpush2.msra.mxu0 0.0
    %2604 = vmatprep.subr.mxu0 0.0
    %2605 = vmatpush2.msra.mxu0 0.0
    %2606 = vmatprep.subr.mxu0 0.0
    %2607 = vmatpush2.msra.mxu0 0.0
    %2608 = vmatprep.subr.mxu0 0.0
    %2609 = vmatpush2.msra.mxu0 0.0
    %2610 = vmatprep.mubr.f32.mxu0 0.0
    %2611 = vmatmul.mubr.f32.gmra.mxu0 %v2534
    %v2612 = vpop.f32.mrf.mxu0
    %v2613 = vadd.f32 0.0, %v2612
    %v2614 = vpop.f32.mrf.mxu0
    %v2615 = vadd.f32 0.0, %v2614
    %2616 = vmatprep.mubr.f32.mxu0 0.0
    %2617 = vmatmul.mubr.f32.gmra.mxu0 %v2536
    %v2618 = vpop.f32.mrf.mxu0
    %v2619 = vadd.f32 0.0, %v2618
    %v2620 = vpop.f32.mrf.mxu0
    %v2621 = vadd.f32 0.0, %v2620
    %2622 = vmatprep.mubr.f32.mxu0 0.0
    %2623 = vmatmul.mubr.f32.gmra.mxu0 %v2538
    %v2624 = vpop.f32.mrf.mxu0
    %v2625 = vadd.f32 0.0, %v2624
    %v2626 = vpop.f32.mrf.mxu0
    %v2627 = vadd.f32 0.0, %v2626
    %2628 = vdwg.mxu0
    %v2629 = vadd.f32 %v2457, %v2613
    %v2630 = vadd.f32 %v2458, %v2615
    %v2631 = vadd.f32 %v2459, %v2619
    %v2632 = vadd.f32 %v2460, %v2621
    %v2633 = vadd.f32 %v2461, %v2625
    %v2634 = vadd.f32 %v2462, %v2627
    %s2635 = scalar_lea.vmem %s5, 704
    %v2636 = vld [vmem:[%s2635] sm:$0xff]
    %v2637 = vld [vmem:[%s2635 + $0x8] sm:$0xff]
    %v2638 = vld [vmem:[%s2635 + $0x10] sm:$0xff]
    %v2639 = vld [vmem:[%s2635 + $0x18] sm:$0xff]
    %v2640 = vld [vmem:[%s2635 + $0x20] sm:$0xff]
    %v2641 = vld [vmem:[%s2635 + $0x28] sm:$0xff]
    %v2642 = vld [vmem:[%s2635 + $0x30] sm:$0xff]
    %v2643 = vld [vmem:[%s2635 + $0x38] sm:$0xff]
    %v2644 = vld [vmem:[%s2635 + $0x40] sm:$0xff]
    %v2645 = vld [vmem:[%s2635 + $0x48] sm:$0xff]
    %v2646 = vld [vmem:[%s2635 + $0x50] sm:$0xff]
    %v2647 = vld [vmem:[%s2635 + $0x58] sm:$0xff]
    %v2648 = vld [vmem:[%s2635 + $0x60] sm:$0xff]
    %v2649 = vld [vmem:[%s2635 + $0x68] sm:$0xff]
    %v2650 = vld [vmem:[%s2635 + $0x70] sm:$0xff]
    %v2651 = vld [vmem:[%s2635 + $0x78] sm:$0xff]
    %v2652 = vld [vmem:[%s2635 + $0x80] sm:$0xff]
    %v2653 = vld [vmem:[%s2635 + $0x88] sm:$0xff]
    %v2654 = vld [vmem:[%s2635 + $0x90] sm:$0xff]
    %v2655 = vld [vmem:[%s2635 + $0x98] sm:$0xff]
    %v2656 = vld [vmem:[%s2635 + $0xa0] sm:$0xf]
    %v2657 = vld [vmem:[%s2635 + $0xa8] sm:$0xf]
    %v2658 = vcombine.low %v1906, %v1914
    %v2660 = vunpack.c.l.s4 1983009808
    %v2661 = vunpack.c.0.s8 %v2660
    %v2662 = vlaneseq
    %v2663 = vshrl.u32 %v2662, 7
    %v2664 = vsub.s32 %v2661, %v2663
    %v2665 = vrot.slane %v2658, %v2664
    %v2666 = vcombine.low %v2175, %v2665
    %v2667 = vcombine.low %v1913, %v1931
    %v2669 = vunpack.c.l.s4 1983009808
    %v2670 = vunpack.c.0.s8 %v2669
    %v2671 = vlaneseq
    %v2672 = vshrl.u32 %v2671, 7
    %v2673 = vsub.s32 %v2670, %v2672
    %v2674 = vrot.slane %v2667, %v2673
    %v2675 = vcombine.low %v2674, %v2201
    %v2676 = vcombine.low %v1939, %v1940
    %v2678 = vunpack.c.l.s4 1983009808
    %v2679 = vunpack.c.0.s8 %v2678
    %v2680 = vlaneseq
    %v2681 = vshrl.u32 %v2680, 7
    %v2682 = vsub.s32 %v2679, %v2681
    %v2683 = vrot.slane %v2676, %v2682
    %v2684 = vsel %vm2063, %v2666, 0
    %v2686 = vsel %vm2063, %v2675, 0
    %v2688 = vsel %vm2063, %v2683, 0
    %v2691 = vsel %vm2070, %v2656, 0
    %v2694 = vsel %vm2070, %v2657, 0
    %2696 = vmatprep.subr.mxu0 0.0
    %2697 = vmatpush1.msra.mxu0 0.0
    %2698 = vmatprep.subr.mxu0 0.0
    %2699 = vmatpush1.msra.mxu0 0.0
    %2700 = vmatprep.subr.mxu0 0.0
    %2701 = vmatpush1.msra.mxu0 0.0
    %2702 = vmatprep.subr.mxu0 0.0
    %2703 = vmatpush1.msra.mxu0 0.0
    %2704 = vmatprep.subr.mxu0 0.0
    %2705 = vmatpush1.msra.mxu0 0.0
    %2706 = vmatprep.subr.mxu0 %v2694
    %2707 = vmatpush1.msra.mxu0 %v2691
    %2708 = vmatprep.subr.mxu0 %v2655
    %2709 = vmatpush1.msra.mxu0 %v2654
    %2710 = vmatprep.subr.mxu0 %v2653
    %2711 = vmatpush1.msra.mxu0 %v2652
    %2712 = vmatprep.subr.mxu0 %v2651
    %2713 = vmatpush1.msra.mxu0 %v2650
    %2714 = vmatprep.subr.mxu0 %v2649
    %2715 = vmatpush1.msra.mxu0 %v2648
    %2716 = vmatprep.subr.mxu0 %v2647
    %2717 = vmatpush1.msra.mxu0 %v2646
    %2718 = vmatprep.subr.mxu0 %v2645
    %2719 = vmatpush1.msra.mxu0 %v2644
    %2720 = vmatprep.subr.mxu0 %v2643
    %2721 = vmatpush1.msra.mxu0 %v2642
    %2722 = vmatprep.subr.mxu0 %v2641
    %2723 = vmatpush1.msra.mxu0 %v2640
    %2724 = vmatprep.subr.mxu0 %v2639
    %2725 = vmatpush1.msra.mxu0 %v2638
    %2726 = vmatprep.subr.mxu0 %v2637
    %2727 = vmatpush1.msra.mxu0 %v2636
    %2728 = vmatprep.subr.mxu0 0.0
    %2729 = vmatpush2.msra.mxu0 0.0
    %2730 = vmatprep.subr.mxu0 0.0
    %2731 = vmatpush2.msra.mxu0 0.0
    %2732 = vmatprep.subr.mxu0 0.0
    %2733 = vmatpush2.msra.mxu0 0.0
    %2734 = vmatprep.subr.mxu0 0.0
    %2735 = vmatpush2.msra.mxu0 0.0
    %2736 = vmatprep.subr.mxu0 0.0
    %2737 = vmatpush2.msra.mxu0 0.0
    %2738 = vmatprep.subr.mxu0 0.0
    %2739 = vmatpush2.msra.mxu0 0.0
    %2740 = vmatprep.subr.mxu0 0.0
    %2741 = vmatpush2.msra.mxu0 0.0
    %2742 = vmatprep.subr.mxu0 0.0
    %2743 = vmatpush2.msra.mxu0 0.0
    %2744 = vmatprep.subr.mxu0 0.0
    %2745 = vmatpush2.msra.mxu0 0.0
    %2746 = vmatprep.subr.mxu0 0.0
    %2747 = vmatpush2.msra.mxu0 0.0
    %2748 = vmatprep.subr.mxu0 0.0
    %2749 = vmatpush2.msra.mxu0 0.0
    %2750 = vmatprep.subr.mxu0 0.0
    %2751 = vmatpush2.msra.mxu0 0.0
    %2752 = vmatprep.subr.mxu0 0.0
    %2753 = vmatpush2.msra.mxu0 0.0
    %2754 = vmatprep.subr.mxu0 0.0
    %2755 = vmatpush2.msra.mxu0 0.0
    %2756 = vmatprep.subr.mxu0 0.0
    %2757 = vmatpush2.msra.mxu0 0.0
    %2758 = vmatprep.subr.mxu0 0.0
    %2759 = vmatpush2.msra.mxu0 0.0
    %2760 = vmatprep.mubr.f32.mxu0 0.0
    %2761 = vmatmul.mubr.f32.gmra.mxu0 %v2684
    %v2762 = vpop.f32.mrf.mxu0
    %v2763 = vadd.f32 0.0, %v2762
    %v2764 = vpop.f32.mrf.mxu0
    %v2765 = vadd.f32 0.0, %v2764
    %2766 = vmatprep.mubr.f32.mxu0 0.0
    %2767 = vmatmul.mubr.f32.gmra.mxu0 %v2686
    %v2768 = vpop.f32.mrf.mxu0
    %v2769 = vadd.f32 0.0, %v2768
    %v2770 = vpop.f32.mrf.mxu0
    %v2771 = vadd.f32 0.0, %v2770
    %2772 = vmatprep.mubr.f32.mxu0 0.0
    %2773 = vmatmul.mubr.f32.gmra.mxu0 %v2688
    %v2774 = vpop.f32.mrf.mxu0
    %v2775 = vadd.f32 0.0, %v2774
    %v2776 = vpop.f32.mrf.mxu0
    %v2777 = vadd.f32 0.0, %v2776
    %2778 = vdwg.mxu0
    %v2779 = vadd.f32 %v2629, %v2763
    %v2780 = vadd.f32 %v2630, %v2765
    %v2781 = vadd.f32 %v2631, %v2769
    %v2782 = vadd.f32 %v2632, %v2771
    %v2783 = vadd.f32 %v2633, %v2775
    %v2784 = vadd.f32 %v2634, %v2777
    %v2785 = vld [vmem:[%s6] sm:$0x3]
    %v2787 = vlaneseq
    %v2788 = vshrl.u32 %v2787, 7
    %v2789 = vsub.s32 0, %v2788
    %v2790 = vrot.slane %v2785, %v2789
    %v2791 = vlaneseq
    %v2792 = vshrl.u32 %v2791, 7
    %v2793 = vsub.s32 1, %v2792
    %v2794 = vrot.slane %v2785, %v2793
    %v2797 = vadd.f32 %v2779, %v2790
    %v2798 = vadd.f32 %v2780, %v2794
    %v2799 = vadd.f32 %v2781, %v2790
    %v2800 = vadd.f32 %v2782, %v2794
    %v2801 = vadd.f32 %v2783, %v2790
    %v2802 = vadd.f32 %v2784, %v2794
    %v2803 = vmax.f32 %v2797, 0.0
    %v2804 = vmax.f32 %v2798, 0.0
    %v2805 = vmax.f32 %v2799, 0.0
    %v2806 = vmax.f32 %v2800, 0.0
    %v2807 = vmax.f32 %v2801, 0.0
    %v2808 = vmax.f32 %v2802, 0.0
    %v2815 = vcombine.low %v2803, %v2804
    %v2816 = vcombine.high %v2803, %v2804
    %v2818 = vunpack.c.l.s4 1983009808
    %v2819 = vunpack.c.0.s8 %v2818
    %v2820 = vlaneseq
    %v2821 = vshrl.u32 %v2820, 7
    %v2822 = vsub.s32 %v2819, %v2821
    %v2823 = vrot.slane %v2815, %v2822
    %v2825 = vunpack.c.l.s4 1983009808
    %v2826 = vunpack.c.0.s8 %v2825
    %v2827 = vlaneseq
    %v2828 = vshrl.u32 %v2827, 7
    %v2829 = vsub.s32 %v2826, %v2828
    %v2830 = vrot.slane %v2816, %v2829
    %v2831 = vcombine.high %v2823, %v2823
    %v2832 = vcombine.high %v2830, %v2830
    %v2833 = vcombine.low %v2805, %v2806
    %v2834 = vcombine.high %v2805, %v2806
    %v2836 = vunpack.c.l.s4 1983009808
    %v2837 = vunpack.c.0.s8 %v2836
    %v2838 = vlaneseq
    %v2839 = vshrl.u32 %v2838, 7
    %v2840 = vsub.s32 %v2837, %v2839
    %v2841 = vrot.slane %v2833, %v2840
    %v2843 = vunpack.c.l.s4 1983009808
    %v2844 = vunpack.c.0.s8 %v2843
    %v2845 = vlaneseq
    %v2846 = vshrl.u32 %v2845, 7
    %v2847 = vsub.s32 %v2844, %v2846
    %v2848 = vrot.slane %v2834, %v2847
    %v2849 = vcombine.high %v2841, %v2841
    %v2850 = vcombine.high %v2848, %v2848
    %v2851 = vcombine.low %v2807, %v2808
    %v2853 = vunpack.c.l.s4 1983009808
    %v2854 = vunpack.c.0.s8 %v2853
    %v2855 = vlaneseq
    %v2856 = vshrl.u32 %v2855, 7
    %v2857 = vsub.s32 %v2854, %v2856
    %v2858 = vrot.slane %v2851, %v2857
    %v2859 = vcombine.high %v2858, %v2858
    %v2870 = vrot.slane %v2823, 7
    %v2871 = vrot.slane %v2870, 2
    %v2872 = vrot.slane %v2831, 7
    %v2873 = vrot.slane %v2872, 2
    %v2874 = vrot.slane %v2830, 7
    %v2875 = vrot.slane %v2874, 2
    %v2876 = vrot.slane %v2832, 7
    %v2877 = vrot.slane %v2876, 2
    %v2878 = vrot.slane %v2841, 7
    %v2879 = vrot.slane %v2878, 2
    %v2880 = vrot.slane %v2849, 7
    %v2881 = vrot.slane %v2880, 2
    %v2882 = vrot.slane %v2848, 7
    %v2883 = vrot.slane %v2882, 2
    %v2884 = vrot.slane %v2850, 7
    %v2885 = vrot.slane %v2884, 2
    %v2886 = vrot.slane %v2858, 7
    %v2887 = vrot.slane %v2886, 2
    %v2888 = vrot.slane %v2859, 7
    %v2889 = vrot.slane %v2888, 2
    %v2900 = vmax.f32 %v2823, %v2871
    %v2901 = vmax.f32 %v2831, %v2873
    %v2902 = vmax.f32 %v2830, %v2875
    %v2903 = vmax.f32 %v2832, %v2877
    %v2904 = vmax.f32 %v2841, %v2879
    %v2905 = vmax.f32 %v2849, %v2881
    %v2906 = vmax.f32 %v2848, %v2883
    %v2907 = vmax.f32 %v2850, %v2885
    %v2908 = vmax.f32 %v2858, %v2887
    %v2909 = vmax.f32 %v2859, %v2889
    %v2910 = vld [vmem:[%s7] sm:$0xff]
    %v2911 = vld [vmem:[%s7 + $0x8] sm:$0xff]
    %v2912 = vld [vmem:[%s7 + $0x10] sm:$0xff]
    %v2913 = vld [vmem:[%s7 + $0x18] sm:$0xff]
    %v2914 = vld [vmem:[%s7 + $0x20] sm:$0xff]
    %v2915 = vld [vmem:[%s7 + $0x28] sm:$0xff]
    %v2916 = vld [vmem:[%s7 + $0x30] sm:$0xff]
    %v2917 = vld [vmem:[%s7 + $0x38] sm:$0xff]
    %v2918 = vld [vmem:[%s7 + $0x40] sm:$0xff]
    %v2919 = vld [vmem:[%s7 + $0x48] sm:$0xff]
    %v2920 = vld [vmem:[%s7 + $0x50] sm:$0xff]
    %v2921 = vld [vmem:[%s7 + $0x58] sm:$0xff]
    %v2922 = vld [vmem:[%s7 + $0x60] sm:$0xff]
    %v2923 = vld [vmem:[%s7 + $0x68] sm:$0xff]
    %v2924 = vld [vmem:[%s7 + $0x70] sm:$0xff]
    %v2925 = vld [vmem:[%s7 + $0x78] sm:$0xff]
    %v2926 = vld [vmem:[%s7 + $0x80] sm:$0xff]
    %v2927 = vld [vmem:[%s7 + $0x88] sm:$0xff]
    %v2928 = vld [vmem:[%s7 + $0x90] sm:$0xff]
    %v2929 = vld [vmem:[%s7 + $0x98] sm:$0xff]
    %v2940 = vlaneseq
    %v2941 = vshrl.u32 %v2940, 7
    %v2942 = vsub.s32 0, %v2941
    %v2943 = vrot.slane %v2900, %v2942
    %v2944 = vlaneseq
    %v2945 = vshrl.u32 %v2944, 7
    %v2946 = vsub.s32 2, %v2945
    %v2947 = vrot.slane %v2900, %v2946
    %v2948 = vlaneseq
    %v2949 = vshrl.u32 %v2948, 7
    %v2950 = vsub.s32 0, %v2949
    %v2951 = vrot.slane %v2901, %v2950
    %v2952 = vlaneseq
    %v2953 = vshrl.u32 %v2952, 7
    %v2954 = vsub.s32 2, %v2953
    %v2955 = vrot.slane %v2901, %v2954
    %v2956 = vlaneseq
    %v2957 = vshrl.u32 %v2956, 7
    %v2958 = vsub.s32 0, %v2957
    %v2959 = vrot.slane %v2902, %v2958
    %v2960 = vlaneseq
    %v2961 = vshrl.u32 %v2960, 7
    %v2962 = vsub.s32 2, %v2961
    %v2963 = vrot.slane %v2902, %v2962
    %v2964 = vlaneseq
    %v2965 = vshrl.u32 %v2964, 7
    %v2966 = vsub.s32 0, %v2965
    %v2967 = vrot.slane %v2903, %v2966
    %v2968 = vlaneseq
    %v2969 = vshrl.u32 %v2968, 7
    %v2970 = vsub.s32 2, %v2969
    %v2971 = vrot.slane %v2903, %v2970
    %v2972 = vlaneseq
    %v2973 = vshrl.u32 %v2972, 7
    %v2974 = vsub.s32 0, %v2973
    %v2975 = vrot.slane %v2904, %v2974
    %v2976 = vlaneseq
    %v2977 = vshrl.u32 %v2976, 7
    %v2978 = vsub.s32 2, %v2977
    %v2979 = vrot.slane %v2904, %v2978
    %v2980 = vlaneseq
    %v2981 = vshrl.u32 %v2980, 7
    %v2982 = vsub.s32 0, %v2981
    %v2983 = vrot.slane %v2905, %v2982
    %v2984 = vlaneseq
    %v2985 = vshrl.u32 %v2984, 7
    %v2986 = vsub.s32 2, %v2985
    %v2987 = vrot.slane %v2905, %v2986
    %v2988 = vlaneseq
    %v2989 = vshrl.u32 %v2988, 7
    %v2990 = vsub.s32 0, %v2989
    %v2991 = vrot.slane %v2906, %v2990
    %v2992 = vlaneseq
    %v2993 = vshrl.u32 %v2992, 7
    %v2994 = vsub.s32 2, %v2993
    %v2995 = vrot.slane %v2906, %v2994
    %v2996 = vlaneseq
    %v2997 = vshrl.u32 %v2996, 7
    %v2998 = vsub.s32 0, %v2997
    %v2999 = vrot.slane %v2907, %v2998
    %v3000 = vlaneseq
    %v3001 = vshrl.u32 %v3000, 7
    %v3002 = vsub.s32 2, %v3001
    %v3003 = vrot.slane %v2907, %v3002
    %v3004 = vlaneseq
    %v3005 = vshrl.u32 %v3004, 7
    %v3006 = vsub.s32 0, %v3005
    %v3007 = vrot.slane %v2908, %v3006
    %v3008 = vlaneseq
    %v3009 = vshrl.u32 %v3008, 7
    %v3010 = vsub.s32 2, %v3009
    %v3011 = vrot.slane %v2908, %v3010
    %v3012 = vlaneseq
    %v3013 = vshrl.u32 %v3012, 7
    %v3014 = vsub.s32 0, %v3013
    %v3015 = vrot.slane %v2909, %v3014
    %v3016 = vlaneseq
    %v3017 = vshrl.u32 %v3016, 7
    %v3018 = vsub.s32 2, %v3017
    %v3019 = vrot.slane %v2909, %v3018
    %v3020 = vsel %vm1616, %v2951, %v2943
    %v3021 = vsel %vm1618, %v2959, %v3020
    %v3022 = vsel %vm1620, %v2967, %v3021
    %v3023 = vsel %vm643, %v2975, %v3022
    %v3024 = vsel %vm1623, %v2983, %v3023
    %v3025 = vsel %vm1625, %v2991, %v3024
    %v3026 = vsel %vm1627, %v2999, %v3025
    %v3027 = vsel %vm1616, %v2955, %v2947
    %v3028 = vsel %vm1618, %v2963, %v3027
    %v3029 = vsel %vm1620, %v2971, %v3028
    %v3030 = vsel %vm643, %v2979, %v3029
    %v3031 = vsel %vm1623, %v2987, %v3030
    %v3032 = vsel %vm1625, %v2995, %v3031
    %v3033 = vsel %vm1627, %v3003, %v3032
    %v3034 = vsel %vm1616, %v3015, %v3007
    %v3035 = vsel %vm1616, %v3019, %v3011
    %vm3038 = vcmask 261120
    %v3039 = vsel %vm3038, %v3033, 0
    %v3041 = vsel %vm3038, %v3035, 0
    %3043 = vmatprep.subr.mxu0 0.0
    %3044 = vmatpush1.msra.mxu0 %v2925
    %3045 = vmatprep.subr.mxu0 0.0
    %3046 = vmatpush1.msra.mxu0 %v2924
    %3047 = vmatprep.subr.mxu0 0.0
    %3048 = vmatpush1.msra.mxu0 %v2923
    %3049 = vmatprep.subr.mxu0 0.0
    %3050 = vmatpush1.msra.mxu0 %v2922
    %3051 = vmatprep.subr.mxu0 0.0
    %3052 = vmatpush1.msra.mxu0 %v2921
    %3053 = vmatprep.subr.mxu0 0.0
    %3054 = vmatpush1.msra.mxu0 %v2920
    %3055 = vmatprep.subr.mxu0 0.0
    %3056 = vmatpush1.msra.mxu0 %v2919
    %3057 = vmatprep.subr.mxu0 0.0
    %3058 = vmatpush1.msra.mxu0 %v2918
    %3059 = vmatprep.subr.mxu0 0.0
    %3060 = vmatpush1.msra.mxu0 %v2917
    %3061 = vmatprep.subr.mxu0 0.0
    %3062 = vmatpush1.msra.mxu0 %v2916
    %3063 = vmatprep.subr.mxu0 0.0
    %3064 = vmatpush1.msra.mxu0 %v2915
    %3065 = vmatprep.subr.mxu0 0.0
    %3066 = vmatpush1.msra.mxu0 %v2914
    %3067 = vmatprep.subr.mxu0 0.0
    %3068 = vmatpush1.msra.mxu0 %v2913
    %3069 = vmatprep.subr.mxu0 0.0
    %3070 = vmatpush1.msra.mxu0 %v2912
    %3071 = vmatprep.subr.mxu0 0.0
    %3072 = vmatpush1.msra.mxu0 %v2911
    %3073 = vmatprep.subr.mxu0 0.0
    %3074 = vmatpush1.msra.mxu0 %v2910
    %3075 = vmatprep.subr.mxu0 0.0
    %3076 = vmatpush2.msra.mxu0 0.0
    %3077 = vmatprep.subr.mxu0 0.0
    %3078 = vmatpush2.msra.mxu0 0.0
    %3079 = vmatprep.subr.mxu0 0.0
    %3080 = vmatpush2.msra.mxu0 0.0
    %3081 = vmatprep.subr.mxu0 0.0
    %3082 = vmatpush2.msra.mxu0 0.0
    %3083 = vmatprep.subr.mxu0 0.0
    %3084 = vmatpush2.msra.mxu0 0.0
    %3085 = vmatprep.subr.mxu0 0.0
    %3086 = vmatpush2.msra.mxu0 0.0
    %3087 = vmatprep.subr.mxu0 0.0
    %3088 = vmatpush2.msra.mxu0 0.0
    %3089 = vmatprep.subr.mxu0 0.0
    %3090 = vmatpush2.msra.mxu0 0.0
    %3091 = vmatprep.subr.mxu0 0.0
    %3092 = vmatpush2.msra.mxu0 0.0
    %3093 = vmatprep.subr.mxu0 0.0
    %3094 = vmatpush2.msra.mxu0 0.0
    %3095 = vmatprep.subr.mxu0 0.0
    %3096 = vmatpush2.msra.mxu0 0.0
    %3097 = vmatprep.subr.mxu0 0.0
    %3098 = vmatpush2.msra.mxu0 0.0
    %3099 = vmatprep.subr.mxu0 0.0
    %3100 = vmatpush2.msra.mxu0 %v2929
    %3101 = vmatprep.subr.mxu0 0.0
    %3102 = vmatpush2.msra.mxu0 %v2928
    %3103 = vmatprep.subr.mxu0 0.0
    %3104 = vmatpush2.msra.mxu0 %v2927
    %3105 = vmatprep.subr.mxu0 0.0
    %3106 = vmatpush2.msra.mxu0 %v2926
    %3107 = vmatprep.mubr.f32.mxu0 %v3039
    %3108 = vmatmul.mubr.f32.gmra.mxu0 %v3026
    %v3109 = vpop.f32.mrf.mxu0
    %v3110 = vadd.f32 0.0, %v3109
    %v3111 = vpop.f32.mrf.mxu0
    %3112 = vmatprep.mubr.f32.mxu0 %v3041
    %3113 = vmatmul.mubr.f32.gmra.mxu0 %v3034
    %v3114 = vpop.f32.mrf.mxu0
    %v3115 = vadd.f32 0.0, %v3114
    %v3116 = vpop.f32.mrf.mxu0
    %3117 = vdwg.mxu0
    %v3118 = vld [vmem:[%s8] sm:$0xff]
    %v3119 = vld [vmem:[%s8 + $0x8] sm:$0xff]
    %v3120 = vld [vmem:[%s8 + $0x10] sm:$0xff]
    %v3121 = vld [vmem:[%s8 + $0x18] sm:$0xff]
    %v3122 = vld [vmem:[%s8 + $0x20] sm:$0xff]
    %v3123 = vld [vmem:[%s8 + $0x28] sm:$0xff]
    %v3124 = vld [vmem:[%s8 + $0x30] sm:$0xff]
    %v3125 = vld [vmem:[%s8 + $0x38] sm:$0xff]
    %v3126 = vld [vmem:[%s8 + $0x40] sm:$0xff]
    %v3127 = vld [vmem:[%s8 + $0x48] sm:$0xff]
    %v3128 = vld [vmem:[%s8 + $0x50] sm:$0xff]
    %v3129 = vld [vmem:[%s8 + $0x58] sm:$0xff]
    %v3130 = vld [vmem:[%s8 + $0x60] sm:$0xff]
    %v3131 = vld [vmem:[%s8 + $0x68] sm:$0xff]
    %v3132 = vld [vmem:[%s8 + $0x70] sm:$0xff]
    %v3133 = vld [vmem:[%s8 + $0x78] sm:$0xff]
    %v3134 = vld [vmem:[%s8 + $0x80] sm:$0xff]
    %v3135 = vld [vmem:[%s8 + $0x88] sm:$0xff]
    %v3136 = vld [vmem:[%s8 + $0x90] sm:$0xff]
    %v3137 = vld [vmem:[%s8 + $0x98] sm:$0xff]
    %3138 = vmatprep.subr.mxu0 0.0
    %3139 = vmatpush1.msra.mxu0 %v3133
    %3140 = vmatprep.subr.mxu0 0.0
    %3141 = vmatpush1.msra.mxu0 %v3132
    %3142 = vmatprep.subr.mxu0 0.0
    %3143 = vmatpush1.msra.mxu0 %v3131
    %3144 = vmatprep.subr.mxu0 0.0
    %3145 = vmatpush1.msra.mxu0 %v3130
    %3146 = vmatprep.subr.mxu0 0.0
    %3147 = vmatpush1.msra.mxu0 %v3129
    %3148 = vmatprep.subr.mxu0 0.0
    %3149 = vmatpush1.msra.mxu0 %v3128
    %3150 = vmatprep.subr.mxu0 0.0
    %3151 = vmatpush1.msra.mxu0 %v3127
    %3152 = vmatprep.subr.mxu0 0.0
    %3153 = vmatpush1.msra.mxu0 %v3126
    %3154 = vmatprep.subr.mxu0 0.0
    %3155 = vmatpush1.msra.mxu0 %v3125
    %3156 = vmatprep.subr.mxu0 0.0
    %3157 = vmatpush1.msra.mxu0 %v3124
    %3158 = vmatprep.subr.mxu0 0.0
    %3159 = vmatpush1.msra.mxu0 %v3123
    %3160 = vmatprep.subr.mxu0 0.0
    %3161 = vmatpush1.msra.mxu0 %v3122
    %3162 = vmatprep.subr.mxu0 0.0
    %3163 = vmatpush1.msra.mxu0 %v3121
    %3164 = vmatprep.subr.mxu0 0.0
    %3165 = vmatpush1.msra.mxu0 %v3120
    %3166 = vmatprep.subr.mxu0 0.0
    %3167 = vmatpush1.msra.mxu0 %v3119
    %3168 = vmatprep.subr.mxu0 0.0
    %3169 = vmatpush1.msra.mxu0 %v3118
    %3170 = vmatprep.subr.mxu0 0.0
    %3171 = vmatpush2.msra.mxu0 0.0
    %3172 = vmatprep.subr.mxu0 0.0
    %3173 = vmatpush2.msra.mxu0 0.0
    %3174 = vmatprep.subr.mxu0 0.0
    %3175 = vmatpush2.msra.mxu0 0.0
    %3176 = vmatprep.subr.mxu0 0.0
    %3177 = vmatpush2.msra.mxu0 0.0
    %3178 = vmatprep.subr.mxu0 0.0
    %3179 = vmatpush2.msra.mxu0 0.0
    %3180 = vmatprep.subr.mxu0 0.0
    %3181 = vmatpush2.msra.mxu0 0.0
    %3182 = vmatprep.subr.mxu0 0.0
    %3183 = vmatpush2.msra.mxu0 0.0
    %3184 = vmatprep.subr.mxu0 0.0
    %3185 = vmatpush2.msra.mxu0 0.0
    %3186 = vmatprep.subr.mxu0 0.0
    %3187 = vmatpush2.msra.mxu0 0.0
    %3188 = vmatprep.subr.mxu0 0.0
    %3189 = vmatpush2.msra.mxu0 0.0
    %3190 = vmatprep.subr.mxu0 0.0
    %3191 = vmatpush2.msra.mxu0 0.0
    %3192 = vmatprep.subr.mxu0 0.0
    %3193 = vmatpush2.msra.mxu0 0.0
    %3194 = vmatprep.subr.mxu0 0.0
    %3195 = vmatpush2.msra.mxu0 %v3137
    %3196 = vmatprep.subr.mxu0 0.0
    %3197 = vmatpush2.msra.mxu0 %v3136
    %3198 = vmatprep.subr.mxu0 0.0
    %3199 = vmatpush2.msra.mxu0 %v3135
    %3200 = vmatprep.subr.mxu0 0.0
    %3201 = vmatpush2.msra.mxu0 %v3134
    %3202 = vmatprep.mubr.f32.mxu0 %v3039
    %3203 = vmatmul.mubr.f32.gmra.mxu0 %v3026
    %v3204 = vpop.f32.mrf.mxu0
    %v3205 = vadd.f32 0.0, %v3204
    %v3206 = vpop.f32.mrf.mxu0
    %3207 = vmatprep.mubr.f32.mxu0 %v3041
    %3208 = vmatmul.mubr.f32.gmra.mxu0 %v3034
    %v3209 = vpop.f32.mrf.mxu0
    %v3210 = vadd.f32 0.0, %v3209
    %v3211 = vpop.f32.mrf.mxu0
    %3212 = vdwg.mxu0
    %v3213 = vmax.f32 %v3110, %v3205
    %v3214 = vmax.f32 %v3115, %v3210
    %v3217 = vcombine.high %v3213, %v3213
    %v3219 = vunpack.c.l.s4 1966171168
    %v3220 = vunpack.c.0.s8 %v3219
    %v3221 = vlaneseq
    %v3222 = vshrl.u32 %v3221, 7
    %v3223 = vsub.s32 %v3220, %v3222
    %v3224 = vrot.slane %v3213, %v3223
    %v3226 = vunpack.c.l.s4 1966171168
    %v3227 = vunpack.c.0.s8 %v3226
    %v3228 = vlaneseq
    %v3229 = vshrl.u32 %v3228, 7
    %v3230 = vsub.s32 %v3227, %v3229
    %v3231 = vrot.slane %v3217, %v3230
    %v3232 = vcombine.high %v3224, %v3224
    %v3233 = vcombine.high %v3231, %v3231
    %v3235 = vunpack.c.l.s4 1966171168
    %v3236 = vunpack.c.0.s8 %v3235
    %v3237 = vlaneseq
    %v3238 = vshrl.u32 %v3237, 7
    %v3239 = vsub.s32 %v3236, %v3238
    %v3240 = vrot.slane %v3224, %v3239
    %v3242 = vunpack.c.l.s4 1966171168
    %v3243 = vunpack.c.0.s8 %v3242
    %v3244 = vlaneseq
    %v3245 = vshrl.u32 %v3244, 7
    %v3246 = vsub.s32 %v3243, %v3245
    %v3247 = vrot.slane %v3231, %v3246
    %v3249 = vunpack.c.l.s4 1966171168
    %v3250 = vunpack.c.0.s8 %v3249
    %v3251 = vlaneseq
    %v3252 = vshrl.u32 %v3251, 7
    %v3253 = vsub.s32 %v3250, %v3252
    %v3254 = vrot.slane %v3232, %v3253
    %v3256 = vunpack.c.l.s4 1966171168
    %v3257 = vunpack.c.0.s8 %v3256
    %v3258 = vlaneseq
    %v3259 = vshrl.u32 %v3258, 7
    %v3260 = vsub.s32 %v3257, %v3259
    %v3261 = vrot.slane %v3233, %v3260
    %v3262 = vcombine.high %v3240, %v3240
    %v3263 = vcombine.high %v3247, %v3247
    %v3264 = vcombine.high %v3254, %v3254
    %v3265 = vcombine.high %v3261, %v3261
    %v3267 = vunpack.c.l.s4 1966171168
    %v3268 = vunpack.c.0.s8 %v3267
    %v3269 = vlaneseq
    %v3270 = vshrl.u32 %v3269, 7
    %v3271 = vsub.s32 %v3268, %v3270
    %v3272 = vrot.slane %v3214, %v3271
    %v3273 = vcombine.high %v3272, %v3272
    %v3275 = vunpack.c.l.s4 1966171168
    %v3276 = vunpack.c.0.s8 %v3275
    %v3277 = vlaneseq
    %v3278 = vshrl.u32 %v3277, 7
    %v3279 = vsub.s32 %v3276, %v3278
    %v3280 = vrot.slane %v3272, %v3279
    %v3282 = vunpack.c.l.s4 1966171168
    %v3283 = vunpack.c.0.s8 %v3282
    %v3284 = vlaneseq
    %v3285 = vshrl.u32 %v3284, 7
    %v3286 = vsub.s32 %v3283, %v3285
    %v3287 = vrot.slane %v3273, %v3286
    %v3288 = vld [vmem:[%s9] sm:$0xff]
    %v3289 = vld [vmem:[%s9 + $0x8] sm:$0xff]
    %v3290 = vld [vmem:[%s9 + $0x10] sm:$0xff]
    %v3291 = vld [vmem:[%s9 + $0x18] sm:$0xff]
    %v3292 = vld [vmem:[%s9 + $0x20] sm:$0xff]
    %v3293 = vld [vmem:[%s9 + $0x28] sm:$0xff]
    %v3294 = vld [vmem:[%s9 + $0x30] sm:$0xff]
    %v3295 = vld [vmem:[%s9 + $0x38] sm:$0xff]
    %v3296 = vld [vmem:[%s9 + $0x40] sm:$0xff]
    %v3297 = vld [vmem:[%s9 + $0x48] sm:$0xff]
    %s3298 = scalar_lea.vmem %s9, 80
    %v3299 = vld [vmem:[%s3298] sm:$0xff]
    %v3300 = vld [vmem:[%s3298 + $0x8] sm:$0xff]
    %v3301 = vld [vmem:[%s3298 + $0x10] sm:$0xff]
    %v3302 = vld [vmem:[%s3298 + $0x18] sm:$0xff]
    %v3303 = vld [vmem:[%s3298 + $0x20] sm:$0xff]
    %v3304 = vld [vmem:[%s3298 + $0x28] sm:$0xff]
    %v3305 = vld [vmem:[%s3298 + $0x30] sm:$0xff]
    %v3306 = vld [vmem:[%s3298 + $0x38] sm:$0xff]
    %v3307 = vld [vmem:[%s3298 + $0x40] sm:$0xff]
    %v3308 = vld [vmem:[%s3298 + $0x48] sm:$0xff]
    %v3309 = vcombine.low %v3254, %v3263
    %v3311 = vunpack.c.l.s4 1966171168
    %v3312 = vunpack.c.0.s8 %v3311
    %v3313 = vlaneseq
    %v3314 = vshrl.u32 %v3313, 7
    %v3315 = vsub.s32 %v3312, %v3314
    %v3316 = vrot.slane %v3309, %v3315
    %v3318 = vunpack.c.l.s4 1966171168
    %v3319 = vunpack.c.0.s8 %v3318
    %v3320 = vlaneseq
    %v3321 = vshrl.u32 %v3320, 7
    %v3322 = vsub.s32 %v3319, %v3321
    %v3323 = vrot.slane %v3316, %v3322
    %vm3324 = vcmask 654336
    %v3325 = vsel %vm3324, %v3323, 0
    %3327 = vmatprep.subr.mxu0 0.0
    %3328 = vmatpush1.msra.mxu0 0.0
    %3329 = vmatprep.subr.mxu0 0.0
    %3330 = vmatpush1.msra.mxu0 0.0
    %3331 = vmatprep.subr.mxu0 0.0
    %3332 = vmatpush1.msra.mxu0 0.0
    %3333 = vmatprep.subr.mxu0 0.0
    %3334 = vmatpush1.msra.mxu0 0.0
    %3335 = vmatprep.subr.mxu0 0.0
    %3336 = vmatpush1.msra.mxu0 0.0
    %3337 = vmatprep.subr.mxu0 0.0
    %3338 = vmatpush1.msra.mxu0 0.0
    %3339 = vmatprep.subr.mxu0 0.0
    %3340 = vmatpush1.msra.mxu0 %v3308
    %3341 = vmatprep.subr.mxu0 0.0
    %3342 = vmatpush1.msra.mxu0 %v3307
    %3343 = vmatprep.subr.mxu0 0.0
    %3344 = vmatpush1.msra.mxu0 %v3306
    %3345 = vmatprep.subr.mxu0 0.0
    %3346 = vmatpush1.msra.mxu0 %v3305
    %3347 = vmatprep.subr.mxu0 0.0
    %3348 = vmatpush1.msra.mxu0 %v3304
    %3349 = vmatprep.subr.mxu0 0.0
    %3350 = vmatpush1.msra.mxu0 %v3303
    %3351 = vmatprep.subr.mxu0 0.0
    %3352 = vmatpush1.msra.mxu0 %v3302
    %3353 = vmatprep.subr.mxu0 0.0
    %3354 = vmatpush1.msra.mxu0 %v3301
    %3355 = vmatprep.subr.mxu0 0.0
    %3356 = vmatpush1.msra.mxu0 %v3300
    %3357 = vmatprep.subr.mxu0 0.0
    %3358 = vmatpush1.msra.mxu0 %v3299
    %3359 = vmatprep.subr.mxu0 0.0
    %3360 = vmatpush2.msra.mxu0 0.0
    %3361 = vmatprep.subr.mxu0 0.0
    %3362 = vmatpush2.msra.mxu0 0.0
    %3363 = vmatprep.subr.mxu0 0.0
    %3364 = vmatpush2.msra.mxu0 0.0
    %3365 = vmatprep.subr.mxu0 0.0
    %3366 = vmatpush2.msra.mxu0 0.0
    %3367 = vmatprep.subr.mxu0 0.0
    %3368 = vmatpush2.msra.mxu0 0.0
    %3369 = vmatprep.subr.mxu0 0.0
    %3370 = vmatpush2.msra.mxu0 0.0
    %3371 = vmatprep.subr.mxu0 0.0
    %3372 = vmatpush2.msra.mxu0 0.0
    %3373 = vmatprep.subr.mxu0 0.0
    %3374 = vmatpush2.msra.mxu0 0.0
    %3375 = vmatprep.subr.mxu0 0.0
    %3376 = vmatpush2.msra.mxu0 0.0
    %3377 = vmatprep.subr.mxu0 0.0
    %3378 = vmatpush2.msra.mxu0 0.0
    %3379 = vmatprep.subr.mxu0 0.0
    %3380 = vmatpush2.msra.mxu0 0.0
    %3381 = vmatprep.subr.mxu0 0.0
    %3382 = vmatpush2.msra.mxu0 0.0
    %3383 = vmatprep.subr.mxu0 0.0
    %3384 = vmatpush2.msra.mxu0 0.0
    %3385 = vmatprep.subr.mxu0 0.0
    %3386 = vmatpush2.msra.mxu0 0.0
    %3387 = vmatprep.subr.mxu0 0.0
    %3388 = vmatpush2.msra.mxu0 0.0
    %3389 = vmatprep.subr.mxu0 0.0
    %3390 = vmatpush2.msra.mxu0 0.0
    %3391 = vmatprep.mubr.f32.mxu0 0.0
    %3392 = vmatmul.mubr.f32.gmra.mxu0 %v3325
    %v3393 = vpop.f32.mrf.mxu0
    %v3394 = vadd.f32 0.0, %v3393
    %v3395 = vpop.f32.mrf.mxu0
    %3396 = vdwg.mxu0
    %v3397 = vcombine.low %v3240, %v3261
    %v3399 = vunpack.c.l.s4 1966171168
    %v3400 = vunpack.c.0.s8 %v3399
    %v3401 = vlaneseq
    %v3402 = vshrl.u32 %v3401, 7
    %v3403 = vsub.s32 %v3400, %v3402
    %v3404 = vrot.slane %v3397, %v3403
    %v3406 = vunpack.c.l.s4 1966171168
    %v3407 = vunpack.c.0.s8 %v3406
    %v3408 = vlaneseq
    %v3409 = vshrl.u32 %v3408, 7
    %v3410 = vsub.s32 %v3407, %v3409
    %v3411 = vrot.slane %v3404, %v3410
    %v3412 = vsel %vm3324, %v3411, 0
    %3414 = vmatprep.subr.mxu0 0.0
    %3415 = vmatpush1.msra.mxu0 0.0
    %3416 = vmatprep.subr.mxu0 0.0
    %3417 = vmatpush1.msra.mxu0 0.0
    %3418 = vmatprep.subr.mxu0 0.0
    %3419 = vmatpush1.msra.mxu0 0.0
    %3420 = vmatprep.subr.mxu0 0.0
    %3421 = vmatpush1.msra.mxu0 0.0
    %3422 = vmatprep.subr.mxu0 0.0
    %3423 = vmatpush1.msra.mxu0 0.0
    %3424 = vmatprep.subr.mxu0 0.0
    %3425 = vmatpush1.msra.mxu0 0.0
    %3426 = vmatprep.subr.mxu0 0.0
    %3427 = vmatpush1.msra.mxu0 %v3297
    %3428 = vmatprep.subr.mxu0 0.0
    %3429 = vmatpush1.msra.mxu0 %v3296
    %3430 = vmatprep.subr.mxu0 0.0
    %3431 = vmatpush1.msra.mxu0 %v3295
    %3432 = vmatprep.subr.mxu0 0.0
    %3433 = vmatpush1.msra.mxu0 %v3294
    %3434 = vmatprep.subr.mxu0 0.0
    %3435 = vmatpush1.msra.mxu0 %v3293
    %3436 = vmatprep.subr.mxu0 0.0
    %3437 = vmatpush1.msra.mxu0 %v3292
    %3438 = vmatprep.subr.mxu0 0.0
    %3439 = vmatpush1.msra.mxu0 %v3291
    %3440 = vmatprep.subr.mxu0 0.0
    %3441 = vmatpush1.msra.mxu0 %v3290
    %3442 = vmatprep.subr.mxu0 0.0
    %3443 = vmatpush1.msra.mxu0 %v3289
    %3444 = vmatprep.subr.mxu0 0.0
    %3445 = vmatpush1.msra.mxu0 %v3288
    %3446 = vmatprep.subr.mxu0 0.0
    %3447 = vmatpush2.msra.mxu0 0.0
    %3448 = vmatprep.subr.mxu0 0.0
    %3449 = vmatpush2.msra.mxu0 0.0
    %3450 = vmatprep.subr.mxu0 0.0
    %3451 = vmatpush2.msra.mxu0 0.0
    %3452 = vmatprep.subr.mxu0 0.0
    %3453 = vmatpush2.msra.mxu0 0.0
    %3454 = vmatprep.subr.mxu0 0.0
    %3455 = vmatpush2.msra.mxu0 0.0
    %3456 = vmatprep.subr.mxu0 0.0
    %3457 = vmatpush2.msra.mxu0 0.0
    %3458 = vmatprep.subr.mxu0 0.0
    %3459 = vmatpush2.msra.mxu0 0.0
    %3460 = vmatprep.subr.mxu0 0.0
    %3461 = vmatpush2.msra.mxu0 0.0
    %3462 = vmatprep.subr.mxu0 0.0
    %3463 = vmatpush2.msra.mxu0 0.0
    %3464 = vmatprep.subr.mxu0 0.0
    %3465 = vmatpush2.msra.mxu0 0.0
    %3466 = vmatprep.subr.mxu0 0.0
    %3467 = vmatpush2.msra.mxu0 0.0
    %3468 = vmatprep.subr.mxu0 0.0
    %3469 = vmatpush2.msra.mxu0 0.0
    %3470 = vmatprep.subr.mxu0 0.0
    %3471 = vmatpush2.msra.mxu0 0.0
    %3472 = vmatprep.subr.mxu0 0.0
    %3473 = vmatpush2.msra.mxu0 0.0
    %3474 = vmatprep.subr.mxu0 0.0
    %3475 = vmatpush2.msra.mxu0 0.0
    %3476 = vmatprep.subr.mxu0 0.0
    %3477 = vmatpush2.msra.mxu0 0.0
    %3478 = vmatprep.mubr.f32.mxu0 0.0
    %3479 = vmatmul.mubr.f32.gmra.mxu0 %v3412
    %v3480 = vpop.f32.mrf.mxu0
    %v3481 = vadd.f32 %v3394, %v3480
    %v3482 = vpop.f32.mrf.mxu0
    %3483 = vdwg.mxu0
    %s3484 = scalar_lea.vmem %s9, 160
    %v3485 = vld [vmem:[%s3484] sm:$0xff]
    %v3486 = vld [vmem:[%s3484 + $0x8] sm:$0xff]
    %v3487 = vld [vmem:[%s3484 + $0x10] sm:$0xff]
    %v3488 = vld [vmem:[%s3484 + $0x18] sm:$0xff]
    %v3489 = vld [vmem:[%s3484 + $0x20] sm:$0xff]
    %v3490 = vld [vmem:[%s3484 + $0x28] sm:$0xff]
    %v3491 = vld [vmem:[%s3484 + $0x30] sm:$0xff]
    %v3492 = vld [vmem:[%s3484 + $0x38] sm:$0xff]
    %v3493 = vld [vmem:[%s3484 + $0x40] sm:$0xff]
    %v3494 = vld [vmem:[%s3484 + $0x48] sm:$0xff]
    %v3495 = vcombine.low %v3262, %v3265
    %v3497 = vunpack.c.l.s4 1966171168
    %v3498 = vunpack.c.0.s8 %v3497
    %v3499 = vlaneseq
    %v3500 = vshrl.u32 %v3499, 7
    %v3501 = vsub.s32 %v3498, %v3500
    %v3502 = vrot.slane %v3495, %v3501
    %v3504 = vunpack.c.l.s4 1966171168
    %v3505 = vunpack.c.0.s8 %v3504
    %v3506 = vlaneseq
    %v3507 = vshrl.u32 %v3506, 7
    %v3508 = vsub.s32 %v3505, %v3507
    %v3509 = vrot.slane %v3502, %v3508
    %v3510 = vsel %vm3324, %v3509, 0
    %3512 = vmatprep.subr.mxu0 0.0
    %3513 = vmatpush1.msra.mxu0 0.0
    %3514 = vmatprep.subr.mxu0 0.0
    %3515 = vmatpush1.msra.mxu0 0.0
    %3516 = vmatprep.subr.mxu0 0.0
    %3517 = vmatpush1.msra.mxu0 0.0
    %3518 = vmatprep.subr.mxu0 0.0
    %3519 = vmatpush1.msra.mxu0 0.0
    %3520 = vmatprep.subr.mxu0 0.0
    %3521 = vmatpush1.msra.mxu0 0.0
    %3522 = vmatprep.subr.mxu0 0.0
    %3523 = vmatpush1.msra.mxu0 0.0
    %3524 = vmatprep.subr.mxu0 0.0
    %3525 = vmatpush1.msra.mxu0 %v3494
    %3526 = vmatprep.subr.mxu0 0.0
    %3527 = vmatpush1.msra.mxu0 %v3493
    %3528 = vmatprep.subr.mxu0 0.0
    %3529 = vmatpush1.msra.mxu0 %v3492
    %3530 = vmatprep.subr.mxu0 0.0
    %3531 = vmatpush1.msra.mxu0 %v3491
    %3532 = vmatprep.subr.mxu0 0.0
    %3533 = vmatpush1.msra.mxu0 %v3490
    %3534 = vmatprep.subr.mxu0 0.0
    %3535 = vmatpush1.msra.mxu0 %v3489
    %3536 = vmatprep.subr.mxu0 0.0
    %3537 = vmatpush1.msra.mxu0 %v3488
    %3538 = vmatprep.subr.mxu0 0.0
    %3539 = vmatpush1.msra.mxu0 %v3487
    %3540 = vmatprep.subr.mxu0 0.0
    %3541 = vmatpush1.msra.mxu0 %v3486
    %3542 = vmatprep.subr.mxu0 0.0
    %3543 = vmatpush1.msra.mxu0 %v3485
    %3544 = vmatprep.subr.mxu0 0.0
    %3545 = vmatpush2.msra.mxu0 0.0
    %3546 = vmatprep.subr.mxu0 0.0
    %3547 = vmatpush2.msra.mxu0 0.0
    %3548 = vmatprep.subr.mxu0 0.0
    %3549 = vmatpush2.msra.mxu0 0.0
    %3550 = vmatprep.subr.mxu0 0.0
    %3551 = vmatpush2.msra.mxu0 0.0
    %3552 = vmatprep.subr.mxu0 0.0
    %3553 = vmatpush2.msra.mxu0 0.0
    %3554 = vmatprep.subr.mxu0 0.0
    %3555 = vmatpush2.msra.mxu0 0.0
    %3556 = vmatprep.subr.mxu0 0.0
    %3557 = vmatpush2.msra.mxu0 0.0
    %3558 = vmatprep.subr.mxu0 0.0
    %3559 = vmatpush2.msra.mxu0 0.0
    %3560 = vmatprep.subr.mxu0 0.0
    %3561 = vmatpush2.msra.mxu0 0.0
    %3562 = vmatprep.subr.mxu0 0.0
    %3563 = vmatpush2.msra.mxu0 0.0
    %3564 = vmatprep.subr.mxu0 0.0
    %3565 = vmatpush2.msra.mxu0 0.0
    %3566 = vmatprep.subr.mxu0 0.0
    %3567 = vmatpush2.msra.mxu0 0.0
    %3568 = vmatprep.subr.mxu0 0.0
    %3569 = vmatpush2.msra.mxu0 0.0
    %3570 = vmatprep.subr.mxu0 0.0
    %3571 = vmatpush2.msra.mxu0 0.0
    %3572 = vmatprep.subr.mxu0 0.0
    %3573 = vmatpush2.msra.mxu0 0.0
    %3574 = vmatprep.subr.mxu0 0.0
    %3575 = vmatpush2.msra.mxu0 0.0
    %3576 = vmatprep.mubr.f32.mxu0 0.0
    %3577 = vmatmul.mubr.f32.gmra.mxu0 %v3510
    %v3578 = vpop.f32.mrf.mxu0
    %v3579 = vadd.f32 0.0, %v3578
    %v3580 = vpop.f32.mrf.mxu0
    %3581 = vdwg.mxu0
    %v3582 = vadd.f32 %v3481, %v3579
    %s3583 = scalar_lea.vmem %s9, 240
    %v3584 = vld [vmem:[%s3583] sm:$0xff]
    %v3585 = vld [vmem:[%s3583 + $0x8] sm:$0xff]
    %v3586 = vld [vmem:[%s3583 + $0x10] sm:$0xff]
    %v3587 = vld [vmem:[%s3583 + $0x18] sm:$0xff]
    %v3588 = vld [vmem:[%s3583 + $0x20] sm:$0xff]
    %v3589 = vld [vmem:[%s3583 + $0x28] sm:$0xff]
    %v3590 = vld [vmem:[%s3583 + $0x30] sm:$0xff]
    %v3591 = vld [vmem:[%s3583 + $0x38] sm:$0xff]
    %v3592 = vld [vmem:[%s3583 + $0x40] sm:$0xff]
    %v3593 = vld [vmem:[%s3583 + $0x48] sm:$0xff]
    %v3594 = vcombine.low %v3264, %v3280
    %v3596 = vunpack.c.l.s4 1966171168
    %v3597 = vunpack.c.0.s8 %v3596
    %v3598 = vlaneseq
    %v3599 = vshrl.u32 %v3598, 7
    %v3600 = vsub.s32 %v3597, %v3599
    %v3601 = vrot.slane %v3594, %v3600
    %v3603 = vunpack.c.l.s4 1966171168
    %v3604 = vunpack.c.0.s8 %v3603
    %v3605 = vlaneseq
    %v3606 = vshrl.u32 %v3605, 7
    %v3607 = vsub.s32 %v3604, %v3606
    %v3608 = vrot.slane %v3601, %v3607
    %v3609 = vsel %vm3324, %v3608, 0
    %3611 = vmatprep.subr.mxu0 0.0
    %3612 = vmatpush1.msra.mxu0 0.0
    %3613 = vmatprep.subr.mxu0 0.0
    %3614 = vmatpush1.msra.mxu0 0.0
    %3615 = vmatprep.subr.mxu0 0.0
    %3616 = vmatpush1.msra.mxu0 0.0
    %3617 = vmatprep.subr.mxu0 0.0
    %3618 = vmatpush1.msra.mxu0 0.0
    %3619 = vmatprep.subr.mxu0 0.0
    %3620 = vmatpush1.msra.mxu0 0.0
    %3621 = vmatprep.subr.mxu0 0.0
    %3622 = vmatpush1.msra.mxu0 0.0
    %3623 = vmatprep.subr.mxu0 0.0
    %3624 = vmatpush1.msra.mxu0 %v3593
    %3625 = vmatprep.subr.mxu0 0.0
    %3626 = vmatpush1.msra.mxu0 %v3592
    %3627 = vmatprep.subr.mxu0 0.0
    %3628 = vmatpush1.msra.mxu0 %v3591
    %3629 = vmatprep.subr.mxu0 0.0
    %3630 = vmatpush1.msra.mxu0 %v3590
    %3631 = vmatprep.subr.mxu0 0.0
    %3632 = vmatpush1.msra.mxu0 %v3589
    %3633 = vmatprep.subr.mxu0 0.0
    %3634 = vmatpush1.msra.mxu0 %v3588
    %3635 = vmatprep.subr.mxu0 0.0
    %3636 = vmatpush1.msra.mxu0 %v3587
    %3637 = vmatprep.subr.mxu0 0.0
    %3638 = vmatpush1.msra.mxu0 %v3586
    %3639 = vmatprep.subr.mxu0 0.0
    %3640 = vmatpush1.msra.mxu0 %v3585
    %3641 = vmatprep.subr.mxu0 0.0
    %3642 = vmatpush1.msra.mxu0 %v3584
    %3643 = vmatprep.subr.mxu0 0.0
    %3644 = vmatpush2.msra.mxu0 0.0
    %3645 = vmatprep.subr.mxu0 0.0
    %3646 = vmatpush2.msra.mxu0 0.0
    %3647 = vmatprep.subr.mxu0 0.0
    %3648 = vmatpush2.msra.mxu0 0.0
    %3649 = vmatprep.subr.mxu0 0.0
    %3650 = vmatpush2.msra.mxu0 0.0
    %3651 = vmatprep.subr.mxu0 0.0
    %3652 = vmatpush2.msra.mxu0 0.0
    %3653 = vmatprep.subr.mxu0 0.0
    %3654 = vmatpush2.msra.mxu0 0.0
    %3655 = vmatprep.subr.mxu0 0.0
    %3656 = vmatpush2.msra.mxu0 0.0
    %3657 = vmatprep.subr.mxu0 0.0
    %3658 = vmatpush2.msra.mxu0 0.0
    %3659 = vmatprep.subr.mxu0 0.0
    %3660 = vmatpush2.msra.mxu0 0.0
    %3661 = vmatprep.subr.mxu0 0.0
    %3662 = vmatpush2.msra.mxu0 0.0
    %3663 = vmatprep.subr.mxu0 0.0
    %3664 = vmatpush2.msra.mxu0 0.0
    %3665 = vmatprep.subr.mxu0 0.0
    %3666 = vmatpush2.msra.mxu0 0.0
    %3667 = vmatprep.subr.mxu0 0.0
    %3668 = vmatpush2.msra.mxu0 0.0
    %3669 = vmatprep.subr.mxu0 0.0
    %3670 = vmatpush2.msra.mxu0 0.0
    %3671 = vmatprep.subr.mxu0 0.0
    %3672 = vmatpush2.msra.mxu0 0.0
    %3673 = vmatprep.subr.mxu0 0.0
    %3674 = vmatpush2.msra.mxu0 0.0
    %3675 = vmatprep.mubr.f32.mxu0 0.0
    %3676 = vmatmul.mubr.f32.gmra.mxu0 %v3609
    %v3677 = vpop.f32.mrf.mxu0
    %v3678 = vadd.f32 0.0, %v3677
    %v3679 = vpop.f32.mrf.mxu0
    %3680 = vdwg.mxu0
    %v3681 = vadd.f32 %v3582, %v3678
    %s3682 = scalar_lea.vmem %s9, 320
    %v3683 = vld [vmem:[%s3682] sm:$0xff]
    %v3684 = vld [vmem:[%s3682 + $0x8] sm:$0xff]
    %v3685 = vld [vmem:[%s3682 + $0x10] sm:$0xff]
    %v3686 = vld [vmem:[%s3682 + $0x18] sm:$0xff]
    %v3687 = vld [vmem:[%s3682 + $0x20] sm:$0xff]
    %v3688 = vld [vmem:[%s3682 + $0x28] sm:$0xff]
    %v3689 = vld [vmem:[%s3682 + $0x30] sm:$0xff]
    %v3690 = vld [vmem:[%s3682 + $0x38] sm:$0xff]
    %v3691 = vld [vmem:[%s3682 + $0x40] sm:$0xff]
    %v3692 = vld [vmem:[%s3682 + $0x48] sm:$0xff]
    %v3693 = vcombine.low %v3247, %v3287
    %v3695 = vunpack.c.l.s4 1966171168
    %v3696 = vunpack.c.0.s8 %v3695
    %v3697 = vlaneseq
    %v3698 = vshrl.u32 %v3697, 7
    %v3699 = vsub.s32 %v3696, %v3698
    %v3700 = vrot.slane %v3693, %v3699
    %v3702 = vunpack.c.l.s4 1966171168
    %v3703 = vunpack.c.0.s8 %v3702
    %v3704 = vlaneseq
    %v3705 = vshrl.u32 %v3704, 7
    %v3706 = vsub.s32 %v3703, %v3705
    %v3707 = vrot.slane %v3700, %v3706
    %v3708 = vsel %vm3324, %v3707, 0
    %3710 = vmatprep.subr.mxu0 0.0
    %3711 = vmatpush1.msra.mxu0 0.0
    %3712 = vmatprep.subr.mxu0 0.0
    %3713 = vmatpush1.msra.mxu0 0.0
    %3714 = vmatprep.subr.mxu0 0.0
    %3715 = vmatpush1.msra.mxu0 0.0
    %3716 = vmatprep.subr.mxu0 0.0
    %3717 = vmatpush1.msra.mxu0 0.0
    %3718 = vmatprep.subr.mxu0 0.0
    %3719 = vmatpush1.msra.mxu0 0.0
    %3720 = vmatprep.subr.mxu0 0.0
    %3721 = vmatpush1.msra.mxu0 0.0
    %3722 = vmatprep.subr.mxu0 0.0
    %3723 = vmatpush1.msra.mxu0 %v3692
    %3724 = vmatprep.subr.mxu0 0.0
    %3725 = vmatpush1.msra.mxu0 %v3691
    %3726 = vmatprep.subr.mxu0 0.0
    %3727 = vmatpush1.msra.mxu0 %v3690
    %3728 = vmatprep.subr.mxu0 0.0
    %3729 = vmatpush1.msra.mxu0 %v3689
    %3730 = vmatprep.subr.mxu0 0.0
    %3731 = vmatpush1.msra.mxu0 %v3688
    %3732 = vmatprep.subr.mxu0 0.0
    %3733 = vmatpush1.msra.mxu0 %v3687
    %3734 = vmatprep.subr.mxu0 0.0
    %3735 = vmatpush1.msra.mxu0 %v3686
    %3736 = vmatprep.subr.mxu0 0.0
    %3737 = vmatpush1.msra.mxu0 %v3685
    %3738 = vmatprep.subr.mxu0 0.0
    %3739 = vmatpush1.msra.mxu0 %v3684
    %3740 = vmatprep.subr.mxu0 0.0
    %3741 = vmatpush1.msra.mxu0 %v3683
    %3742 = vmatprep.subr.mxu0 0.0
    %3743 = vmatpush2.msra.mxu0 0.0
    %3744 = vmatprep.subr.mxu0 0.0
    %3745 = vmatpush2.msra.mxu0 0.0
    %3746 = vmatprep.subr.mxu0 0.0
    %3747 = vmatpush2.msra.mxu0 0.0
    %3748 = vmatprep.subr.mxu0 0.0
    %3749 = vmatpush2.msra.mxu0 0.0
    %3750 = vmatprep.subr.mxu0 0.0
    %3751 = vmatpush2.msra.mxu0 0.0
    %3752 = vmatprep.subr.mxu0 0.0
    %3753 = vmatpush2.msra.mxu0 0.0
    %3754 = vmatprep.subr.mxu0 0.0
    %3755 = vmatpush2.msra.mxu0 0.0
    %3756 = vmatprep.subr.mxu0 0.0
    %3757 = vmatpush2.msra.mxu0 0.0
    %3758 = vmatprep.subr.mxu0 0.0
    %3759 = vmatpush2.msra.mxu0 0.0
    %3760 = vmatprep.subr.mxu0 0.0
    %3761 = vmatpush2.msra.mxu0 0.0
    %3762 = vmatprep.subr.mxu0 0.0
    %3763 = vmatpush2.msra.mxu0 0.0
    %3764 = vmatprep.subr.mxu0 0.0
    %3765 = vmatpush2.msra.mxu0 0.0
    %3766 = vmatprep.subr.mxu0 0.0
    %3767 = vmatpush2.msra.mxu0 0.0
    %3768 = vmatprep.subr.mxu0 0.0
    %3769 = vmatpush2.msra.mxu0 0.0
    %3770 = vmatprep.subr.mxu0 0.0
    %3771 = vmatpush2.msra.mxu0 0.0
    %3772 = vmatprep.subr.mxu0 0.0
    %3773 = vmatpush2.msra.mxu0 0.0
    %3774 = vmatprep.mubr.f32.mxu0 0.0
    %3775 = vmatmul.mubr.f32.gmra.mxu0 %v3708
    %v3776 = vpop.f32.mrf.mxu0
    %v3777 = vadd.f32 0.0, %v3776
    %v3778 = vpop.f32.mrf.mxu0
    %3779 = vdwg.mxu0
    %v3780 = vadd.f32 %v3681, %v3777
    %v3781 = vld [vmem:[%s10] sm:$0x1]
    %v3783 = vlaneseq
    %v3784 = vshrl.u32 %v3783, 7
    %v3785 = vsub.s32 0, %v3784
    %v3786 = vrot.slane %v3781, %v3785
    %v3788 = vadd.f32 %v3780, %v3786
    %v3789 = vmax.f32 %v3788, 0.0
    %v3790 = vld [vmem:[%s11] sm:$0xff]
    %v3791 = vld [vmem:[%s11 + $0x8] sm:$0xff]
    %v3792 = vld [vmem:[%s11 + $0x10] sm:$0xff]
    %v3793 = vld [vmem:[%s11 + $0x18] sm:$0xff]
    %v3794 = vld [vmem:[%s11 + $0x20] sm:$0xff]
    %v3795 = vld [vmem:[%s11 + $0x28] sm:$0xff]
    %v3796 = vld [vmem:[%s11 + $0x30] sm:$0xff]
    %v3797 = vld [vmem:[%s11 + $0x38] sm:$0xff]
    %v3798 = vld [vmem:[%s11 + $0x40] sm:$0xff]
    %v3799 = vld [vmem:[%s11 + $0x48] sm:$0xff]
    %v3800 = vld [vmem:[%s11 + $0x50] sm:$0xff]
    %v3801 = vld [vmem:[%s11 + $0x58] sm:$0xff]
    %v3802 = vld [vmem:[%s11 + $0x60] sm:$0xff]
    %v3803 = vld [vmem:[%s11 + $0x68] sm:$0xff]
    %v3804 = vld [vmem:[%s11 + $0x70] sm:$0xff]
    %v3805 = vld [vmem:[%s11 + $0x78] sm:$0xff]
    %v3806 = vld [vmem:[%s12] sm:$0x1]
    %v3808 = vlaneseq
    %v3809 = vshrl.u32 %v3808, 7
    %v3810 = vsub.s32 0, %v3809
    %v3811 = vrot.slane %v3806, %v3810
    %3813 = vmatprep.subr.mxu0 0.0
    %3814 = vmatpush1.msra.mxu0 %v3805
    %3815 = vmatprep.subr.mxu0 0.0
    %3816 = vmatpush1.msra.mxu0 %v3804
    %3817 = vmatprep.subr.mxu0 0.0
    %3818 = vmatpush1.msra.mxu0 %v3803
    %3819 = vmatprep.subr.mxu0 0.0
    %3820 = vmatpush1.msra.mxu0 %v3802
    %3821 = vmatprep.subr.mxu0 0.0
    %3822 = vmatpush1.msra.mxu0 %v3801
    %3823 = vmatprep.subr.mxu0 0.0
    %3824 = vmatpush1.msra.mxu0 %v3800
    %3825 = vmatprep.subr.mxu0 0.0
    %3826 = vmatpush1.msra.mxu0 %v3799
    %3827 = vmatprep.subr.mxu0 0.0
    %3828 = vmatpush1.msra.mxu0 %v3798
    %3829 = vmatprep.subr.mxu0 0.0
    %3830 = vmatpush1.msra.mxu0 %v3797
    %3831 = vmatprep.subr.mxu0 0.0
    %3832 = vmatpush1.msra.mxu0 %v3796
    %3833 = vmatprep.subr.mxu0 0.0
    %3834 = vmatpush1.msra.mxu0 %v3795
    %3835 = vmatprep.subr.mxu0 0.0
    %3836 = vmatpush1.msra.mxu0 %v3794
    %3837 = vmatprep.subr.mxu0 0.0
    %3838 = vmatpush1.msra.mxu0 %v3793
    %3839 = vmatprep.subr.mxu0 0.0
    %3840 = vmatpush1.msra.mxu0 %v3792
    %3841 = vmatprep.subr.mxu0 0.0
    %3842 = vmatpush1.msra.mxu0 %v3791
    %3843 = vmatprep.subr.mxu0 0.0
    %3844 = vmatpush1.msra.mxu0 %v3790
    %3845 = vmatprep.subr.mxu0 0.0
    %3846 = vmatpush2.msra.mxu0 0.0
    %3847 = vmatprep.subr.mxu0 0.0
    %3848 = vmatpush2.msra.mxu0 0.0
    %3849 = vmatprep.subr.mxu0 0.0
    %3850 = vmatpush2.msra.mxu0 0.0
    %3851 = vmatprep.subr.mxu0 0.0
    %3852 = vmatpush2.msra.mxu0 0.0
    %3853 = vmatprep.subr.mxu0 0.0
    %3854 = vmatpush2.msra.mxu0 0.0
    %3855 = vmatprep.subr.mxu0 0.0
    %3856 = vmatpush2.msra.mxu0 0.0
    %3857 = vmatprep.subr.mxu0 0.0
    %3858 = vmatpush2.msra.mxu0 0.0
    %3859 = vmatprep.subr.mxu0 0.0
    %3860 = vmatpush2.msra.mxu0 0.0
    %3861 = vmatprep.subr.mxu0 0.0
    %3862 = vmatpush2.msra.mxu0 0.0
    %3863 = vmatprep.subr.mxu0 0.0
    %3864 = vmatpush2.msra.mxu0 0.0
    %3865 = vmatprep.subr.mxu0 0.0
    %3866 = vmatpush2.msra.mxu0 0.0
    %3867 = vmatprep.subr.mxu0 0.0
    %3868 = vmatpush2.msra.mxu0 0.0
    %3869 = vmatprep.subr.mxu0 0.0
    %3870 = vmatpush2.msra.mxu0 0.0
    %3871 = vmatprep.subr.mxu0 0.0
    %3872 = vmatpush2.msra.mxu0 0.0
    %3873 = vmatprep.subr.mxu0 0.0
    %3874 = vmatpush2.msra.mxu0 0.0
    %3875 = vmatprep.subr.mxu0 0.0
    %3876 = vmatpush2.msra.mxu0 0.0
    %3877 = vmatprep.mubr.f32.mxu0 0.0
    %3878 = vmatmul.mubr.f32.gmra.mxu0 %v3789
    %v3879 = vpop.f32.mrf.mxu0
    %v3880 = vadd.f32 %v3811, %v3879
    %v3881 = vpop.f32.mrf.mxu0
    %3882 = vdwg.mxu0
    %v3883 = vmax.f32 %v3880, 0.0
    %v3884 = vld [vmem:[%s13] sm:$0xff]
    %v3885 = vld [vmem:[%s13 + $0x8] sm:$0xff]
    %v3886 = vld [vmem:[%s13 + $0x10] sm:$0xff]
    %v3887 = vld [vmem:[%s13 + $0x18] sm:$0xff]
    %v3888 = vld [vmem:[%s13 + $0x20] sm:$0xff]
    %v3889 = vld [vmem:[%s13 + $0x28] sm:$0xff]
    %v3890 = vld [vmem:[%s13 + $0x30] sm:$0xff]
    %v3891 = vld [vmem:[%s13 + $0x38] sm:$0xff]
    %v3892 = vld [vmem:[%s13 + $0x40] sm:$0xff]
    %v3893 = vld [vmem:[%s13 + $0x48] sm:$0xff]
    %v3894 = vld [vmem:[%s13 + $0x50] sm:$0xff]
    %v3895 = vld [vmem:[%s13 + $0x58] sm:$0xff]
    %v3896 = vld [vmem:[%s13 + $0x60] sm:$0xff]
    %v3897 = vld [vmem:[%s13 + $0x68] sm:$0xff]
    %v3898 = vld [vmem:[%s13 + $0x70] sm:$0xff]
    %v3899 = vld [vmem:[%s13 + $0x78] sm:$0xff]
    %v3900 = vld [vmem:[%s14] sm:$0x1]
    %v3902 = vlaneseq
    %v3903 = vshrl.u32 %v3902, 7
    %v3904 = vsub.s32 0, %v3903
    %v3905 = vrot.slane %v3900, %v3904
    %3907 = vmatprep.subr.mxu0 0.0
    %3908 = vmatpush1.msra.mxu0 %v3899
    %3909 = vmatprep.subr.mxu0 0.0
    %3910 = vmatpush1.msra.mxu0 %v3898
    %3911 = vmatprep.subr.mxu0 0.0
    %3912 = vmatpush1.msra.mxu0 %v3897
    %3913 = vmatprep.subr.mxu0 0.0
    %3914 = vmatpush1.msra.mxu0 %v3896
    %3915 = vmatprep.subr.mxu0 0.0
    %3916 = vmatpush1.msra.mxu0 %v3895
    %3917 = vmatprep.subr.mxu0 0.0
    %3918 = vmatpush1.msra.mxu0 %v3894
    %3919 = vmatprep.subr.mxu0 0.0
    %3920 = vmatpush1.msra.mxu0 %v3893
    %3921 = vmatprep.subr.mxu0 0.0
    %3922 = vmatpush1.msra.mxu0 %v3892
    %3923 = vmatprep.subr.mxu0 0.0
    %3924 = vmatpush1.msra.mxu0 %v3891
    %3925 = vmatprep.subr.mxu0 0.0
    %3926 = vmatpush1.msra.mxu0 %v3890
    %3927 = vmatprep.subr.mxu0 0.0
    %3928 = vmatpush1.msra.mxu0 %v3889
    %3929 = vmatprep.subr.mxu0 0.0
    %3930 = vmatpush1.msra.mxu0 %v3888
    %3931 = vmatprep.subr.mxu0 0.0
    %3932 = vmatpush1.msra.mxu0 %v3887
    %3933 = vmatprep.subr.mxu0 0.0
    %3934 = vmatpush1.msra.mxu0 %v3886
    %3935 = vmatprep.subr.mxu0 0.0
    %3936 = vmatpush1.msra.mxu0 %v3885
    %3937 = vmatprep.subr.mxu0 0.0
    %3938 = vmatpush1.msra.mxu0 %v3884
    %3939 = vmatprep.subr.mxu0 0.0
    %3940 = vmatpush2.msra.mxu0 0.0
    %3941 = vmatprep.subr.mxu0 0.0
    %3942 = vmatpush2.msra.mxu0 0.0
    %3943 = vmatprep.subr.mxu0 0.0
    %3944 = vmatpush2.msra.mxu0 0.0
    %3945 = vmatprep.subr.mxu0 0.0
    %3946 = vmatpush2.msra.mxu0 0.0
    %3947 = vmatprep.subr.mxu0 0.0
    %3948 = vmatpush2.msra.mxu0 0.0
    %3949 = vmatprep.subr.mxu0 0.0
    %3950 = vmatpush2.msra.mxu0 0.0
    %3951 = vmatprep.subr.mxu0 0.0
    %3952 = vmatpush2.msra.mxu0 0.0
    %3953 = vmatprep.subr.mxu0 0.0
    %3954 = vmatpush2.msra.mxu0 0.0
    %3955 = vmatprep.subr.mxu0 0.0
    %3956 = vmatpush2.msra.mxu0 0.0
    %3957 = vmatprep.subr.mxu0 0.0
    %3958 = vmatpush2.msra.mxu0 0.0
    %3959 = vmatprep.subr.mxu0 0.0
    %3960 = vmatpush2.msra.mxu0 0.0
    %3961 = vmatprep.subr.mxu0 0.0
    %3962 = vmatpush2.msra.mxu0 0.0
    %3963 = vmatprep.subr.mxu0 0.0
    %3964 = vmatpush2.msra.mxu0 0.0
    %3965 = vmatprep.subr.mxu0 0.0
    %3966 = vmatpush2.msra.mxu0 0.0
    %3967 = vmatprep.subr.mxu0 0.0
    %3968 = vmatpush2.msra.mxu0 0.0
    %3969 = vmatprep.subr.mxu0 0.0
    %3970 = vmatpush2.msra.mxu0 0.0
    %3971 = vmatprep.mubr.f32.mxu0 0.0
    %3972 = vmatmul.mubr.f32.gmra.mxu0 %v3883
    %v3973 = vpop.f32.mrf.mxu0
    %v3974 = vadd.f32 %v3905, %v3973
    %v3975 = vpop.f32.mrf.mxu0
    %3976 = vdwg.mxu0
    %vm3977 = vcmask 74752
    %v3978 = vsel %vm3977, %v3974, -inf
    %3979 = vmax.xlane.f32.xlu0 %v3978
    %v3980 = vpop.xlane.xlu0 %3979
    %v3981 = vsub.f32 %v3974, %v3980
    %v3982 = vmul.f32 %v3981, 1.442695
    %v3983 = vpow.pop %v3982
    %v3984 = vsel %vm3977, %v3983, 0.0
    %3985 = vadd.xlane.f32.xlu0 %v3984
    %v3986 = vpop.xlane.xlu0 %3985
    %v3987 = vlog2.pop %v3986
    %v3988 = vmul.f32 %v3987, 0.6931472
    %v3989 = vsub.f32 %v3981, %v3988
    %3990 = vst.msk [vmem:[#allocation2] sm:$0x3] %vm3977, %v3989
    // Predicated region
    $region62: #{cifar10net_forward.1} parent=1 // pred_check
      _
    $region63: #{cifar10net_forward.1} parent=1 // pred_check_branch
      %3992 = sbr.rel (0) target = $region65
    $region64: #{cifar10net_forward.1} parent=1 // pred_region
      %s3994 = ssub.s32 32, 32
      %3995 = vsyncadd [#allocation3], %s3994
      %s3997 = sshll.u32 [#allocation2], 4
      %s3998 = int_to_ptr.vmem [resolvable:$true] %s3997
      %4000 = dma.vmem_to_hbm [thread:$0]  %s3998, 32, %s15, [#allocation3]
    $region65: #{cifar10net_forward.1} parent=1 // pred_fallthru
      _
    // Predicated region
    $region66: #{cifar10net_forward.1} parent=1 // pred_check
      _
    $region67: #{cifar10net_forward.1} parent=1 // pred_check_branch
      %4002 = sbr.rel (0) target = $region69
    $region68: #{cifar10net_forward.1} parent=1 // pred_region
      %4003 = dma.done [#allocation3], 32
    $region69: #{cifar10net_forward.1} parent=1 // pred_fallthru
      _
    %4004 = vsyncpa [#allocation3], 1

</llo_original>
